<compile_context>
chip_gen: v7x
topology: tpu7x:2x2x1
jax: 0.10.0
libtpu: 0.0.40
codegen_flags: <defaults>
</compile_context>

<pallas_src>
import jax
import jax.numpy as jnp
from jax.experimental import pallas as pl
from jax.experimental.pallas import tpu as pltpu

H = 128            # hidden size
T = 3              # sequence length
IN = 13            # raw input feature size
XPAD = 64          # padded width of the flattened (T*IN = 39) input row
G = 4 * H          # gate width per layer = 512
CLU = 256          # clu hidden size
HEAD_N = H + CLU   # packed [lin | clu] head width = 384

# packed weight-slab column offsets
WB_W = G + 2 * H          # (128, 768):  [ W_hh0.T | W_out_pad | W_co_pad ]
WC_W = G + H              # (256, 640):  [ [W_ih1.T ; W_hh1.T] | W_clu2.T ]

# packed bias-row offsets (single (1, BIAS_W) f32 row)
OFF_B0 = 0                      # b_ih0 + b_hh0            (512)
OFF_B1 = G                      # b_ih1 + b_hh1            (512)
OFF_BHEAD = 2 * G               # [b_lin | b_clu]          (384)
OFF_BCLU2 = 2 * G + HEAD_N      # b_clu2                   (128)
OFF_BFIN = OFF_BCLU2 + H        # [b_out(3) | b_co(1) | 0] (128)
BIAS_W = OFF_BFIN + H           # 1664


def lstm_clustering_kernel(
    x_ref,                       # (TB, XPAD) f32  -- [x_t0 | x_t1 | x_t2 | 0-pad]
    win_ref,                     # (XPAD, T*4H) bf16 block-diagonal layer-0 input proj
    wb_ref,                      # (H, WB_W)  bf16  [W_hh0.T | W_out_pad | W_co_pad]
    wc_ref,                      # (2H, WC_W) bf16  [[W_ih1.T; W_hh1.T] | W_clu2.T]
    wd_ref,                      # (3H, HEAD_N) bf16 [W_lin.T | W_clu.T]
    bias_ref,                    # (1, BIAS_W) f32
    out_ref,                     # (TB, H)  f32   packed head output (cols 0..2 soft, 3 sig)
    hn_ref,                      # (2, TB, H) bf16
    cn_ref,                      # (2, TB, H) bf16
):
    f32 = jnp.float32
    bf16 = jnp.bfloat16

    def mm(a, w):
        # bf16 MXU operands, f32 accumulation
        return jnp.dot(a.astype(bf16), w, preferred_element_type=f32)

    def lstm_gates(gates, c_prev=None):
        # PyTorch gate order: [input, forget, cell(g), output]
        i = jax.nn.sigmoid(gates[:, 0:H])
        f = jax.nn.sigmoid(gates[:, H:2 * H])
        g = jnp.tanh(gates[:, 2 * H:3 * H])
        o = jax.nn.sigmoid(gates[:, 3 * H:4 * H])
        c = i * g if c_prev is None else f * c_prev + i * g
        h = o * jnp.tanh(c)
        return h, c

    # ---- hoisted layer-0 input projection for all T timesteps: ONE matmul against a
    # block-diagonal (XPAD, T*4H) weight (off the recurrence critical path).
    xproj = mm(x_ref[...], win_ref[...])                     # (TB, T*4H) f32

    h0 = c0 = h1 = c1 = None
    head_acc = None
    for t in range(T):                                       # T = 3, unrolled
        xp_t = xproj[:, t * G:(t + 1) * G] + bias_ref[:, OFF_B0:OFF_B0 + G]
        if t == 0:
            # zero initial state -> skip the h @ W_hh matmuls entirely
            h0, c0 = lstm_gates(xp_t)
            gates1 = mm(h0, wc_ref[0:H, 0:G]) + bias_ref[:, OFF_B1:OFF_B1 + G]
            h1, c1 = lstm_gates(gates1)
        else:
            gates0 = mm(h0, wb_ref[:, 0:G]) + xp_t                       # K = H
            h0, c0 = lstm_gates(gates0, c0)
            # layer-1 gates without any (TB, 2H) concat: two K=128 dots
            gates1 = (mm(h0, wc_ref[0:H, 0:G]) + mm(h1, wc_ref[H:2 * H, 0:G])
                      + bias_ref[:, OFF_B1:OFF_B1 + G])
            h1, c1 = lstm_gates(gates1, c1)

        # per-timestep K=H partial of both head input projections (replaces
        # flatten/concat + K=3H matmuls; overlaps with the serial recurrence)
        r = jnp.maximum(h1, 0.0)                             # F.relu on LSTM outputs
        part = mm(r, wd_ref[t * H:(t + 1) * H, :])           # (TB, HEAD_N)
        head_acc = part if t == 0 else head_acc + part

    head = head_acc + bias_ref[:, OFF_BHEAD:OFF_BHEAD + HEAD_N]          # (TB, 384)
    a1 = jnp.maximum(head[:, 0:H], 0.0)                      # lin  -> relu
    a2 = jnp.maximum(head[:, H:HEAD_N], 0.0)                 # clu  -> relu
    # TODO(synk): eval-mode dropout is identity here.
    a2b = jnp.maximum(mm(a2, wc_ref[:, G:G + H])
                      + bias_ref[:, OFF_BCLU2:OFF_BCLU2 + H], 0.0)       # clu2 -> relu

    # packed lane-dense output head: cols 0..2 = `out` logits, col 3 = `cluout`
    fin = (mm(a1, wb_ref[:, G:G + H])
           + mm(a2b, wb_ref[:, G + H:G + 2 * H])
           + bias_ref[:, OFF_BFIN:OFF_BFIN + H])                         # (TB, H)

    lane = jax.lax.broadcasted_iota(jnp.int32, fin.shape, 1)
    masked = jnp.where(lane < 3, fin, -1e30)                 # softmax over 3 lanes
    m = jnp.max(masked, axis=1, keepdims=True)
    e = jnp.exp(masked - m)
    soft = e / jnp.sum(e, axis=1, keepdims=True)             # exact normalization
    sig = jax.nn.sigmoid(fin)
    out_ref[...] = jnp.where(lane < 3, soft,
                             jnp.where(lane == 3, sig, jnp.zeros_like(fin)))

    # final (pre-ReLU) hidden / cell states of both layers, stored in bf16
    hn_ref[0] = h0.astype(hn_ref.dtype)
    hn_ref[1] = h1.astype(hn_ref.dtype)
    cn_ref[0] = c0.astype(cn_ref.dtype)
    cn_ref[1] = c1.astype(cn_ref.dtype)


# ----------------------------------------------------------------------------- params

def init_raw_params(key):
    """Deterministic synthetic weights in PyTorch layout, uniform(-1/sqrt(H), 1/sqrt(H))."""
    ks = jax.random.split(key, 18)
    scale = 1.0 / jnp.sqrt(jnp.float32(H))

    def u(k, shape):
        return jax.random.uniform(k, shape, jnp.float32, -scale, scale)

    return dict(
        w_ih0=u(ks[0], (4 * H, IN)), w_hh0=u(ks[1], (4 * H, H)),
        b_ih0=u(ks[2], (4 * H,)),    b_hh0=u(ks[3], (4 * H,)),
        w_ih1=u(ks[4], (4 * H, H)),  w_hh1=u(ks[5], (4 * H, H)),
        b_ih1=u(ks[6], (4 * H,)),    b_hh1=u(ks[7], (4 * H,)),
        w_lin=u(ks[8], (H, 3 * H)),  b_lin=u(ks[9], (H,)),
        w_out=u(ks[10], (3, H)),     b_out=u(ks[11], (3,)),
        w_clu=u(ks[12], (CLU, 3 * H)), b_clu=u(ks[13], (CLU,)),
        w_clu2=u(ks[14], (H, CLU)),  b_clu2=u(ks[15], (H,)),
        w_co=u(ks[16], (1, H)),      b_co=u(ks[17], (1,)),
    )


def pack_params(p):
    """PyTorch-layout f32 weights -> 4 bf16 weight slabs + 1 f32 bias row."""
    bf16 = jnp.bfloat16

    # block-diagonal layer-0 input projection over all T timesteps: (XPAD, T*4H)
    w_in = jnp.zeros((XPAD, T * G), jnp.float32)
    for t in range(T):
        w_in = w_in.at[t * IN:(t + 1) * IN, t * G:(t + 1) * G].set(p["w_ih0"].T)
    w_in = w_in.astype(bf16)

    # 128-row slab: [W_hh0.T | W_out padded to (H,H) | W_co padded to (H,H)]
    woutp = jnp.zeros((H, H), jnp.float32).at[:, 0:3].set(p["w_out"].T)
    wcop = jnp.zeros((H, H), jnp.float32).at[:, 3:4].set(p["w_co"].T)
    w_b = jnp.concatenate([p["w_hh0"].T, woutp, wcop], axis=1).astype(bf16)   # (H, 768)

    # 256-row slab: [[W_ih1.T; W_hh1.T] | W_clu2.T]
    w1 = jnp.concatenate([p["w_ih1"].T, p["w_hh1"].T], axis=0)                # (2H, 512)
    w_c = jnp.concatenate([w1, p["w_clu2"].T], axis=1).astype(bf16)           # (2H, 640)

    # 384-row slab: [W_lin.T | W_clu.T]
    w_d = jnp.concatenate([p["w_lin"].T, p["w_clu"].T], axis=1).astype(bf16)  # (3H, 384)

    # single f32 bias row
    bfin = (jnp.zeros((H,), jnp.float32)
            .at[0:3].set(p["b_out"])
            .at[3].set(p["b_co"][0]))
    bias = jnp.concatenate([
        p["b_ih0"] + p["b_hh0"],     # OFF_B0
        p["b_ih1"] + p["b_hh1"],     # OFF_B1
        p["b_lin"], p["b_clu"],      # OFF_BHEAD
        p["b_clu2"],                 # OFF_BCLU2
        bfin,                        # OFF_BFIN
    ]).reshape(1, BIAS_W)

    return (w_in, w_b, w_c, w_d, bias)


# ----------------------------------------------------------------------------- wrapper

def _round_up(n, m):
    return (n + m - 1) // m * m


def _const_spec(shape):
    nd = len(shape)
    return pl.BlockSpec(shape, lambda i, _nd=nd: (0,) * _nd)


def lstm_clustering(x, params):
    """x: (B, T=3, 13) float32. Returns (x1, x2, h_n, c_n) matching the module in eval
    mode (h_n / c_n are bf16)."""
    B = x.shape[0]

    # batch tile: multiple of 16 (bf16 state outputs), capped at 512; for B > 16 aim
    # for >= 2 grid blocks so v7x's two TensorCores both get work.
    if B > 16:
        TB = min(512, _round_up(-(-B // 2), 16))
    else:
        TB = _round_up(max(B, 1), 16)
    B_pad = _round_up(B, TB)
    n_blocks = B_pad // TB

    # flatten (B, T, IN) -> (B, T*IN) rows, zero-pad to XPAD lanes and the batch tile
    x2d = jnp.zeros((B_pad, XPAD), jnp.float32).at[:B, :T * IN].set(
        x.reshape(B, T * IN).astype(jnp.float32))

    in_specs = [pl.BlockSpec((TB, XPAD), lambda i: (i, 0))]
    in_specs += [_const_spec(p.shape) for p in params]   # weights VMEM-resident across blocks

    out_shape = (
        jax.ShapeDtypeStruct((B_pad, H), jnp.float32),       # packed head output
        jax.ShapeDtypeStruct((2, B_pad, H), jnp.bfloat16),   # h_n
        jax.ShapeDtypeStruct((2, B_pad, H), jnp.bfloat16),   # c_n
    )
    out_specs = (
        pl.BlockSpec((TB, H), lambda i: (i, 0)),
        pl.BlockSpec((2, TB, H), lambda i: (0, i, 0)),
        pl.BlockSpec((2, TB, H), lambda i: (0, i, 0)),
    )

    packed, hn, cn = pl.pallas_call(
        lstm_clustering_kernel,
        grid=(n_blocks,),
        out_shape=out_shape,
        in_specs=in_specs,
        out_specs=out_specs,
        compiler_params=pltpu.CompilerParams(dimension_semantics=("parallel",)),
    )(x2d, *params)

    x1 = packed[:B, 0:3]     # softmax over 3 classes
    x2 = packed[:B, 3:4]     # sigmoid
    return x1, x2, hn[:, :B], cn[:, :B]


# ----------------------------------------------------------------------------- reference

def reference_forward(x, p):
    """Pure-JAX f32 reference of the PyTorch module forward (eval mode)."""
    B = x.shape[0]

    def cell(xt, h, c, wih, whh, bih, bhh):
        g = xt @ wih.T + h @ whh.T + bih + bhh
        i = jax.nn.sigmoid(g[:, 0:H]); f = jax.nn.sigmoid(g[:, H:2 * H])
        gg = jnp.tanh(g[:, 2 * H:3 * H]); o = jax.nn.sigmoid(g[:, 3 * H:4 * H])
        c = f * c + i * gg
        h = o * jnp.tanh(c)
        return h, c

    h0 = c0 = h1 = c1 = jnp.zeros((B, H), jnp.float32)
    outs = []
    for t in range(T):
        h0, c0 = cell(x[:, t, :], h0, c0, p["w_ih0"], p["w_hh0"], p["b_ih0"], p["b_hh0"])
        h1, c1 = cell(h0, h1, c1, p["w_ih1"], p["w_hh1"], p["b_ih1"], p["b_hh1"])
        outs.append(jnp.maximum(h1, 0.0))
    lstmout = jnp.concatenate(outs, axis=1)
    a1 = jnp.maximum(lstmout @ p["w_lin"].T + p["b_lin"], 0.0)
    x1 = jax.nn.softmax(a1 @ p["w_out"].T + p["b_out"], axis=1)
    a2 = jnp.maximum(lstmout @ p["w_clu"].T + p["b_clu"], 0.0)
    a2 = jnp.maximum(a2 @ p["w_clu2"].T + p["b_clu2"], 0.0)
    x2 = jax.nn.sigmoid(a2 @ p["w_co"].T + p["b_co"])
    return x1, x2, jnp.stack([h0, h1]), jnp.stack([c0, c1])


if __name__ == "__main__":
    key = jax.random.PRNGKey(0)
    k_x, k_p = jax.random.split(key)

    B = 16  # matches BATCH_SIZE in the training loop
    x = jax.random.normal(k_x, (B, T, IN), jnp.float32)
    raw = init_raw_params(k_p)
    params = pack_params(raw)

    x1, x2, h_n, c_n = jax.block_until_ready(lstm_clustering(x, params))

    assert x1.shape == (B, 3) and x2.shape == (B, 1)
    assert h_n.shape == (2, B, H) and c_n.shape == (2, B, H)
    assert bool(jnp.all(jnp.isfinite(x1))) and bool(jnp.all(jnp.isfinite(x2)))
    # exact softmax normalization now
    assert bool(jnp.allclose(jnp.sum(x1, axis=1), 1.0, atol=1e-4))
    assert bool(jnp.all((x2 > 0.0) & (x2 < 1.0)))

    # compare against pure-JAX f32 reference (weights bf16, h_n/c_n stored bf16)
    r1, r2, rh, rc = reference_forward(x, raw)
    assert bool(jnp.allclose(x1, r1, atol=3e-2))
    assert bool(jnp.allclose(x2, r2, atol=3e-2))
    assert bool(jnp.allclose(h_n.astype(jnp.float32), rh, atol=3e-2))
    assert bool(jnp.allclose(c_n.astype(jnp.float32), rc, atol=3e-2))

    print("KERNEL_OK")
</pallas_src>

<mosaic_0001>
module attributes {stable_mosaic.version = 11 : i64} {
  func.func @lstm_clustering_kernel(%arg0: i32, %arg1: memref<16x64xf32, #tpu.memory_space<vmem>>, %arg2: memref<64x1536xbf16, #tpu.memory_space<vmem>>, %arg3: memref<128x768xbf16, #tpu.memory_space<vmem>>, %arg4: memref<256x640xbf16, #tpu.memory_space<vmem>>, %arg5: memref<384x384xbf16, #tpu.memory_space<vmem>>, %arg6: memref<1x1664xf32, #tpu.memory_space<vmem>>, %arg7: memref<16x128xf32, #tpu.memory_space<vmem>>, %arg8: memref<2x16x128xbf16, #tpu.memory_space<vmem>>, %arg9: memref<2x16x128xbf16, #tpu.memory_space<vmem>>) attributes {dimension_semantics = [#tpu.dimension_semantics<parallel>], iteration_bounds = array<i64: 1>, scalar_prefetch = 0 : i64, scratch_operands = 0 : i64, tpu.core_type = #tpu.core_type<tc>, window_params = [{transform_indices = @transform_0, window_bounds = array<i64: 16, 64>}, {pipeline_mode = #tpu.pipeline_mode<synchronous>, transform_indices = @transform_1, window_bounds = array<i64: 64, 1536>}, {pipeline_mode = #tpu.pipeline_mode<synchronous>, transform_indices = @transform_2, window_bounds = array<i64: 128, 768>}, {pipeline_mode = #tpu.pipeline_mode<synchronous>, transform_indices = @transform_3, window_bounds = array<i64: 256, 640>}, {pipeline_mode = #tpu.pipeline_mode<synchronous>, transform_indices = @transform_4, window_bounds = array<i64: 384, 384>}, {pipeline_mode = #tpu.pipeline_mode<synchronous>, transform_indices = @transform_5, window_bounds = array<i64: 1, 1664>}, {transform_indices = @transform_6, window_bounds = array<i64: 16, 128>}, {transform_indices = @transform_7, window_bounds = array<i64: 2, 16, 128>}, {transform_indices = @transform_8, window_bounds = array<i64: 2, 16, 128>}]} {
    %c0 = arith.constant 0 : index
    %c0_0 = arith.constant 0 : index
    %0 = vector.load %arg1[%c0, %c0_0] : memref<16x64xf32, #tpu.memory_space<vmem>>, vector<16x64xf32>
    %c0_1 = arith.constant 0 : index
    %c0_2 = arith.constant 0 : index
    %1 = vector.load %arg2[%c0_1, %c0_2] : memref<64x1536xbf16, #tpu.memory_space<vmem>>, vector<64x1536xbf16>
    %2 = arith.truncf %0 : vector<16x64xf32> to vector<16x64xbf16>
    %cst = arith.constant dense<0.000000e+00> : vector<16x1536xf32>
    %3 = tpu.matmul %2, %1, %cst {dimension_numbers = #tpu.dot_dimension_numbers<[1], [0], [0], [1], [0, 0, 1, 1], [], []>} : vector<16x64xbf16>, vector<64x1536xbf16>, vector<16x1536xf32> -> vector<16x1536xf32>
    %4 = vector.extract_strided_slice %3 {offsets = [0, 0], sizes = [16, 512], strides = [1, 1]} : vector<16x1536xf32> to vector<16x512xf32>
    %c0_3 = arith.constant 0 : index
    %c0_4 = arith.constant 0 : index
    %5 = vector.load %arg6[%c0_3, %c0_4] : memref<1x1664xf32, #tpu.memory_space<vmem>>, vector<1x512xf32>
    %6 = vector.broadcast %5 : vector<1x512xf32> to vector<16x512xf32>
    %7 = arith.addf %4, %6 : vector<16x512xf32>
    %8 = vector.extract_strided_slice %7 {offsets = [0, 0], sizes = [16, 128], strides = [1, 1]} : vector<16x512xf32> to vector<16x128xf32>
    %9 = arith.negf %8 : vector<16x128xf32>
    %10 = math.exp %9 : vector<16x128xf32>
    %cst_5 = arith.constant 1.000000e+00 : f32
    %11 = vector.broadcast %cst_5 : f32 to vector<16x128xf32>
    %12 = arith.addf %11, %10 : vector<16x128xf32>
    %13 = arith.divf %11, %12 : vector<16x128xf32>
    %14 = vector.extract_strided_slice %7 {offsets = [0, 256], sizes = [16, 128], strides = [1, 1]} : vector<16x512xf32> to vector<16x128xf32>
    %15 = math.tanh %14 : vector<16x128xf32>
    %16 = vector.extract_strided_slice %7 {offsets = [0, 384], sizes = [16, 128], strides = [1, 1]} : vector<16x512xf32> to vector<16x128xf32>
    %17 = arith.negf %16 : vector<16x128xf32>
    %18 = math.exp %17 : vector<16x128xf32>
    %cst_6 = arith.constant 1.000000e+00 : f32
    %19 = vector.broadcast %cst_6 : f32 to vector<16x128xf32>
    %20 = arith.addf %19, %18 : vector<16x128xf32>
    %21 = arith.divf %19, %20 : vector<16x128xf32>
    %22 = arith.mulf %13, %15 : vector<16x128xf32>
    %23 = math.tanh %22 : vector<16x128xf32>
    %24 = arith.mulf %21, %23 : vector<16x128xf32>
    %c0_7 = arith.constant 0 : index
    %c0_8 = arith.constant 0 : index
    %25 = vector.load %arg4[%c0_7, %c0_8] : memref<256x640xbf16, #tpu.memory_space<vmem>>, vector<128x512xbf16>
    %26 = arith.truncf %24 : vector<16x128xf32> to vector<16x128xbf16>
    %cst_9 = arith.constant dense<0.000000e+00> : vector<16x512xf32>
    %27 = tpu.matmul %26, %25, %cst_9 {dimension_numbers = #tpu.dot_dimension_numbers<[1], [0], [0], [1], [0, 0, 1, 1], [], []>} : vector<16x128xbf16>, vector<128x512xbf16>, vector<16x512xf32> -> vector<16x512xf32>
    %c0_10 = arith.constant 0 : index
    %c512 = arith.constant 512 : index
    %28 = vector.load %arg6[%c0_10, %c512] : memref<1x1664xf32, #tpu.memory_space<vmem>>, vector<1x512xf32>
    %29 = vector.broadcast %28 : vector<1x512xf32> to vector<16x512xf32>
    %30 = arith.addf %27, %29 : vector<16x512xf32>
    %31 = vector.extract_strided_slice %30 {offsets = [0, 0], sizes = [16, 128], strides = [1, 1]} : vector<16x512xf32> to vector<16x128xf32>
    %32 = arith.negf %31 : vector<16x128xf32>
    %33 = math.exp %32 : vector<16x128xf32>
    %cst_11 = arith.constant 1.000000e+00 : f32
    %34 = vector.broadcast %cst_11 : f32 to vector<16x128xf32>
    %35 = arith.addf %34, %33 : vector<16x128xf32>
    %36 = arith.divf %34, %35 : vector<16x128xf32>
    %37 = vector.extract_strided_slice %30 {offsets = [0, 256], sizes = [16, 128], strides = [1, 1]} : vector<16x512xf32> to vector<16x128xf32>
    %38 = math.tanh %37 : vector<16x128xf32>
    %39 = vector.extract_strided_slice %30 {offsets = [0, 384], sizes = [16, 128], strides = [1, 1]} : vector<16x512xf32> to vector<16x128xf32>
    %40 = arith.negf %39 : vector<16x128xf32>
    %41 = math.exp %40 : vector<16x128xf32>
    %cst_12 = arith.constant 1.000000e+00 : f32
    %42 = vector.broadcast %cst_12 : f32 to vector<16x128xf32>
    %43 = arith.addf %42, %41 : vector<16x128xf32>
    %44 = arith.divf %42, %43 : vector<16x128xf32>
    %45 = arith.mulf %36, %38 : vector<16x128xf32>
    %46 = math.tanh %45 : vector<16x128xf32>
    %47 = arith.mulf %44, %46 : vector<16x128xf32>
    %cst_13 = arith.constant 0.000000e+00 : f32
    %48 = vector.broadcast %cst_13 : f32 to vector<16x128xf32>
    %49 = arith.maximumf %47, %48 : vector<16x128xf32>
    %c0_14 = arith.constant 0 : index
    %c0_15 = arith.constant 0 : index
    %50 = vector.load %arg5[%c0_14, %c0_15] : memref<384x384xbf16, #tpu.memory_space<vmem>>, vector<128x384xbf16>
    %51 = arith.truncf %49 : vector<16x128xf32> to vector<16x128xbf16>
    %cst_16 = arith.constant dense<0.000000e+00> : vector<16x384xf32>
    %52 = tpu.matmul %51, %50, %cst_16 {dimension_numbers = #tpu.dot_dimension_numbers<[1], [0], [0], [1], [0, 0, 1, 1], [], []>} : vector<16x128xbf16>, vector<128x384xbf16>, vector<16x384xf32> -> vector<16x384xf32>
    %53 = vector.extract_strided_slice %3 {offsets = [0, 512], sizes = [16, 512], strides = [1, 1]} : vector<16x1536xf32> to vector<16x512xf32>
    %c0_17 = arith.constant 0 : index
    %c0_18 = arith.constant 0 : index
    %54 = vector.load %arg6[%c0_17, %c0_18] : memref<1x1664xf32, #tpu.memory_space<vmem>>, vector<1x512xf32>
    %55 = vector.broadcast %54 : vector<1x512xf32> to vector<16x512xf32>
    %56 = arith.addf %53, %55 : vector<16x512xf32>
    %c0_19 = arith.constant 0 : index
    %c0_20 = arith.constant 0 : index
    %57 = vector.load %arg3[%c0_19, %c0_20] : memref<128x768xbf16, #tpu.memory_space<vmem>>, vector<128x512xbf16>
    %58 = arith.truncf %24 : vector<16x128xf32> to vector<16x128xbf16>
    %cst_21 = arith.constant dense<0.000000e+00> : vector<16x512xf32>
    %59 = tpu.matmul %58, %57, %cst_21 {dimension_numbers = #tpu.dot_dimension_numbers<[1], [0], [0], [1], [0, 0, 1, 1], [], []>} : vector<16x128xbf16>, vector<128x512xbf16>, vector<16x512xf32> -> vector<16x512xf32>
    %60 = arith.addf %59, %56 : vector<16x512xf32>
    %61 = vector.extract_strided_slice %60 {offsets = [0, 0], sizes = [16, 128], strides = [1, 1]} : vector<16x512xf32> to vector<16x128xf32>
    %62 = arith.negf %61 : vector<16x128xf32>
    %63 = math.exp %62 : vector<16x128xf32>
    %cst_22 = arith.constant 1.000000e+00 : f32
    %64 = vector.broadcast %cst_22 : f32 to vector<16x128xf32>
    %65 = arith.addf %64, %63 : vector<16x128xf32>
    %66 = arith.divf %64, %65 : vector<16x128xf32>
    %67 = vector.extract_strided_slice %60 {offsets = [0, 128], sizes = [16, 128], strides = [1, 1]} : vector<16x512xf32> to vector<16x128xf32>
    %68 = arith.negf %67 : vector<16x128xf32>
    %69 = math.exp %68 : vector<16x128xf32>
    %cst_23 = arith.constant 1.000000e+00 : f32
    %70 = vector.broadcast %cst_23 : f32 to vector<16x128xf32>
    %71 = arith.addf %70, %69 : vector<16x128xf32>
    %72 = arith.divf %70, %71 : vector<16x128xf32>
    %73 = vector.extract_strided_slice %60 {offsets = [0, 256], sizes = [16, 128], strides = [1, 1]} : vector<16x512xf32> to vector<16x128xf32>
    %74 = math.tanh %73 : vector<16x128xf32>
    %75 = vector.extract_strided_slice %60 {offsets = [0, 384], sizes = [16, 128], strides = [1, 1]} : vector<16x512xf32> to vector<16x128xf32>
    %76 = arith.negf %75 : vector<16x128xf32>
    %77 = math.exp %76 : vector<16x128xf32>
    %cst_24 = arith.constant 1.000000e+00 : f32
    %78 = vector.broadcast %cst_24 : f32 to vector<16x128xf32>
    %79 = arith.addf %78, %77 : vector<16x128xf32>
    %80 = arith.divf %78, %79 : vector<16x128xf32>
    %81 = arith.mulf %72, %22 : vector<16x128xf32>
    %82 = arith.mulf %66, %74 : vector<16x128xf32>
    %83 = arith.addf %81, %82 : vector<16x128xf32>
    %84 = math.tanh %83 : vector<16x128xf32>
    %85 = arith.mulf %80, %84 : vector<16x128xf32>
    %c0_25 = arith.constant 0 : index
    %c0_26 = arith.constant 0 : index
    %86 = vector.load %arg4[%c0_25, %c0_26] : memref<256x640xbf16, #tpu.memory_space<vmem>>, vector<128x512xbf16>
    %87 = arith.truncf %85 : vector<16x128xf32> to vector<16x128xbf16>
    %cst_27 = arith.constant dense<0.000000e+00> : vector<16x512xf32>
    %88 = tpu.matmul %87, %86, %cst_27 {dimension_numbers = #tpu.dot_dimension_numbers<[1], [0], [0], [1], [0, 0, 1, 1], [], []>} : vector<16x128xbf16>, vector<128x512xbf16>, vector<16x512xf32> -> vector<16x512xf32>
    %c128 = arith.constant 128 : index
    %c0_28 = arith.constant 0 : index
    %89 = vector.load %arg4[%c128, %c0_28] : memref<256x640xbf16, #tpu.memory_space<vmem>>, vector<128x512xbf16>
    %90 = arith.truncf %47 : vector<16x128xf32> to vector<16x128xbf16>
    %cst_29 = arith.constant dense<0.000000e+00> : vector<16x512xf32>
    %91 = tpu.matmul %90, %89, %cst_29 {dimension_numbers = #tpu.dot_dimension_numbers<[1], [0], [0], [1], [0, 0, 1, 1], [], []>} : vector<16x128xbf16>, vector<128x512xbf16>, vector<16x512xf32> -> vector<16x512xf32>
    %92 = arith.addf %88, %91 : vector<16x512xf32>
    %c0_30 = arith.constant 0 : index
    %c512_31 = arith.constant 512 : index
    %93 = vector.load %arg6[%c0_30, %c512_31] : memref<1x1664xf32, #tpu.memory_space<vmem>>, vector<1x512xf32>
    %94 = vector.broadcast %93 : vector<1x512xf32> to vector<16x512xf32>
    %95 = arith.addf %92, %94 : vector<16x512xf32>
    %96 = vector.extract_strided_slice %95 {offsets = [0, 0], sizes = [16, 128], strides = [1, 1]} : vector<16x512xf32> to vector<16x128xf32>
    %97 = arith.negf %96 : vector<16x128xf32>
    %98 = math.exp %97 : vector<16x128xf32>
    %cst_32 = arith.constant 1.000000e+00 : f32
    %99 = vector.broadcast %cst_32 : f32 to vector<16x128xf32>
    %100 = arith.addf %99, %98 : vector<16x128xf32>
    %101 = arith.divf %99, %100 : vector<16x128xf32>
    %102 = vector.extract_strided_slice %95 {offsets = [0, 128], sizes = [16, 128], strides = [1, 1]} : vector<16x512xf32> to vector<16x128xf32>
    %103 = arith.negf %102 : vector<16x128xf32>
    %104 = math.exp %103 : vector<16x128xf32>
    %cst_33 = arith.constant 1.000000e+00 : f32
    %105 = vector.broadcast %cst_33 : f32 to vector<16x128xf32>
    %106 = arith.addf %105, %104 : vector<16x128xf32>
    %107 = arith.divf %105, %106 : vector<16x128xf32>
    %108 = vector.extract_strided_slice %95 {offsets = [0, 256], sizes = [16, 128], strides = [1, 1]} : vector<16x512xf32> to vector<16x128xf32>
    %109 = math.tanh %108 : vector<16x128xf32>
    %110 = vector.extract_strided_slice %95 {offsets = [0, 384], sizes = [16, 128], strides = [1, 1]} : vector<16x512xf32> to vector<16x128xf32>
    %111 = arith.negf %110 : vector<16x128xf32>
    %112 = math.exp %111 : vector<16x128xf32>
    %cst_34 = arith.constant 1.000000e+00 : f32
    %113 = vector.broadcast %cst_34 : f32 to vector<16x128xf32>
    %114 = arith.addf %113, %112 : vector<16x128xf32>
    %115 = arith.divf %113, %114 : vector<16x128xf32>
    %116 = arith.mulf %107, %45 : vector<16x128xf32>
    %117 = arith.mulf %101, %109 : vector<16x128xf32>
    %118 = arith.addf %116, %117 : vector<16x128xf32>
    %119 = math.tanh %118 : vector<16x128xf32>
    %120 = arith.mulf %115, %119 : vector<16x128xf32>
    %cst_35 = arith.constant 0.000000e+00 : f32
    %121 = vector.broadcast %cst_35 : f32 to vector<16x128xf32>
    %122 = arith.maximumf %120, %121 : vector<16x128xf32>
    %c128_36 = arith.constant 128 : index
    %c0_37 = arith.constant 0 : index
    %123 = vector.load %arg5[%c128_36, %c0_37] : memref<384x384xbf16, #tpu.memory_space<vmem>>, vector<128x384xbf16>
    %124 = arith.truncf %122 : vector<16x128xf32> to vector<16x128xbf16>
    %cst_38 = arith.constant dense<0.000000e+00> : vector<16x384xf32>
    %125 = tpu.matmul %124, %123, %cst_38 {dimension_numbers = #tpu.dot_dimension_numbers<[1], [0], [0], [1], [0, 0, 1, 1], [], []>} : vector<16x128xbf16>, vector<128x384xbf16>, vector<16x384xf32> -> vector<16x384xf32>
    %126 = arith.addf %52, %125 : vector<16x384xf32>
    %127 = vector.extract_strided_slice %3 {offsets = [0, 1024], sizes = [16, 512], strides = [1, 1]} : vector<16x1536xf32> to vector<16x512xf32>
    %c0_39 = arith.constant 0 : index
    %c0_40 = arith.constant 0 : index
    %128 = vector.load %arg6[%c0_39, %c0_40] : memref<1x1664xf32, #tpu.memory_space<vmem>>, vector<1x512xf32>
    %129 = vector.broadcast %128 : vector<1x512xf32> to vector<16x512xf32>
    %130 = arith.addf %127, %129 : vector<16x512xf32>
    %c0_41 = arith.constant 0 : index
    %c0_42 = arith.constant 0 : index
    %131 = vector.load %arg3[%c0_41, %c0_42] : memref<128x768xbf16, #tpu.memory_space<vmem>>, vector<128x512xbf16>
    %132 = arith.truncf %85 : vector<16x128xf32> to vector<16x128xbf16>
    %cst_43 = arith.constant dense<0.000000e+00> : vector<16x512xf32>
    %133 = tpu.matmul %132, %131, %cst_43 {dimension_numbers = #tpu.dot_dimension_numbers<[1], [0], [0], [1], [0, 0, 1, 1], [], []>} : vector<16x128xbf16>, vector<128x512xbf16>, vector<16x512xf32> -> vector<16x512xf32>
    %134 = arith.addf %133, %130 : vector<16x512xf32>
    %135 = vector.extract_strided_slice %134 {offsets = [0, 0], sizes = [16, 128], strides = [1, 1]} : vector<16x512xf32> to vector<16x128xf32>
    %136 = arith.negf %135 : vector<16x128xf32>
    %137 = math.exp %136 : vector<16x128xf32>
    %cst_44 = arith.constant 1.000000e+00 : f32
    %138 = vector.broadcast %cst_44 : f32 to vector<16x128xf32>
    %139 = arith.addf %138, %137 : vector<16x128xf32>
    %140 = arith.divf %138, %139 : vector<16x128xf32>
    %141 = vector.extract_strided_slice %134 {offsets = [0, 128], sizes = [16, 128], strides = [1, 1]} : vector<16x512xf32> to vector<16x128xf32>
    %142 = arith.negf %141 : vector<16x128xf32>
    %143 = math.exp %142 : vector<16x128xf32>
    %cst_45 = arith.constant 1.000000e+00 : f32
    %144 = vector.broadcast %cst_45 : f32 to vector<16x128xf32>
    %145 = arith.addf %144, %143 : vector<16x128xf32>
    %146 = arith.divf %144, %145 : vector<16x128xf32>
    %147 = vector.extract_strided_slice %134 {offsets = [0, 256], sizes = [16, 128], strides = [1, 1]} : vector<16x512xf32> to vector<16x128xf32>
    %148 = math.tanh %147 : vector<16x128xf32>
    %149 = vector.extract_strided_slice %134 {offsets = [0, 384], sizes = [16, 128], strides = [1, 1]} : vector<16x512xf32> to vector<16x128xf32>
    %150 = arith.negf %149 : vector<16x128xf32>
    %151 = math.exp %150 : vector<16x128xf32>
    %cst_46 = arith.constant 1.000000e+00 : f32
    %152 = vector.broadcast %cst_46 : f32 to vector<16x128xf32>
    %153 = arith.addf %152, %151 : vector<16x128xf32>
    %154 = arith.divf %152, %153 : vector<16x128xf32>
    %155 = arith.mulf %146, %83 : vector<16x128xf32>
    %156 = arith.mulf %140, %148 : vector<16x128xf32>
    %157 = arith.addf %155, %156 : vector<16x128xf32>
    %158 = math.tanh %157 : vector<16x128xf32>
    %159 = arith.mulf %154, %158 : vector<16x128xf32>
    %c0_47 = arith.constant 0 : index
    %c0_48 = arith.constant 0 : index
    %160 = vector.load %arg4[%c0_47, %c0_48] : memref<256x640xbf16, #tpu.memory_space<vmem>>, vector<128x512xbf16>
    %161 = arith.truncf %159 : vector<16x128xf32> to vector<16x128xbf16>
    %cst_49 = arith.constant dense<0.000000e+00> : vector<16x512xf32>
    %162 = tpu.matmul %161, %160, %cst_49 {dimension_numbers = #tpu.dot_dimension_numbers<[1], [0], [0], [1], [0, 0, 1, 1], [], []>} : vector<16x128xbf16>, vector<128x512xbf16>, vector<16x512xf32> -> vector<16x512xf32>
    %c128_50 = arith.constant 128 : index
    %c0_51 = arith.constant 0 : index
    %163 = vector.load %arg4[%c128_50, %c0_51] : memref<256x640xbf16, #tpu.memory_space<vmem>>, vector<128x512xbf16>
    %164 = arith.truncf %120 : vector<16x128xf32> to vector<16x128xbf16>
    %cst_52 = arith.constant dense<0.000000e+00> : vector<16x512xf32>
    %165 = tpu.matmul %164, %163, %cst_52 {dimension_numbers = #tpu.dot_dimension_numbers<[1], [0], [0], [1], [0, 0, 1, 1], [], []>} : vector<16x128xbf16>, vector<128x512xbf16>, vector<16x512xf32> -> vector<16x512xf32>
    %166 = arith.addf %162, %165 : vector<16x512xf32>
    %c0_53 = arith.constant 0 : index
    %c512_54 = arith.constant 512 : index
    %167 = vector.load %arg6[%c0_53, %c512_54] : memref<1x1664xf32, #tpu.memory_space<vmem>>, vector<1x512xf32>
    %168 = vector.broadcast %167 : vector<1x512xf32> to vector<16x512xf32>
    %169 = arith.addf %166, %168 : vector<16x512xf32>
    %170 = vector.extract_strided_slice %169 {offsets = [0, 0], sizes = [16, 128], strides = [1, 1]} : vector<16x512xf32> to vector<16x128xf32>
    %171 = arith.negf %170 : vector<16x128xf32>
    %172 = math.exp %171 : vector<16x128xf32>
    %cst_55 = arith.constant 1.000000e+00 : f32
    %173 = vector.broadcast %cst_55 : f32 to vector<16x128xf32>
    %174 = arith.addf %173, %172 : vector<16x128xf32>
    %175 = arith.divf %173, %174 : vector<16x128xf32>
    %176 = vector.extract_strided_slice %169 {offsets = [0, 128], sizes = [16, 128], strides = [1, 1]} : vector<16x512xf32> to vector<16x128xf32>
    %177 = arith.negf %176 : vector<16x128xf32>
    %178 = math.exp %177 : vector<16x128xf32>
    %cst_56 = arith.constant 1.000000e+00 : f32
    %179 = vector.broadcast %cst_56 : f32 to vector<16x128xf32>
    %180 = arith.addf %179, %178 : vector<16x128xf32>
    %181 = arith.divf %179, %180 : vector<16x128xf32>
    %182 = vector.extract_strided_slice %169 {offsets = [0, 256], sizes = [16, 128], strides = [1, 1]} : vector<16x512xf32> to vector<16x128xf32>
    %183 = math.tanh %182 : vector<16x128xf32>
    %184 = vector.extract_strided_slice %169 {offsets = [0, 384], sizes = [16, 128], strides = [1, 1]} : vector<16x512xf32> to vector<16x128xf32>
    %185 = arith.negf %184 : vector<16x128xf32>
    %186 = math.exp %185 : vector<16x128xf32>
    %cst_57 = arith.constant 1.000000e+00 : f32
    %187 = vector.broadcast %cst_57 : f32 to vector<16x128xf32>
    %188 = arith.addf %187, %186 : vector<16x128xf32>
    %189 = arith.divf %187, %188 : vector<16x128xf32>
    %190 = arith.mulf %181, %118 : vector<16x128xf32>
    %191 = arith.mulf %175, %183 : vector<16x128xf32>
    %192 = arith.addf %190, %191 : vector<16x128xf32>
    %193 = math.tanh %192 : vector<16x128xf32>
    %194 = arith.mulf %189, %193 : vector<16x128xf32>
    %cst_58 = arith.constant 0.000000e+00 : f32
    %195 = vector.broadcast %cst_58 : f32 to vector<16x128xf32>
    %196 = arith.maximumf %194, %195 : vector<16x128xf32>
    %c256 = arith.constant 256 : index
    %c0_59 = arith.constant 0 : index
    %197 = vector.load %arg5[%c256, %c0_59] : memref<384x384xbf16, #tpu.memory_space<vmem>>, vector<128x384xbf16>
    %198 = arith.truncf %196 : vector<16x128xf32> to vector<16x128xbf16>
    %cst_60 = arith.constant dense<0.000000e+00> : vector<16x384xf32>
    %199 = tpu.matmul %198, %197, %cst_60 {dimension_numbers = #tpu.dot_dimension_numbers<[1], [0], [0], [1], [0, 0, 1, 1], [], []>} : vector<16x128xbf16>, vector<128x384xbf16>, vector<16x384xf32> -> vector<16x384xf32>
    %200 = arith.addf %126, %199 : vector<16x384xf32>
    %c0_61 = arith.constant 0 : index
    %c1024 = arith.constant 1024 : index
    %201 = vector.load %arg6[%c0_61, %c1024] : memref<1x1664xf32, #tpu.memory_space<vmem>>, vector<1x384xf32>
    %202 = vector.broadcast %201 : vector<1x384xf32> to vector<16x384xf32>
    %203 = arith.addf %200, %202 : vector<16x384xf32>
    %204 = vector.extract_strided_slice %203 {offsets = [0, 0], sizes = [16, 128], strides = [1, 1]} : vector<16x384xf32> to vector<16x128xf32>
    %cst_62 = arith.constant 0.000000e+00 : f32
    %205 = vector.broadcast %cst_62 : f32 to vector<16x128xf32>
    %206 = arith.maximumf %204, %205 : vector<16x128xf32>
    %207 = vector.extract_strided_slice %203 {offsets = [0, 128], sizes = [16, 256], strides = [1, 1]} : vector<16x384xf32> to vector<16x256xf32>
    %cst_63 = arith.constant 0.000000e+00 : f32
    %208 = vector.broadcast %cst_63 : f32 to vector<16x256xf32>
    %209 = arith.maximumf %207, %208 : vector<16x256xf32>
    %c0_64 = arith.constant 0 : index
    %c512_65 = arith.constant 512 : index
    %210 = vector.load %arg4[%c0_64, %c512_65] : memref<256x640xbf16, #tpu.memory_space<vmem>>, vector<256x128xbf16>
    %211 = arith.truncf %209 : vector<16x256xf32> to vector<16x256xbf16>
    %cst_66 = arith.constant dense<0.000000e+00> : vector<16x128xf32>
    %212 = tpu.matmul %211, %210, %cst_66 {dimension_numbers = #tpu.dot_dimension_numbers<[1], [0], [0], [1], [0, 0, 1, 1], [], []>} : vector<16x256xbf16>, vector<256x128xbf16>, vector<16x128xf32> -> vector<16x128xf32>
    %c0_67 = arith.constant 0 : index
    %c1408 = arith.constant 1408 : index
    %213 = vector.load %arg6[%c0_67, %c1408] : memref<1x1664xf32, #tpu.memory_space<vmem>>, vector<1x128xf32>
    %214 = vector.broadcast %213 : vector<1x128xf32> to vector<16x128xf32>
    %215 = arith.addf %212, %214 : vector<16x128xf32>
    %cst_68 = arith.constant 0.000000e+00 : f32
    %216 = vector.broadcast %cst_68 : f32 to vector<16x128xf32>
    %217 = arith.maximumf %215, %216 : vector<16x128xf32>
    %c0_69 = arith.constant 0 : index
    %c512_70 = arith.constant 512 : index
    %218 = vector.load %arg3[%c0_69, %c512_70] : memref<128x768xbf16, #tpu.memory_space<vmem>>, vector<128x128xbf16>
    %219 = arith.truncf %206 : vector<16x128xf32> to vector<16x128xbf16>
    %cst_71 = arith.constant dense<0.000000e+00> : vector<16x128xf32>
    %220 = tpu.matmul %219, %218, %cst_71 {dimension_numbers = #tpu.dot_dimension_numbers<[1], [0], [0], [1], [0, 0, 1, 1], [], []>} : vector<16x128xbf16>, vector<128x128xbf16>, vector<16x128xf32> -> vector<16x128xf32>
    %c0_72 = arith.constant 0 : index
    %c640 = arith.constant 640 : index
    %221 = vector.load %arg3[%c0_72, %c640] : memref<128x768xbf16, #tpu.memory_space<vmem>>, vector<128x128xbf16>
    %222 = arith.truncf %217 : vector<16x128xf32> to vector<16x128xbf16>
    %cst_73 = arith.constant dense<0.000000e+00> : vector<16x128xf32>
    %223 = tpu.matmul %222, %221, %cst_73 {dimension_numbers = #tpu.dot_dimension_numbers<[1], [0], [0], [1], [0, 0, 1, 1], [], []>} : vector<16x128xbf16>, vector<128x128xbf16>, vector<16x128xf32> -> vector<16x128xf32>
    %224 = arith.addf %220, %223 : vector<16x128xf32>
    %c0_74 = arith.constant 0 : index
    %c1536 = arith.constant 1536 : index
    %225 = vector.load %arg6[%c0_74, %c1536] : memref<1x1664xf32, #tpu.memory_space<vmem>>, vector<1x128xf32>
    %226 = vector.broadcast %225 : vector<1x128xf32> to vector<16x128xf32>
    %227 = arith.addf %224, %226 : vector<16x128xf32>
    %228 = tpu.iota {dimensions = array<i32: 1>} : vector<16x128xi32>
    %c3_i32 = arith.constant 3 : i32
    %229 = vector.broadcast %c3_i32 : i32 to vector<16x128xi32>
    %230 = arith.cmpi slt, %228, %229 : vector<16x128xi32>
    %cst_75 = arith.constant -1.000000e+30 : f32
    %231 = vector.broadcast %cst_75 : f32 to vector<16x128xf32>
    %232 = arith.select %230, %227, %231 : vector<16x128xi1>, vector<16x128xf32>
    %cst_76 = arith.constant dense<0xFF800000> : vector<16xf32>
    %233 = vector.multi_reduction <maximumf>, %232, %cst_76 [1] : vector<16x128xf32> to vector<16xf32>
    %234 = vector.shape_cast %233 : vector<16xf32> to vector<16x1xf32>
    %235 = vector.broadcast %234 : vector<16x1xf32> to vector<16x128xf32>
    %236 = arith.subf %232, %235 : vector<16x128xf32>
    %237 = math.exp %236 : vector<16x128xf32>
    %cst_77 = arith.constant dense<0.000000e+00> : vector<16xf32>
    %238 = vector.multi_reduction <add>, %237, %cst_77 [1] : vector<16x128xf32> to vector<16xf32>
    %239 = vector.shape_cast %238 : vector<16xf32> to vector<16x1xf32>
    %240 = vector.broadcast %239 : vector<16x1xf32> to vector<16x128xf32>
    %241 = arith.divf %237, %240 : vector<16x128xf32>
    %242 = arith.negf %227 : vector<16x128xf32>
    %243 = math.exp %242 : vector<16x128xf32>
    %cst_78 = arith.constant 1.000000e+00 : f32
    %244 = vector.broadcast %cst_78 : f32 to vector<16x128xf32>
    %245 = arith.addf %244, %243 : vector<16x128xf32>
    %246 = arith.divf %244, %245 : vector<16x128xf32>
    %c3_i32_79 = arith.constant 3 : i32
    %247 = vector.broadcast %c3_i32_79 : i32 to vector<16x128xi32>
    %248 = arith.cmpi slt, %228, %247 : vector<16x128xi32>
    %c3_i32_80 = arith.constant 3 : i32
    %249 = vector.broadcast %c3_i32_80 : i32 to vector<16x128xi32>
    %250 = arith.cmpi eq, %228, %249 : vector<16x128xi32>
    %cst_81 = arith.constant 0.000000e+00 : f32
    %251 = vector.broadcast %cst_81 : f32 to vector<16x128xf32>
    %252 = arith.select %250, %246, %251 : vector<16x128xi1>, vector<16x128xf32>
    %253 = arith.select %248, %241, %252 : vector<16x128xi1>, vector<16x128xf32>
    %c0_82 = arith.constant 0 : index
    %c0_83 = arith.constant 0 : index
    %254 = vector.load %arg7[%c0_82, %c0_83] : memref<16x128xf32, #tpu.memory_space<vmem>>, vector<16x128xf32>
    tpu.vector_store %arg7[%c0_82, %c0_83], %253 {strides = array<i32>} : memref<16x128xf32, #tpu.memory_space<vmem>>, vector<16x128xf32>,
    %255 = arith.truncf %159 : vector<16x128xf32> to vector<16x128xbf16>
    %c0_84 = arith.constant 0 : index
    %c0_85 = arith.constant 0 : index
    %c0_86 = arith.constant 0 : index
    %256 = vector.load %arg8[%c0_84, %c0_85, %c0_86] : memref<2x16x128xbf16, #tpu.memory_space<vmem>>, vector<1x16x128xbf16>
    %257 = vector.shape_cast %256 : vector<1x16x128xbf16> to vector<16x128xbf16>
    %258 = vector.shape_cast %255 : vector<16x128xbf16> to vector<1x16x128xbf16>
    tpu.vector_store %arg8[%c0_84, %c0_85, %c0_86], %258 {strides = array<i32>} : memref<2x16x128xbf16, #tpu.memory_space<vmem>>, vector<1x16x128xbf16>,
    %259 = arith.truncf %194 : vector<16x128xf32> to vector<16x128xbf16>
    %c1 = arith.constant 1 : index
    %c0_87 = arith.constant 0 : index
    %c0_88 = arith.constant 0 : index
    %260 = vector.load %arg8[%c1, %c0_87, %c0_88] : memref<2x16x128xbf16, #tpu.memory_space<vmem>>, vector<1x16x128xbf16>
    %261 = vector.shape_cast %260 : vector<1x16x128xbf16> to vector<16x128xbf16>
    %262 = vector.shape_cast %259 : vector<16x128xbf16> to vector<1x16x128xbf16>
    tpu.vector_store %arg8[%c1, %c0_87, %c0_88], %262 {strides = array<i32>} : memref<2x16x128xbf16, #tpu.memory_space<vmem>>, vector<1x16x128xbf16>,
    %263 = arith.truncf %157 : vector<16x128xf32> to vector<16x128xbf16>
    %c0_89 = arith.constant 0 : index
    %c0_90 = arith.constant 0 : index
    %c0_91 = arith.constant 0 : index
    %264 = vector.load %arg9[%c0_89, %c0_90, %c0_91] : memref<2x16x128xbf16, #tpu.memory_space<vmem>>, vector<1x16x128xbf16>
    %265 = vector.shape_cast %264 : vector<1x16x128xbf16> to vector<16x128xbf16>
    %266 = vector.shape_cast %263 : vector<16x128xbf16> to vector<1x16x128xbf16>
    tpu.vector_store %arg9[%c0_89, %c0_90, %c0_91], %266 {strides = array<i32>} : memref<2x16x128xbf16, #tpu.memory_space<vmem>>, vector<1x16x128xbf16>,
    %267 = arith.truncf %192 : vector<16x128xf32> to vector<16x128xbf16>
    %c1_92 = arith.constant 1 : index
    %c0_93 = arith.constant 0 : index
    %c0_94 = arith.constant 0 : index
    %268 = vector.load %arg9[%c1_92, %c0_93, %c0_94] : memref<2x16x128xbf16, #tpu.memory_space<vmem>>, vector<1x16x128xbf16>
    %269 = vector.shape_cast %268 : vector<1x16x128xbf16> to vector<16x128xbf16>
    %270 = vector.shape_cast %267 : vector<16x128xbf16> to vector<1x16x128xbf16>
    tpu.vector_store %arg9[%c1_92, %c0_93, %c0_94], %270 {strides = array<i32>} : memref<2x16x128xbf16, #tpu.memory_space<vmem>>, vector<1x16x128xbf16>,
    return
  }
  func.func @transform_0(%arg0: i32) -> (i32, i32) {
    %c0_i32 = arith.constant 0 : i32
    %c0_i32_0 = arith.constant 0 : i32
    return %arg0, %c0_i32 : i32, i32
  }
  func.func @transform_1(%arg0: i32) -> (i32, i32) {
    %c0_i32 = arith.constant 0 : i32
    %c0_i32_0 = arith.constant 0 : i32
    %c0_i32_1 = arith.constant 0 : i32
    return %c0_i32, %c0_i32_0 : i32, i32
  }
  func.func @transform_2(%arg0: i32) -> (i32, i32) {
    %c0_i32 = arith.constant 0 : i32
    %c0_i32_0 = arith.constant 0 : i32
    %c0_i32_1 = arith.constant 0 : i32
    return %c0_i32, %c0_i32_0 : i32, i32
  }
  func.func @transform_3(%arg0: i32) -> (i32, i32) {
    %c0_i32 = arith.constant 0 : i32
    %c0_i32_0 = arith.constant 0 : i32
    %c0_i32_1 = arith.constant 0 : i32
    return %c0_i32, %c0_i32_0 : i32, i32
  }
  func.func @transform_4(%arg0: i32) -> (i32, i32) {
    %c0_i32 = arith.constant 0 : i32
    %c0_i32_0 = arith.constant 0 : i32
    %c0_i32_1 = arith.constant 0 : i32
    return %c0_i32, %c0_i32_0 : i32, i32
  }
  func.func @transform_5(%arg0: i32) -> (i32, i32) {
    %c0_i32 = arith.constant 0 : i32
    %c0_i32_0 = arith.constant 0 : i32
    %c0_i32_1 = arith.constant 0 : i32
    return %c0_i32, %c0_i32_0 : i32, i32
  }
  func.func @transform_6(%arg0: i32) -> (i32, i32) {
    %c0_i32 = arith.constant 0 : i32
    %c0_i32_0 = arith.constant 0 : i32
    return %arg0, %c0_i32 : i32, i32
  }
  func.func @transform_7(%arg0: i32) -> (i32, i32, i32) {
    %c0_i32 = arith.constant 0 : i32
    %c0_i32_0 = arith.constant 0 : i32
    %c0_i32_1 = arith.constant 0 : i32
    return %c0_i32, %arg0, %c0_i32_0 : i32, i32, i32
  }
  func.func @transform_8(%arg0: i32) -> (i32, i32, i32) {
    %c0_i32 = arith.constant 0 : i32
    %c0_i32_0 = arith.constant 0 : i32
    %c0_i32_1 = arith.constant 0 : i32
    return %c0_i32, %arg0, %c0_i32_0 : i32, i32, i32
  }
}

</mosaic_0001>

<llo_original>
// kernel: tpu_custom_call.1
$region0: #{tpu_custom_call.1}
  #allocation0 [shape = 'u32[]', space=smem, size = 0x4, offset = 0x4, fixed_abs, tag = 'smem constant byte address 0x4 - core index']
  #allocation1 [shape = 'u32[144,128]{1,0:T(1,128)}', space=vmem, size = 0x12000, scoped, tag = 'internal scratch']
  %s0 = inlined_call_operand.hbm [shape: f32[16,64], index: 0, kind: input, shape index: {}]
  %s1 = inlined_call_operand.hbm [shape: bf16[64,1536], index: 1, kind: input, shape index: {}]
  %s2 = inlined_call_operand.hbm [shape: bf16[128,768], index: 2, kind: input, shape index: {}]
  %s3 = inlined_call_operand.hbm [shape: bf16[256,640], index: 3, kind: input, shape index: {}]
  %s4 = inlined_call_operand.hbm [shape: bf16[384,384], index: 4, kind: input, shape index: {}]
  %s5 = inlined_call_operand.vmem [shape: f32[1,1664], index: 5, kind: input, shape index: {}]
  %s6 = inlined_call_operand.hbm [shape: f32[16,128], index: 6, kind: output, shape index: {0}]
  %s7 = inlined_call_operand.hbm [shape: bf16[2,16,128], index: 7, kind: output, shape index: {1}]
  %s8 = inlined_call_operand.hbm [shape: bf16[2,16,128], index: 8, kind: output, shape index: {2}]
  %9 = xla_tuple %s6, %s7, %s8
  %s10 = sld [smem:[#allocation0]]
  $region70: #{tpu_custom_call.1} parent=0
    _
  %s12 = ssub.s32 1, %s10
  %s13 = scalar_select 0, %s12, %s10
  $region1: #{tpu_custom_call.1} parent=0
    #allocation2 [shape = 'u8[8192]{0}', space=vmem, size = 0x2000, scoped, tag = 'input window, operand 0, single buffered']
    #allocation3 [shape = 's32[1]{0}', space=sflag, size = 0x4, scoped, tag = 'scoped memory for tpu_custom_call.1']
    #allocation4 [shape = 's32[1]{0}', space=sflag, size = 0x4, scoped, tag = 'scoped memory for tpu_custom_call.1']
    #allocation5 [shape = 'u8[196608]{0}', space=vmem, size = 0x30000, scoped, tag = 'input window, operand 1, single buffered']
    #allocation6 [shape = 's32[1]{0}', space=sflag, size = 0x4, scoped, tag = 'scoped memory for tpu_custom_call.1']
    #allocation7 [shape = 'u8[196608]{0}', space=vmem, size = 0x30000, scoped, tag = 'input window, operand 2, single buffered']
    #allocation8 [shape = 'u8[327680]{0}', space=vmem, size = 0x50000, scoped, tag = 'input window, operand 3, single buffered']
    #allocation9 [shape = 's32[1]{0}', space=sflag, size = 0x4, scoped, tag = 'scoped memory for tpu_custom_call.1']
    #allocation10 [shape = 'u8[294912]{0}', space=vmem, size = 0x48000, scoped, tag = 'input window, operand 4, single buffered']
    #allocation11 [shape = 'u8[8192]{0}', space=vmem, size = 0x2000, scoped, tag = 'output window, operand 0, single buffered']
    #allocation12 [shape = 'u8[8192]{0}', space=vmem, size = 0x2000, scoped, tag = 'output window, operand 1, single buffered']
    #allocation13 [shape = 's32[1]{0}', space=sflag, size = 0x4, scoped, tag = 'scoped memory for tpu_custom_call.1']
    #allocation14 [shape = 'u8[8192]{0}', space=vmem, size = 0x2000, scoped, tag = 'output window, operand 2, single buffered']
    %14 = vsyncpa [#allocation3], 0
    %15 = vsyncpa [#allocation6], 0
    %16 = vsyncpa [#allocation9], 0
    %17 = vsyncpa [#allocation4], 0
    %18 = vsyncpa [#allocation13], 0
    // Predicated region
    $region2: #{tpu_custom_call.1} parent=1 // pred_check
      _
    $region3: #{tpu_custom_call.1} parent=1 // pred_check_branch
      %20 = sbr.rel (0) target = $region5
    $region4: #{tpu_custom_call.1} parent=1 // pred_region
      %s22 = ssub.s32 256, 256
      %23 = vsyncadd [#allocation3], %s22
      %s24 = sshll.u32 [#allocation2], 4
      %s25 = int_to_ptr.vmem [resolvable:$true] %s24
      %30 = dma.hbm_to_vmem [thread:$0]  %s0, 256, %s25, [#allocation3], 128, 128, 8
    $region5: #{tpu_custom_call.1} parent=1 // pred_fallthru
      _
    // Predicated region
    $region6: #{tpu_custom_call.1} parent=1 // pred_check
      _
    $region7: #{tpu_custom_call.1} parent=1 // pred_check_branch
      %32 = sbr.rel (0) target = $region9
    $region8: #{tpu_custom_call.1} parent=1 // pred_region
      %s34 = ssub.s32 6144, 6144
      %35 = vsyncadd [#allocation6], %s34
      %s36 = sshll.u32 [#allocation5], 4
      %s37 = int_to_ptr.vmem [resolvable:$true] %s36
      %42 = dma.hbm_to_vmem [thread:$0]  %s1, 6144, %s37, [#allocation6], 768, 768, 48
    $region9: #{tpu_custom_call.1} parent=1 // pred_fallthru
      _
    // Predicated region
    $region10: #{tpu_custom_call.1} parent=1 // pred_check
      _
    $region11: #{tpu_custom_call.1} parent=1 // pred_check_branch
      %44 = sbr.rel (0) target = $region13
    $region12: #{tpu_custom_call.1} parent=1 // pred_region
      %s46 = ssub.s32 6144, 6144
      %47 = vsyncadd [#allocation6], %s46
      %s48 = sshll.u32 [#allocation7], 4
      %s49 = int_to_ptr.vmem [resolvable:$true] %s48
      %54 = dma.hbm_to_vmem [thread:$0]  %s2, 6144, %s49, [#allocation6], 384, 384, 24
    $region13: #{tpu_custom_call.1} parent=1 // pred_fallthru
      _
    // Predicated region
    $region14: #{tpu_custom_call.1} parent=1 // pred_check
      _
    $region15: #{tpu_custom_call.1} parent=1 // pred_check_branch
      %56 = sbr.rel (0) target = $region17
    $region16: #{tpu_custom_call.1} parent=1 // pred_region
      %s58 = ssub.s32 10240, 10240
      %59 = vsyncadd [#allocation9], %s58
      %s60 = sshll.u32 [#allocation8], 4
      %s61 = int_to_ptr.vmem [resolvable:$true] %s60
      %66 = dma.hbm_to_vmem [thread:$0]  %s3, 10240, %s61, [#allocation9], 320, 320, 20
    $region17: #{tpu_custom_call.1} parent=1 // pred_fallthru
      _
    // Predicated region
    $region18: #{tpu_custom_call.1} parent=1 // pred_check
      _
    $region19: #{tpu_custom_call.1} parent=1 // pred_check_branch
      %68 = sbr.rel (0) target = $region21
    $region20: #{tpu_custom_call.1} parent=1 // pred_region
      %s70 = ssub.s32 9216, 9216
      %71 = vsyncadd [#allocation9], %s70
      %s72 = sshll.u32 [#allocation10], 4
      %s73 = int_to_ptr.vmem [resolvable:$true] %s72
      %78 = dma.hbm_to_vmem [thread:$0]  %s4, 9216, %s73, [#allocation9], 192, 192, 12
    $region21: #{tpu_custom_call.1} parent=1 // pred_fallthru
      _
    // Predicated region
    $region22: #{tpu_custom_call.1} parent=1 // pred_check
      _
    $region23: #{tpu_custom_call.1} parent=1 // pred_check_branch
      %80 = sbr.rel (0) target = $region25
    $region24: #{tpu_custom_call.1} parent=1 // pred_region
      _
    $region25: #{tpu_custom_call.1} parent=1 // pred_fallthru
      _
    // Predicated region
    $region26: #{tpu_custom_call.1} parent=1 // pred_check
      _
    $region27: #{tpu_custom_call.1} parent=1 // pred_check_branch
      %82 = sbr.rel (0) target = $region29
    $region28: #{tpu_custom_call.1} parent=1 // pred_region
      %83 = dma.done [#allocation3], 256
    $region29: #{tpu_custom_call.1} parent=1 // pred_fallthru
      _
    // Predicated region
    $region30: #{tpu_custom_call.1} parent=1 // pred_check
      _
    $region31: #{tpu_custom_call.1} parent=1 // pred_check_branch
      %85 = sbr.rel (0) target = $region33
    $region32: #{tpu_custom_call.1} parent=1 // pred_region
      %86 = dma.done [#allocation6], 6144
    $region33: #{tpu_custom_call.1} parent=1 // pred_fallthru
      _
    // Predicated region
    $region34: #{tpu_custom_call.1} parent=1 // pred_check
      _
    $region35: #{tpu_custom_call.1} parent=1 // pred_check_branch
      %88 = sbr.rel (0) target = $region37
    $region36: #{tpu_custom_call.1} parent=1 // pred_region
      %89 = dma.done [#allocation6], 6144
    $region37: #{tpu_custom_call.1} parent=1 // pred_fallthru
      _
    // Predicated region
    $region38: #{tpu_custom_call.1} parent=1 // pred_check
      _
    $region39: #{tpu_custom_call.1} parent=1 // pred_check_branch
      %91 = sbr.rel (0) target = $region41
    $region40: #{tpu_custom_call.1} parent=1 // pred_region
      %92 = dma.done [#allocation9], 10240
    $region41: #{tpu_custom_call.1} parent=1 // pred_fallthru
      _
    // Predicated region
    $region42: #{tpu_custom_call.1} parent=1 // pred_check
      _
    $region43: #{tpu_custom_call.1} parent=1 // pred_check_branch
      %94 = sbr.rel (0) target = $region45
    $region44: #{tpu_custom_call.1} parent=1 // pred_region
      %95 = dma.done [#allocation9], 9216
    $region45: #{tpu_custom_call.1} parent=1 // pred_fallthru
      _
    %v97 = vld [vmem:[#allocation2] sm:$0xff]
    %v98 = vld [vmem:[#allocation2 + $0x8] sm:$0xff]
    %v99 = vld [vmem:[#allocation5] sm:$0xff]
    %v100 = vld [vmem:[#allocation5 + $0x8] sm:$0xff]
    %v101 = vld [vmem:[#allocation5 + $0x10] sm:$0xff]
    %v102 = vld [vmem:[#allocation5 + $0x18] sm:$0xff]
    %v103 = vld [vmem:[#allocation5 + $0x20] sm:$0xff]
    %v104 = vld [vmem:[#allocation5 + $0x28] sm:$0xff]
    %v105 = vld [vmem:[#allocation5 + $0x30] sm:$0xff]
    %v106 = vld [vmem:[#allocation5 + $0x38] sm:$0xff]
    %v107 = vld [vmem:[#allocation5 + $0x40] sm:$0xff]
    %v108 = vld [vmem:[#allocation5 + $0x48] sm:$0xff]
    %v109 = vld [vmem:[#allocation5 + $0x50] sm:$0xff]
    %v110 = vld [vmem:[#allocation5 + $0x58] sm:$0xff]
    %v111 = vld [vmem:[#allocation5 + $0x60] sm:$0xff]
    %v112 = vld [vmem:[#allocation5 + $0x68] sm:$0xff]
    %v113 = vld [vmem:[#allocation5 + $0x70] sm:$0xff]
    %v114 = vld [vmem:[#allocation5 + $0x78] sm:$0xff]
    %v115 = vld [vmem:[#allocation5 + $0x80] sm:$0xff]
    %v116 = vld [vmem:[#allocation5 + $0x88] sm:$0xff]
    %v117 = vld [vmem:[#allocation5 + $0x90] sm:$0xff]
    %v118 = vld [vmem:[#allocation5 + $0x98] sm:$0xff]
    %v119 = vld [vmem:[#allocation5 + $0xa0] sm:$0xff]
    %v120 = vld [vmem:[#allocation5 + $0xa8] sm:$0xff]
    %v121 = vld [vmem:[#allocation5 + $0xb0] sm:$0xff]
    %v122 = vld [vmem:[#allocation5 + $0xb8] sm:$0xff]
    %v123 = vld [vmem:[#allocation5 + $0xc0] sm:$0xff]
    %v124 = vld [vmem:[#allocation5 + $0xc8] sm:$0xff]
    %v125 = vld [vmem:[#allocation5 + $0xd0] sm:$0xff]
    %v126 = vld [vmem:[#allocation5 + $0xd8] sm:$0xff]
    %v127 = vld [vmem:[#allocation5 + $0xe0] sm:$0xff]
    %v128 = vld [vmem:[#allocation5 + $0xe8] sm:$0xff]
    %v129 = vld [vmem:[#allocation5 + $0xf0] sm:$0xff]
    %v130 = vld [vmem:[#allocation5 + $0xf8] sm:$0xff]
    %v131 = vld [vmem:[#allocation5 + $0x100] sm:$0xff]
    %v132 = vld [vmem:[#allocation5 + $0x108] sm:$0xff]
    %v133 = vld [vmem:[#allocation5 + $0x110] sm:$0xff]
    %v134 = vld [vmem:[#allocation5 + $0x118] sm:$0xff]
    %v135 = vld [vmem:[#allocation5 + $0x120] sm:$0xff]
    %v136 = vld [vmem:[#allocation5 + $0x128] sm:$0xff]
    %v137 = vld [vmem:[#allocation5 + $0x130] sm:$0xff]
    %v138 = vld [vmem:[#allocation5 + $0x138] sm:$0xff]
    %v139 = vld [vmem:[#allocation5 + $0x140] sm:$0xff]
    %v140 = vld [vmem:[#allocation5 + $0x148] sm:$0xff]
    %v141 = vld [vmem:[#allocation5 + $0x150] sm:$0xff]
    %v142 = vld [vmem:[#allocation5 + $0x158] sm:$0xff]
    %v143 = vld [vmem:[#allocation5 + $0x160] sm:$0xff]
    %v144 = vld [vmem:[#allocation5 + $0x168] sm:$0xff]
    %v145 = vld [vmem:[#allocation5 + $0x170] sm:$0xff]
    %v146 = vld [vmem:[#allocation5 + $0x178] sm:$0xff]
    %v147 = vpack.c.bf16 %v98, %v97
    %v196 = vunpack.c.l.b16 %v99
    %v197 = vunpack.c.h.b16 %v99
    %v198 = vunpack.c.l.b16 %v100
    %v199 = vunpack.c.h.b16 %v100
    %v200 = vunpack.c.l.b16 %v101
    %v201 = vunpack.c.h.b16 %v101
    %v202 = vunpack.c.l.b16 %v102
    %v203 = vunpack.c.h.b16 %v102
    %v204 = vunpack.c.l.b16 %v103
    %v205 = vunpack.c.h.b16 %v103
    %v206 = vunpack.c.l.b16 %v104
    %v207 = vunpack.c.h.b16 %v104
    %v208 = vunpack.c.l.b16 %v105
    %v209 = vunpack.c.h.b16 %v105
    %v210 = vunpack.c.l.b16 %v106
    %v211 = vunpack.c.h.b16 %v106
    %v212 = vunpack.c.l.b16 %v107
    %v213 = vunpack.c.h.b16 %v107
    %v214 = vunpack.c.l.b16 %v108
    %v215 = vunpack.c.h.b16 %v108
    %v216 = vunpack.c.l.b16 %v109
    %v217 = vunpack.c.h.b16 %v109
    %v218 = vunpack.c.l.b16 %v110
    %v219 = vunpack.c.h.b16 %v110
    %v220 = vunpack.c.l.b16 %v111
    %v221 = vunpack.c.h.b16 %v111
    %v222 = vunpack.c.l.b16 %v112
    %v223 = vunpack.c.h.b16 %v112
    %v224 = vunpack.c.l.b16 %v113
    %v225 = vunpack.c.h.b16 %v113
    %v226 = vunpack.c.l.b16 %v114
    %v227 = vunpack.c.h.b16 %v114
    %v228 = vunpack.c.l.b16 %v115
    %v229 = vunpack.c.h.b16 %v115
    %v230 = vunpack.c.l.b16 %v116
    %v231 = vunpack.c.h.b16 %v116
    %v232 = vunpack.c.l.b16 %v117
    %v233 = vunpack.c.h.b16 %v117
    %v234 = vunpack.c.l.b16 %v118
    %v235 = vunpack.c.h.b16 %v118
    %v236 = vunpack.c.l.b16 %v119
    %v237 = vunpack.c.h.b16 %v119
    %v238 = vunpack.c.l.b16 %v120
    %v239 = vunpack.c.h.b16 %v120
    %v240 = vunpack.c.l.b16 %v121
    %v241 = vunpack.c.h.b16 %v121
    %v242 = vunpack.c.l.b16 %v122
    %v243 = vunpack.c.h.b16 %v122
    %v244 = vunpack.c.l.b16 %v123
    %v245 = vunpack.c.h.b16 %v123
    %v246 = vunpack.c.l.b16 %v124
    %v247 = vunpack.c.h.b16 %v124
    %v248 = vunpack.c.l.b16 %v125
    %v249 = vunpack.c.h.b16 %v125
    %v250 = vunpack.c.l.b16 %v126
    %v251 = vunpack.c.h.b16 %v126
    %v252 = vunpack.c.l.b16 %v127
    %v253 = vunpack.c.h.b16 %v127
    %v254 = vunpack.c.l.b16 %v128
    %v255 = vunpack.c.h.b16 %v128
    %v256 = vunpack.c.l.b16 %v129
    %v257 = vunpack.c.h.b16 %v129
    %v258 = vunpack.c.l.b16 %v130
    %v259 = vunpack.c.h.b16 %v130
    %v260 = vunpack.c.l.b16 %v131
    %v261 = vunpack.c.h.b16 %v131
    %v262 = vunpack.c.l.b16 %v132
    %v263 = vunpack.c.h.b16 %v132
    %v264 = vunpack.c.l.b16 %v133
    %v265 = vunpack.c.h.b16 %v133
    %v266 = vunpack.c.l.b16 %v134
    %v267 = vunpack.c.h.b16 %v134
    %v268 = vunpack.c.l.b16 %v135
    %v269 = vunpack.c.h.b16 %v135
    %v270 = vunpack.c.l.b16 %v136
    %v271 = vunpack.c.h.b16 %v136
    %v272 = vunpack.c.l.b16 %v137
    %v273 = vunpack.c.h.b16 %v137
    %v274 = vunpack.c.l.b16 %v138
    %v275 = vunpack.c.h.b16 %v138
    %v276 = vunpack.c.l.b16 %v139
    %v277 = vunpack.c.h.b16 %v139
    %v278 = vunpack.c.l.b16 %v140
    %v279 = vunpack.c.h.b16 %v140
    %v280 = vunpack.c.l.b16 %v141
    %v281 = vunpack.c.h.b16 %v141
    %v282 = vunpack.c.l.b16 %v142
    %v283 = vunpack.c.h.b16 %v142
    %v284 = vunpack.c.l.b16 %v143
    %v285 = vunpack.c.h.b16 %v143
    %v286 = vunpack.c.l.b16 %v144
    %v287 = vunpack.c.h.b16 %v144
    %v288 = vunpack.c.l.b16 %v145
    %v289 = vunpack.c.h.b16 %v145
    %v290 = vunpack.c.l.b16 %v146
    %v291 = vunpack.c.h.b16 %v146
    %v292 = vpack.c.b16 %v208, %v196
    %v293 = vpack.c.b16 %v209, %v197
    %v294 = vpack.c.b16 %v210, %v198
    %v295 = vpack.c.b16 %v211, %v199
    %v296 = vpack.c.b16 %v212, %v200
    %v297 = vpack.c.b16 %v213, %v201
    %v298 = vpack.c.b16 %v214, %v202
    %v299 = vpack.c.b16 %v215, %v203
    %v300 = vpack.c.b16 %v216, %v204
    %v301 = vpack.c.b16 %v217, %v205
    %v302 = vpack.c.b16 %v218, %v206
    %v303 = vpack.c.b16 %v219, %v207
    %v304 = vpack.c.b16 %v232, %v220
    %v305 = vpack.c.b16 %v233, %v221
    %v306 = vpack.c.b16 %v234, %v222
    %v307 = vpack.c.b16 %v235, %v223
    %v308 = vpack.c.b16 %v236, %v224
    %v309 = vpack.c.b16 %v237, %v225
    %v310 = vpack.c.b16 %v238, %v226
    %v311 = vpack.c.b16 %v239, %v227
    %v312 = vpack.c.b16 %v240, %v228
    %v313 = vpack.c.b16 %v241, %v229
    %v314 = vpack.c.b16 %v242, %v230
    %v315 = vpack.c.b16 %v243, %v231
    %v316 = vpack.c.b16 %v256, %v244
    %v317 = vpack.c.b16 %v257, %v245
    %v318 = vpack.c.b16 %v258, %v246
    %v319 = vpack.c.b16 %v259, %v247
    %v320 = vpack.c.b16 %v260, %v248
    %v321 = vpack.c.b16 %v261, %v249
    %v322 = vpack.c.b16 %v262, %v250
    %v323 = vpack.c.b16 %v263, %v251
    %v324 = vpack.c.b16 %v264, %v252
    %v325 = vpack.c.b16 %v265, %v253
    %v326 = vpack.c.b16 %v266, %v254
    %v327 = vpack.c.b16 %v267, %v255
    %v328 = vpack.c.b16 %v280, %v268
    %v329 = vpack.c.b16 %v281, %v269
    %v330 = vpack.c.b16 %v282, %v270
    %v331 = vpack.c.b16 %v283, %v271
    %v332 = vpack.c.b16 %v284, %v272
    %v333 = vpack.c.b16 %v285, %v273
    %v334 = vpack.c.b16 %v286, %v274
    %v335 = vpack.c.b16 %v287, %v275
    %v336 = vpack.c.b16 %v288, %v276
    %v337 = vpack.c.b16 %v289, %v277
    %v338 = vpack.c.b16 %v290, %v278
    %v339 = vpack.c.b16 %v291, %v279
    %vm388 = vcmask 523264
    %v390 = vsel %vm388, %v147, 0
    %392 = vmatprep.subr.bf16.mxu0 %v293
    %393 = vmatpush1.bf16.msra.mxu0 %v292
    %394 = vmatprep.subr.bf16.mxu0 %v305
    %395 = vmatpush1.bf16.msra.mxu0 %v304
    %396 = vmatprep.subr.bf16.mxu0 %v317
    %397 = vmatpush1.bf16.msra.mxu0 %v316
    %398 = vmatprep.subr.bf16.mxu0 %v329
    %399 = vmatpush1.bf16.msra.mxu0 %v328
    %400 = vmatprep.subr.bf16.mxu0 0
    %401 = vmatpush1.bf16.msra.mxu0 0
    %402 = vmatprep.subr.bf16.mxu0 0
    %403 = vmatpush1.bf16.msra.mxu0 0
    %404 = vmatprep.subr.bf16.mxu0 0
    %405 = vmatpush1.bf16.msra.mxu0 0
    %406 = vmatprep.subr.bf16.mxu0 0
    %407 = vmatpush1.bf16.msra.mxu0 0
    %408 = vmatprep.subr.bf16.mxu0 0
    %409 = vmatpush1.bf16.msra.mxu0 0
    %410 = vmatprep.subr.bf16.mxu0 0
    %411 = vmatpush1.bf16.msra.mxu0 0
    %412 = vmatprep.subr.bf16.mxu0 0
    %413 = vmatpush1.bf16.msra.mxu0 0
    %414 = vmatprep.subr.bf16.mxu0 0
    %415 = vmatpush1.bf16.msra.mxu0 0
    %416 = vmatprep.subr.bf16.mxu0 0
    %417 = vmatpush1.bf16.msra.mxu0 0
    %418 = vmatprep.subr.bf16.mxu0 0
    %419 = vmatpush1.bf16.msra.mxu0 0
    %420 = vmatprep.subr.bf16.mxu0 0
    %421 = vmatpush1.bf16.msra.mxu0 0
    %422 = vmatprep.subr.bf16.mxu0 0
    %423 = vmatpush1.bf16.msra.mxu0 0
    %424 = vmatprep.mubr.bf16.mxu0 0
    %425 = vmatmul.mubr.bf16.gmra.mrb[0].mxu0 %v390
    %v426 = vpop.f32.mrb[0].mxu0
    %v427 = vadd.f32 0.0, %v426
    %v428 = vpop.f32.mrb[0].mxu0
    %v429 = vpop.f32.mrb[0].mxu0
    %v430 = vadd.f32 0.0, %v429
    %v431 = vpop.f32.mrb[0].mxu0
    %432 = vdwg.mxu0
    %433 = vmatprep.subr.bf16.mxu0 %v295
    %434 = vmatpush1.bf16.msra.mxu0 %v294
    %435 = vmatprep.subr.bf16.mxu0 %v307
    %436 = vmatpush1.bf16.msra.mxu0 %v306
    %437 = vmatprep.subr.bf16.mxu0 %v319
    %438 = vmatpush1.bf16.msra.mxu0 %v318
    %439 = vmatprep.subr.bf16.mxu0 %v331
    %440 = vmatpush1.bf16.msra.mxu0 %v330
    %441 = vmatprep.subr.bf16.mxu0 0
    %442 = vmatpush1.bf16.msra.mxu0 0
    %443 = vmatprep.subr.bf16.mxu0 0
    %444 = vmatpush1.bf16.msra.mxu0 0
    %445 = vmatprep.subr.bf16.mxu0 0
    %446 = vmatpush1.bf16.msra.mxu0 0
    %447 = vmatprep.subr.bf16.mxu0 0
    %448 = vmatpush1.bf16.msra.mxu0 0
    %449 = vmatprep.subr.bf16.mxu0 0
    %450 = vmatpush1.bf16.msra.mxu0 0
    %451 = vmatprep.subr.bf16.mxu0 0
    %452 = vmatpush1.bf16.msra.mxu0 0
    %453 = vmatprep.subr.bf16.mxu0 0
    %454 = vmatpush1.bf16.msra.mxu0 0
    %455 = vmatprep.subr.bf16.mxu0 0
    %456 = vmatpush1.bf16.msra.mxu0 0
    %457 = vmatprep.subr.bf16.mxu0 0
    %458 = vmatpush1.bf16.msra.mxu0 0
    %459 = vmatprep.subr.bf16.mxu0 0
    %460 = vmatpush1.bf16.msra.mxu0 0
    %461 = vmatprep.subr.bf16.mxu0 0
    %462 = vmatpush1.bf16.msra.mxu0 0
    %463 = vmatprep.subr.bf16.mxu0 0
    %464 = vmatpush1.bf16.msra.mxu0 0
    %465 = vmatprep.mubr.bf16.mxu0 0
    %466 = vmatmul.mubr.bf16.gmra.mrb[0].mxu0 %v390
    %v467 = vpop.f32.mrb[0].mxu0
    %v468 = vadd.f32 0.0, %v467
    %v469 = vpop.f32.mrb[0].mxu0
    %v470 = vadd.f32 0.0, %v469
    %v471 = vpop.f32.mrb[0].mxu0
    %v472 = vadd.f32 0.0, %v471
    %v473 = vpop.f32.mrb[0].mxu0
    %v474 = vadd.f32 0.0, %v473
    %475 = vdwg.mxu0
    %476 = vmatprep.subr.bf16.mxu0 %v297
    %477 = vmatpush1.bf16.msra.mxu0 %v296
    %478 = vmatprep.subr.bf16.mxu0 %v309
    %479 = vmatpush1.bf16.msra.mxu0 %v308
    %480 = vmatprep.subr.bf16.mxu0 %v321
    %481 = vmatpush1.bf16.msra.mxu0 %v320
    %482 = vmatprep.subr.bf16.mxu0 %v333
    %483 = vmatpush1.bf16.msra.mxu0 %v332
    %484 = vmatprep.subr.bf16.mxu0 0
    %485 = vmatpush1.bf16.msra.mxu0 0
    %486 = vmatprep.subr.bf16.mxu0 0
    %487 = vmatpush1.bf16.msra.mxu0 0
    %488 = vmatprep.subr.bf16.mxu0 0
    %489 = vmatpush1.bf16.msra.mxu0 0
    %490 = vmatprep.subr.bf16.mxu0 0
    %491 = vmatpush1.bf16.msra.mxu0 0
    %492 = vmatprep.subr.bf16.mxu0 0
    %493 = vmatpush1.bf16.msra.mxu0 0
    %494 = vmatprep.subr.bf16.mxu0 0
    %495 = vmatpush1.bf16.msra.mxu0 0
    %496 = vmatprep.subr.bf16.mxu0 0
    %497 = vmatpush1.bf16.msra.mxu0 0
    %498 = vmatprep.subr.bf16.mxu0 0
    %499 = vmatpush1.bf16.msra.mxu0 0
    %500 = vmatprep.subr.bf16.mxu0 0
    %501 = vmatpush1.bf16.msra.mxu0 0
    %502 = vmatprep.subr.bf16.mxu0 0
    %503 = vmatpush1.bf16.msra.mxu0 0
    %504 = vmatprep.subr.bf16.mxu0 0
    %505 = vmatpush1.bf16.msra.mxu0 0
    %506 = vmatprep.subr.bf16.mxu0 0
    %507 = vmatpush1.bf16.msra.mxu0 0
    %508 = vmatprep.mubr.bf16.mxu0 0
    %509 = vmatmul.mubr.bf16.gmra.mrb[0].mxu0 %v390
    %v510 = vpop.f32.mrb[0].mxu0
    %v511 = vadd.f32 0.0, %v510
    %v512 = vpop.f32.mrb[0].mxu0
    %v513 = vadd.f32 0.0, %v512
    %v514 = vpop.f32.mrb[0].mxu0
    %v515 = vadd.f32 0.0, %v514
    %v516 = vpop.f32.mrb[0].mxu0
    %v517 = vadd.f32 0.0, %v516
    %518 = vdwg.mxu0
    %519 = vmatprep.subr.bf16.mxu0 %v299
    %520 = vmatpush1.bf16.msra.mxu0 %v298
    %521 = vmatprep.subr.bf16.mxu0 %v311
    %522 = vmatpush1.bf16.msra.mxu0 %v310
    %523 = vmatprep.subr.bf16.mxu0 %v323
    %524 = vmatpush1.bf16.msra.mxu0 %v322
    %525 = vmatprep.subr.bf16.mxu0 %v335
    %526 = vmatpush1.bf16.msra.mxu0 %v334
    %527 = vmatprep.subr.bf16.mxu0 0
    %528 = vmatpush1.bf16.msra.mxu0 0
    %529 = vmatprep.subr.bf16.mxu0 0
    %530 = vmatpush1.bf16.msra.mxu0 0
    %531 = vmatprep.subr.bf16.mxu0 0
    %532 = vmatpush1.bf16.msra.mxu0 0
    %533 = vmatprep.subr.bf16.mxu0 0
    %534 = vmatpush1.bf16.msra.mxu0 0
    %535 = vmatprep.subr.bf16.mxu0 0
    %536 = vmatpush1.bf16.msra.mxu0 0
    %537 = vmatprep.subr.bf16.mxu0 0
    %538 = vmatpush1.bf16.msra.mxu0 0
    %539 = vmatprep.subr.bf16.mxu0 0
    %540 = vmatpush1.bf16.msra.mxu0 0
    %541 = vmatprep.subr.bf16.mxu0 0
    %542 = vmatpush1.bf16.msra.mxu0 0
    %543 = vmatprep.subr.bf16.mxu0 0
    %544 = vmatpush1.bf16.msra.mxu0 0
    %545 = vmatprep.subr.bf16.mxu0 0
    %546 = vmatpush1.bf16.msra.mxu0 0
    %547 = vmatprep.subr.bf16.mxu0 0
    %548 = vmatpush1.bf16.msra.mxu0 0
    %549 = vmatprep.subr.bf16.mxu0 0
    %550 = vmatpush1.bf16.msra.mxu0 0
    %551 = vmatprep.mubr.bf16.mxu0 0
    %552 = vmatmul.mubr.bf16.gmra.mrb[0].mxu0 %v390
    %v553 = vpop.f32.mrb[0].mxu0
    %v554 = vadd.f32 0.0, %v553
    %v555 = vpop.f32.mrb[0].mxu0
    %v556 = vadd.f32 0.0, %v555
    %v557 = vpop.f32.mrb[0].mxu0
    %v558 = vadd.f32 0.0, %v557
    %v559 = vpop.f32.mrb[0].mxu0
    %v560 = vadd.f32 0.0, %v559
    %561 = vdwg.mxu0
    %562 = vmatprep.subr.bf16.mxu0 %v301
    %563 = vmatpush1.bf16.msra.mxu0 %v300
    %564 = vmatprep.subr.bf16.mxu0 %v313
    %565 = vmatpush1.bf16.msra.mxu0 %v312
    %566 = vmatprep.subr.bf16.mxu0 %v325
    %567 = vmatpush1.bf16.msra.mxu0 %v324
    %568 = vmatprep.subr.bf16.mxu0 %v337
    %569 = vmatpush1.bf16.msra.mxu0 %v336
    %570 = vmatprep.subr.bf16.mxu0 0
    %571 = vmatpush1.bf16.msra.mxu0 0
    %572 = vmatprep.subr.bf16.mxu0 0
    %573 = vmatpush1.bf16.msra.mxu0 0
    %574 = vmatprep.subr.bf16.mxu0 0
    %575 = vmatpush1.bf16.msra.mxu0 0
    %576 = vmatprep.subr.bf16.mxu0 0
    %577 = vmatpush1.bf16.msra.mxu0 0
    %578 = vmatprep.subr.bf16.mxu0 0
    %579 = vmatpush1.bf16.msra.mxu0 0
    %580 = vmatprep.subr.bf16.mxu0 0
    %581 = vmatpush1.bf16.msra.mxu0 0
    %582 = vmatprep.subr.bf16.mxu0 0
    %583 = vmatpush1.bf16.msra.mxu0 0
    %584 = vmatprep.subr.bf16.mxu0 0
    %585 = vmatpush1.bf16.msra.mxu0 0
    %586 = vmatprep.subr.bf16.mxu0 0
    %587 = vmatpush1.bf16.msra.mxu0 0
    %588 = vmatprep.subr.bf16.mxu0 0
    %589 = vmatpush1.bf16.msra.mxu0 0
    %590 = vmatprep.subr.bf16.mxu0 0
    %591 = vmatpush1.bf16.msra.mxu0 0
    %592 = vmatprep.subr.bf16.mxu0 0
    %593 = vmatpush1.bf16.msra.mxu0 0
    %594 = vmatprep.mubr.bf16.mxu0 0
    %595 = vmatmul.mubr.bf16.gmra.mrb[0].mxu0 %v390
    %v596 = vpop.f32.mrb[0].mxu0
    %v597 = vadd.f32 0.0, %v596
    %v598 = vpop.f32.mrb[0].mxu0
    %v599 = vadd.f32 0.0, %v598
    %v600 = vpop.f32.mrb[0].mxu0
    %v601 = vadd.f32 0.0, %v600
    %v602 = vpop.f32.mrb[0].mxu0
    %v603 = vadd.f32 0.0, %v602
    %604 = vdwg.mxu0
    %605 = vmatprep.subr.bf16.mxu0 %v303
    %606 = vmatpush1.bf16.msra.mxu0 %v302
    %607 = vmatprep.subr.bf16.mxu0 %v315
    %608 = vmatpush1.bf16.msra.mxu0 %v314
    %609 = vmatprep.subr.bf16.mxu0 %v327
    %610 = vmatpush1.bf16.msra.mxu0 %v326
    %611 = vmatprep.subr.bf16.mxu0 %v339
    %612 = vmatpush1.bf16.msra.mxu0 %v338
    %613 = vmatprep.subr.bf16.mxu0 0
    %614 = vmatpush1.bf16.msra.mxu0 0
    %615 = vmatprep.subr.bf16.mxu0 0
    %616 = vmatpush1.bf16.msra.mxu0 0
    %617 = vmatprep.subr.bf16.mxu0 0
    %618 = vmatpush1.bf16.msra.mxu0 0
    %619 = vmatprep.subr.bf16.mxu0 0
    %620 = vmatpush1.bf16.msra.mxu0 0
    %621 = vmatprep.subr.bf16.mxu0 0
    %622 = vmatpush1.bf16.msra.mxu0 0
    %623 = vmatprep.subr.bf16.mxu0 0
    %624 = vmatpush1.bf16.msra.mxu0 0
    %625 = vmatprep.subr.bf16.mxu0 0
    %626 = vmatpush1.bf16.msra.mxu0 0
    %627 = vmatprep.subr.bf16.mxu0 0
    %628 = vmatpush1.bf16.msra.mxu0 0
    %629 = vmatprep.subr.bf16.mxu0 0
    %630 = vmatpush1.bf16.msra.mxu0 0
    %631 = vmatprep.subr.bf16.mxu0 0
    %632 = vmatpush1.bf16.msra.mxu0 0
    %633 = vmatprep.subr.bf16.mxu0 0
    %634 = vmatpush1.bf16.msra.mxu0 0
    %635 = vmatprep.subr.bf16.mxu0 0
    %636 = vmatpush1.bf16.msra.mxu0 0
    %637 = vmatprep.mubr.bf16.mxu0 0
    %638 = vmatmul.mubr.bf16.gmra.mrb[0].mxu0 %v390
    %v639 = vpop.f32.mrb[0].mxu0
    %v640 = vadd.f32 0.0, %v639
    %v641 = vpop.f32.mrb[0].mxu0
    %v642 = vadd.f32 0.0, %v641
    %v643 = vpop.f32.mrb[0].mxu0
    %v644 = vadd.f32 0.0, %v643
    %v645 = vpop.f32.mrb[0].mxu0
    %v646 = vadd.f32 0.0, %v645
    %647 = vdwg.mxu0
    %v648 = vld [vmem:[%s5] sm:$0xf]
    %v650 = vlaneseq
    %v651 = vshrl.u32 %v650, 7
    %v652 = vsub.s32 0, %v651
    %v653 = vrot.slane %v648, %v652
    %v654 = vlaneseq
    %v655 = vshrl.u32 %v654, 7
    %v656 = vsub.s32 1, %v655
    %v657 = vrot.slane %v648, %v656
    %v658 = vlaneseq
    %v659 = vshrl.u32 %v658, 7
    %v660 = vsub.s32 2, %v659
    %v661 = vrot.slane %v648, %v660
    %v662 = vlaneseq
    %v663 = vshrl.u32 %v662, 7
    %v664 = vsub.s32 3, %v663
    %v665 = vrot.slane %v648, %v664
    %v670 = vadd.f32 %v427, %v653
    %v671 = vadd.f32 %v468, %v661
    %v672 = vadd.f32 %v470, %v665
    %v673 = vadd.f32 %v430, %v653
    %v674 = vadd.f32 %v472, %v661
    %v675 = vadd.f32 %v474, %v665
    %v676 = vxor.u32 %v670, 2147483648
    %v677 = vxor.u32 %v673, 2147483648
    %v678 = vmul.f32 %v676, 1.442695
    %v679 = vpow.pop %v678
    %v680 = vmul.f32 %v677, 1.442695
    %v681 = vpow.pop %v680
    %v682 = vadd.f32 %v679, 1.0
    %v683 = vadd.f32 %v681, 1.0
    %v684 = vrcp.pop %v682
    %v685 = vmul.f32 1.0, %v684
    %v686 = vrcp.pop %v683
    %v687 = vmul.f32 1.0, %v686
    %v688 = vtanh.pop %v671
    %v689 = vtanh.pop %v674
    %v690 = vxor.u32 %v672, 2147483648
    %v691 = vxor.u32 %v675, 2147483648
    %v692 = vmul.f32 %v690, 1.442695
    %v693 = vpow.pop %v692
    %v694 = vmul.f32 %v691, 1.442695
    %v695 = vpow.pop %v694
    %v696 = vadd.f32 %v693, 1.0
    %v697 = vadd.f32 %v695, 1.0
    %v698 = vrcp.pop %v696
    %v699 = vmul.f32 1.0, %v698
    %v700 = vrcp.pop %v697
    %v701 = vmul.f32 1.0, %v700
    %v702 = vmul.f32 %v685, %v688
    %v703 = vmul.f32 %v687, %v689
    %v704 = vtanh.pop %v702
    %v705 = vtanh.pop %v703
    %v706 = vmul.f32 %v699, %v704
    %v707 = vmul.f32 %v701, %v705
    %v708 = vld [vmem:[#allocation8] sm:$0xff]
    %v709 = vld [vmem:[#allocation8 + $0x8] sm:$0xff]
    %v710 = vld [vmem:[#allocation8 + $0x14] sm:$0xff]
    %v711 = vld [vmem:[#allocation8 + $0x1c] sm:$0xff]
    %v712 = vld [vmem:[#allocation8 + $0x28] sm:$0xff]
    %v713 = vld [vmem:[#allocation8 + $0x30] sm:$0xff]
    %v714 = vld [vmem:[#allocation8 + $0x3c] sm:$0xff]
    %v715 = vld [vmem:[#allocation8 + $0x44] sm:$0xff]
    %v716 = vld [vmem:[#allocation8 + $0x50] sm:$0xff]
    %v717 = vld [vmem:[#allocation8 + $0x58] sm:$0xff]
    %v718 = vld [vmem:[#allocation8 + $0x64] sm:$0xff]
    %v719 = vld [vmem:[#allocation8 + $0x6c] sm:$0xff]
    %v720 = vld [vmem:[#allocation8 + $0x78] sm:$0xff]
    %v721 = vld [vmem:[#allocation8 + $0x80] sm:$0xff]
    %v722 = vld [vmem:[#allocation8 + $0x8c] sm:$0xff]
    %v723 = vld [vmem:[#allocation8 + $0x94] sm:$0xff]
    %v724 = vld [vmem:[#allocation8 + $0xa0] sm:$0xff]
    %v725 = vld [vmem:[#allocation8 + $0xa8] sm:$0xff]
    %v726 = vld [vmem:[#allocation8 + $0xb4] sm:$0xff]
    %v727 = vld [vmem:[#allocation8 + $0xbc] sm:$0xff]
    %v728 = vld [vmem:[#allocation8 + $0xc8] sm:$0xff]
    %v729 = vld [vmem:[#allocation8 + $0xd0] sm:$0xff]
    %v730 = vld [vmem:[#allocation8 + $0xdc] sm:$0xff]
    %v731 = vld [vmem:[#allocation8 + $0xe4] sm:$0xff]
    %v732 = vld [vmem:[#allocation8 + $0xf0] sm:$0xff]
    %v733 = vld [vmem:[#allocation8 + $0xf8] sm:$0xff]
    %v734 = vld [vmem:[#allocation8 + $0x104] sm:$0xff]
    %v735 = vld [vmem:[#allocation8 + $0x10c] sm:$0xff]
    %v736 = vld [vmem:[#allocation8 + $0x118] sm:$0xff]
    %v737 = vld [vmem:[#allocation8 + $0x120] sm:$0xff]
    %v738 = vld [vmem:[#allocation8 + $0x12c] sm:$0xff]
    %v739 = vld [vmem:[#allocation8 + $0x134] sm:$0xff]
    %v740 = vpack.c.bf16 %v707, %v706
    %v741 = vld [vmem:[%s5 + $0x4] sm:$0xf]
    %v743 = vlaneseq
    %v744 = vshrl.u32 %v743, 7
    %v745 = vsub.s32 0, %v744
    %v746 = vrot.slane %v741, %v745
    %v747 = vlaneseq
    %v748 = vshrl.u32 %v747, 7
    %v749 = vsub.s32 1, %v748
    %v750 = vrot.slane %v741, %v749
    %v751 = vlaneseq
    %v752 = vshrl.u32 %v751, 7
    %v753 = vsub.s32 2, %v752
    %v754 = vrot.slane %v741, %v753
    %v755 = vlaneseq
    %v756 = vshrl.u32 %v755, 7
    %v757 = vsub.s32 3, %v756
    %v758 = vrot.slane %v741, %v757
    %v795 = vunpack.c.l.b16 %v708
    %v796 = vunpack.c.h.b16 %v708
    %v797 = vunpack.c.l.b16 %v709
    %v798 = vunpack.c.h.b16 %v709
    %v799 = vunpack.c.l.b16 %v710
    %v800 = vunpack.c.h.b16 %v710
    %v801 = vunpack.c.l.b16 %v711
    %v802 = vunpack.c.h.b16 %v711
    %v803 = vunpack.c.l.b16 %v712
    %v804 = vunpack.c.h.b16 %v712
    %v805 = vunpack.c.l.b16 %v713
    %v806 = vunpack.c.h.b16 %v713
    %v807 = vunpack.c.l.b16 %v714
    %v808 = vunpack.c.h.b16 %v714
    %v809 = vunpack.c.l.b16 %v715
    %v810 = vunpack.c.h.b16 %v715
    %v811 = vunpack.c.l.b16 %v716
    %v812 = vunpack.c.h.b16 %v716
    %v813 = vunpack.c.l.b16 %v717
    %v814 = vunpack.c.h.b16 %v717
    %v815 = vunpack.c.l.b16 %v718
    %v816 = vunpack.c.h.b16 %v718
    %v817 = vunpack.c.l.b16 %v719
    %v818 = vunpack.c.h.b16 %v719
    %v819 = vunpack.c.l.b16 %v720
    %v820 = vunpack.c.h.b16 %v720
    %v821 = vunpack.c.l.b16 %v721
    %v822 = vunpack.c.h.b16 %v721
    %v823 = vunpack.c.l.b16 %v722
    %v824 = vunpack.c.h.b16 %v722
    %v825 = vunpack.c.l.b16 %v723
    %v826 = vunpack.c.h.b16 %v723
    %v827 = vunpack.c.l.b16 %v724
    %v828 = vunpack.c.h.b16 %v724
    %v829 = vunpack.c.l.b16 %v725
    %v830 = vunpack.c.h.b16 %v725
    %v831 = vunpack.c.l.b16 %v726
    %v832 = vunpack.c.h.b16 %v726
    %v833 = vunpack.c.l.b16 %v727
    %v834 = vunpack.c.h.b16 %v727
    %v835 = vunpack.c.l.b16 %v728
    %v836 = vunpack.c.h.b16 %v728
    %v837 = vunpack.c.l.b16 %v729
    %v838 = vunpack.c.h.b16 %v729
    %v839 = vunpack.c.l.b16 %v730
    %v840 = vunpack.c.h.b16 %v730
    %v841 = vunpack.c.l.b16 %v731
    %v842 = vunpack.c.h.b16 %v731
    %v843 = vunpack.c.l.b16 %v732
    %v844 = vunpack.c.h.b16 %v732
    %v845 = vunpack.c.l.b16 %v733
    %v846 = vunpack.c.h.b16 %v733
    %v847 = vunpack.c.l.b16 %v734
    %v848 = vunpack.c.h.b16 %v734
    %v849 = vunpack.c.l.b16 %v735
    %v850 = vunpack.c.h.b16 %v735
    %v851 = vunpack.c.l.b16 %v736
    %v852 = vunpack.c.h.b16 %v736
    %v853 = vunpack.c.l.b16 %v737
    %v854 = vunpack.c.h.b16 %v737
    %v855 = vunpack.c.l.b16 %v738
    %v856 = vunpack.c.h.b16 %v738
    %v857 = vunpack.c.l.b16 %v739
    %v858 = vunpack.c.h.b16 %v739
    %v859 = vpack.c.b16 %v799, %v795
    %v860 = vpack.c.b16 %v800, %v796
    %v861 = vpack.c.b16 %v801, %v797
    %v862 = vpack.c.b16 %v802, %v798
    %v863 = vpack.c.b16 %v807, %v803
    %v864 = vpack.c.b16 %v808, %v804
    %v865 = vpack.c.b16 %v809, %v805
    %v866 = vpack.c.b16 %v810, %v806
    %v867 = vpack.c.b16 %v815, %v811
    %v868 = vpack.c.b16 %v816, %v812
    %v869 = vpack.c.b16 %v817, %v813
    %v870 = vpack.c.b16 %v818, %v814
    %v871 = vpack.c.b16 %v823, %v819
    %v872 = vpack.c.b16 %v824, %v820
    %v873 = vpack.c.b16 %v825, %v821
    %v874 = vpack.c.b16 %v826, %v822
    %v875 = vpack.c.b16 %v831, %v827
    %v876 = vpack.c.b16 %v832, %v828
    %v877 = vpack.c.b16 %v833, %v829
    %v878 = vpack.c.b16 %v834, %v830
    %v879 = vpack.c.b16 %v839, %v835
    %v880 = vpack.c.b16 %v840, %v836
    %v881 = vpack.c.b16 %v841, %v837
    %v882 = vpack.c.b16 %v842, %v838
    %v883 = vpack.c.b16 %v847, %v843
    %v884 = vpack.c.b16 %v848, %v844
    %v885 = vpack.c.b16 %v849, %v845
    %v886 = vpack.c.b16 %v850, %v846
    %v887 = vpack.c.b16 %v855, %v851
    %v888 = vpack.c.b16 %v856, %v852
    %v889 = vpack.c.b16 %v857, %v853
    %v890 = vpack.c.b16 %v858, %v854
    %923 = vmatprep.subr.bf16.mxu0 %v860
    %924 = vmatpush1.bf16.msra.mxu0 %v859
    %925 = vmatprep.subr.bf16.mxu0 %v864
    %926 = vmatpush1.bf16.msra.mxu0 %v863
    %927 = vmatprep.subr.bf16.mxu0 %v868
    %928 = vmatpush1.bf16.msra.mxu0 %v867
    %929 = vmatprep.subr.bf16.mxu0 %v872
    %930 = vmatpush1.bf16.msra.mxu0 %v871
    %931 = vmatprep.subr.bf16.mxu0 %v876
    %932 = vmatpush1.bf16.msra.mxu0 %v875
    %933 = vmatprep.subr.bf16.mxu0 %v880
    %934 = vmatpush1.bf16.msra.mxu0 %v879
    %935 = vmatprep.subr.bf16.mxu0 %v884
    %936 = vmatpush1.bf16.msra.mxu0 %v883
    %937 = vmatprep.subr.bf16.mxu0 %v888
    %938 = vmatpush1.bf16.msra.mxu0 %v887
    %939 = vmatprep.subr.bf16.mxu0 0
    %940 = vmatpush1.bf16.msra.mxu0 0
    %941 = vmatprep.subr.bf16.mxu0 0
    %942 = vmatpush1.bf16.msra.mxu0 0
    %943 = vmatprep.subr.bf16.mxu0 0
    %944 = vmatpush1.bf16.msra.mxu0 0
    %945 = vmatprep.subr.bf16.mxu0 0
    %946 = vmatpush1.bf16.msra.mxu0 0
    %947 = vmatprep.subr.bf16.mxu0 0
    %948 = vmatpush1.bf16.msra.mxu0 0
    %949 = vmatprep.subr.bf16.mxu0 0
    %950 = vmatpush1.bf16.msra.mxu0 0
    %951 = vmatprep.subr.bf16.mxu0 0
    %952 = vmatpush1.bf16.msra.mxu0 0
    %953 = vmatprep.subr.bf16.mxu0 0
    %954 = vmatpush1.bf16.msra.mxu0 0
    %955 = vmatprep.mubr.bf16.mxu0 0
    %956 = vmatmul.mubr.bf16.gmra.mrb[0].mxu0 %v740
    %v957 = vpop.f32.mrb[0].mxu0
    %v958 = vadd.f32 %v746, %v957
    %v959 = vpop.f32.mrb[0].mxu0
    %v960 = vpop.f32.mrb[0].mxu0
    %v961 = vadd.f32 %v746, %v960
    %v962 = vpop.f32.mrb[0].mxu0
    %963 = vdwg.mxu0
    %964 = vmatprep.subr.bf16.mxu0 %v862
    %965 = vmatpush1.bf16.msra.mxu0 %v861
    %966 = vmatprep.subr.bf16.mxu0 %v866
    %967 = vmatpush1.bf16.msra.mxu0 %v865
    %968 = vmatprep.subr.bf16.mxu0 %v870
    %969 = vmatpush1.bf16.msra.mxu0 %v869
    %970 = vmatprep.subr.bf16.mxu0 %v874
    %971 = vmatpush1.bf16.msra.mxu0 %v873
    %972 = vmatprep.subr.bf16.mxu0 %v878
    %973 = vmatpush1.bf16.msra.mxu0 %v877
    %974 = vmatprep.subr.bf16.mxu0 %v882
    %975 = vmatpush1.bf16.msra.mxu0 %v881
    %976 = vmatprep.subr.bf16.mxu0 %v886
    %977 = vmatpush1.bf16.msra.mxu0 %v885
    %978 = vmatprep.subr.bf16.mxu0 %v890
    %979 = vmatpush1.bf16.msra.mxu0 %v889
    %980 = vmatprep.subr.bf16.mxu0 0
    %981 = vmatpush1.bf16.msra.mxu0 0
    %982 = vmatprep.subr.bf16.mxu0 0
    %983 = vmatpush1.bf16.msra.mxu0 0
    %984 = vmatprep.subr.bf16.mxu0 0
    %985 = vmatpush1.bf16.msra.mxu0 0
    %986 = vmatprep.subr.bf16.mxu0 0
    %987 = vmatpush1.bf16.msra.mxu0 0
    %988 = vmatprep.subr.bf16.mxu0 0
    %989 = vmatpush1.bf16.msra.mxu0 0
    %990 = vmatprep.subr.bf16.mxu0 0
    %991 = vmatpush1.bf16.msra.mxu0 0
    %992 = vmatprep.subr.bf16.mxu0 0
    %993 = vmatpush1.bf16.msra.mxu0 0
    %994 = vmatprep.subr.bf16.mxu0 0
    %995 = vmatpush1.bf16.msra.mxu0 0
    %996 = vmatprep.mubr.bf16.mxu0 0
    %997 = vmatmul.mubr.bf16.gmra.mrb[0].mxu0 %v740
    %v998 = vpop.f32.mrb[0].mxu0
    %v999 = vadd.f32 %v754, %v998
    %v1000 = vpop.f32.mrb[0].mxu0
    %v1001 = vadd.f32 %v758, %v1000
    %v1002 = vpop.f32.mrb[0].mxu0
    %v1003 = vadd.f32 %v754, %v1002
    %v1004 = vpop.f32.mrb[0].mxu0
    %v1005 = vadd.f32 %v758, %v1004
    %1006 = vdwg.mxu0
    %v1007 = vxor.u32 %v958, 2147483648
    %v1008 = vxor.u32 %v961, 2147483648
    %v1009 = vmul.f32 %v1007, 1.442695
    %v1010 = vpow.pop %v1009
    %v1011 = vmul.f32 %v1008, 1.442695
    %v1012 = vpow.pop %v1011
    %v1013 = vadd.f32 %v1010, 1.0
    %v1014 = vadd.f32 %v1012, 1.0
    %v1015 = vrcp.pop %v1013
    %v1016 = vmul.f32 1.0, %v1015
    %v1017 = vrcp.pop %v1014
    %v1018 = vmul.f32 1.0, %v1017
    %v1019 = vtanh.pop %v999
    %v1020 = vtanh.pop %v1003
    %v1021 = vxor.u32 %v1001, 2147483648
    %v1022 = vxor.u32 %v1005, 2147483648
    %v1023 = vmul.f32 %v1021, 1.442695
    %v1024 = vpow.pop %v1023
    %v1025 = vmul.f32 %v1022, 1.442695
    %v1026 = vpow.pop %v1025
    %v1027 = vadd.f32 %v1024, 1.0
    %v1028 = vadd.f32 %v1026, 1.0
    %v1029 = vrcp.pop %v1027
    %v1030 = vmul.f32 1.0, %v1029
    %v1031 = vrcp.pop %v1028
    %v1032 = vmul.f32 1.0, %v1031
    %v1033 = vmul.f32 %v1016, %v1019
    %v1034 = vmul.f32 %v1018, %v1020
    %v1035 = vtanh.pop %v1033
    %v1036 = vtanh.pop %v1034
    %v1037 = vmul.f32 %v1030, %v1035
    %v1038 = vmul.f32 %v1032, %v1036
    %v1039 = vmax.f32 %v1037, 0.0
    %v1040 = vmax.f32 %v1038, 0.0
    %v1041 = vld [vmem:[#allocation10] sm:$0xff]
    %v1042 = vld [vmem:[#allocation10 + $0x8] sm:$0xf]
    %v1043 = vld [vmem:[#allocation10 + $0xc] sm:$0xff]
    %v1044 = vld [vmem:[#allocation10 + $0x14] sm:$0xf]
    %v1045 = vld [vmem:[#allocation10 + $0x18] sm:$0xff]
    %v1046 = vld [vmem:[#allocation10 + $0x20] sm:$0xf]
    %v1047 = vld [vmem:[#allocation10 + $0x24] sm:$0xff]
    %v1048 = vld [vmem:[#allocation10 + $0x2c] sm:$0xf]
    %v1049 = vld [vmem:[#allocation10 + $0x30] sm:$0xff]
    %v1050 = vld [vmem:[#allocation10 + $0x38] sm:$0xf]
    %v1051 = vld [vmem:[#allocation10 + $0x3c] sm:$0xff]
    %v1052 = vld [vmem:[#allocation10 + $0x44] sm:$0xf]
    %v1053 = vld [vmem:[#allocation10 + $0x48] sm:$0xff]
    %v1054 = vld [vmem:[#allocation10 + $0x50] sm:$0xf]
    %v1055 = vld [vmem:[#allocation10 + $0x54] sm:$0xff]
    %v1056 = vld [vmem:[#allocation10 + $0x5c] sm:$0xf]
    %v1057 = vld [vmem:[#allocation10 + $0x60] sm:$0xff]
    %v1058 = vld [vmem:[#allocation10 + $0x68] sm:$0xf]
    %v1059 = vld [vmem:[#allocation10 + $0x6c] sm:$0xff]
    %v1060 = vld [vmem:[#allocation10 + $0x74] sm:$0xf]
    %v1061 = vld [vmem:[#allocation10 + $0x78] sm:$0xff]
    %v1062 = vld [vmem:[#allocation10 + $0x80] sm:$0xf]
    %v1063 = vld [vmem:[#allocation10 + $0x84] sm:$0xff]
    %v1064 = vld [vmem:[#allocation10 + $0x8c] sm:$0xf]
    %v1065 = vld [vmem:[#allocation10 + $0x90] sm:$0xff]
    %v1066 = vld [vmem:[#allocation10 + $0x98] sm:$0xf]
    %v1067 = vld [vmem:[#allocation10 + $0x9c] sm:$0xff]
    %v1068 = vld [vmem:[#allocation10 + $0xa4] sm:$0xf]
    %v1069 = vld [vmem:[#allocation10 + $0xa8] sm:$0xff]
    %v1070 = vld [vmem:[#allocation10 + $0xb0] sm:$0xf]
    %v1071 = vld [vmem:[#allocation10 + $0xb4] sm:$0xff]
    %v1072 = vld [vmem:[#allocation10 + $0xbc] sm:$0xf]
    %v1073 = vpack.c.bf16 %v1040, %v1039
    %v1074 = vadd.f32 %v511, %v653
    %v1075 = vadd.f32 %v513, %v657
    %v1076 = vadd.f32 %v554, %v661
    %v1077 = vadd.f32 %v556, %v665
    %v1078 = vadd.f32 %v515, %v653
    %v1079 = vadd.f32 %v517, %v657
    %v1080 = vadd.f32 %v558, %v661
    %v1081 = vadd.f32 %v560, %v665
    %v1082 = vld [vmem:[#allocation7] sm:$0xff]
    %v1083 = vld [vmem:[#allocation7 + $0x8] sm:$0xff]
    %v1084 = vld [vmem:[#allocation7 + $0x18] sm:$0xff]
    %v1085 = vld [vmem:[#allocation7 + $0x20] sm:$0xff]
    %v1086 = vld [vmem:[#allocation7 + $0x30] sm:$0xff]
    %v1087 = vld [vmem:[#allocation7 + $0x38] sm:$0xff]
    %v1088 = vld [vmem:[#allocation7 + $0x48] sm:$0xff]
    %v1089 = vld [vmem:[#allocation7 + $0x50] sm:$0xff]
    %v1090 = vld [vmem:[#allocation7 + $0x60] sm:$0xff]
    %v1091 = vld [vmem:[#allocation7 + $0x68] sm:$0xff]
    %v1092 = vld [vmem:[#allocation7 + $0x78] sm:$0xff]
    %v1093 = vld [vmem:[#allocation7 + $0x80] sm:$0xff]
    %v1094 = vld [vmem:[#allocation7 + $0x90] sm:$0xff]
    %v1095 = vld [vmem:[#allocation7 + $0x98] sm:$0xff]
    %v1096 = vld [vmem:[#allocation7 + $0xa8] sm:$0xff]
    %v1097 = vld [vmem:[#allocation7 + $0xb0] sm:$0xff]
    %v1098 = vld [vmem:[#allocation7 + $0xc0] sm:$0xff]
    %v1099 = vld [vmem:[#allocation7 + $0xc8] sm:$0xff]
    %v1100 = vld [vmem:[#allocation7 + $0xd8] sm:$0xff]
    %v1101 = vld [vmem:[#allocation7 + $0xe0] sm:$0xff]
    %v1102 = vld [vmem:[#allocation7 + $0xf0] sm:$0xff]
    %v1103 = vld [vmem:[#allocation7 + $0xf8] sm:$0xff]
    %v1104 = vld [vmem:[#allocation7 + $0x108] sm:$0xff]
    %v1105 = vld [vmem:[#allocation7 + $0x110] sm:$0xff]
    %v1106 = vld [vmem:[#allocation7 + $0x120] sm:$0xff]
    %v1107 = vld [vmem:[#allocation7 + $0x128] sm:$0xff]
    %v1108 = vld [vmem:[#allocation7 + $0x138] sm:$0xff]
    %v1109 = vld [vmem:[#allocation7 + $0x140] sm:$0xff]
    %v1110 = vld [vmem:[#allocation7 + $0x150] sm:$0xff]
    %v1111 = vld [vmem:[#allocation7 + $0x158] sm:$0xff]
    %v1112 = vld [vmem:[#allocation7 + $0x168] sm:$0xff]
    %v1113 = vld [vmem:[#allocation7 + $0x170] sm:$0xff]
    %v1146 = vunpack.c.l.b16 %v1082
    %v1147 = vunpack.c.h.b16 %v1082
    %v1148 = vunpack.c.l.b16 %v1083
    %v1149 = vunpack.c.h.b16 %v1083
    %v1150 = vunpack.c.l.b16 %v1084
    %v1151 = vunpack.c.h.b16 %v1084
    %v1152 = vunpack.c.l.b16 %v1085
    %v1153 = vunpack.c.h.b16 %v1085
    %v1154 = vunpack.c.l.b16 %v1086
    %v1155 = vunpack.c.h.b16 %v1086
    %v1156 = vunpack.c.l.b16 %v1087
    %v1157 = vunpack.c.h.b16 %v1087
    %v1158 = vunpack.c.l.b16 %v1088
    %v1159 = vunpack.c.h.b16 %v1088
    %v1160 = vunpack.c.l.b16 %v1089
    %v1161 = vunpack.c.h.b16 %v1089
    %v1162 = vunpack.c.l.b16 %v1090
    %v1163 = vunpack.c.h.b16 %v1090
    %v1164 = vunpack.c.l.b16 %v1091
    %v1165 = vunpack.c.h.b16 %v1091
    %v1166 = vunpack.c.l.b16 %v1092
    %v1167 = vunpack.c.h.b16 %v1092
    %v1168 = vunpack.c.l.b16 %v1093
    %v1169 = vunpack.c.h.b16 %v1093
    %v1170 = vunpack.c.l.b16 %v1094
    %v1171 = vunpack.c.h.b16 %v1094
    %v1172 = vunpack.c.l.b16 %v1095
    %v1173 = vunpack.c.h.b16 %v1095
    %v1174 = vunpack.c.l.b16 %v1096
    %v1175 = vunpack.c.h.b16 %v1096
    %v1176 = vunpack.c.l.b16 %v1097
    %v1177 = vunpack.c.h.b16 %v1097
    %v1178 = vunpack.c.l.b16 %v1098
    %v1179 = vunpack.c.h.b16 %v1098
    %v1180 = vunpack.c.l.b16 %v1099
    %v1181 = vunpack.c.h.b16 %v1099
    %v1182 = vunpack.c.l.b16 %v1100
    %v1183 = vunpack.c.h.b16 %v1100
    %v1184 = vunpack.c.l.b16 %v1101
    %v1185 = vunpack.c.h.b16 %v1101
    %v1186 = vunpack.c.l.b16 %v1102
    %v1187 = vunpack.c.h.b16 %v1102
    %v1188 = vunpack.c.l.b16 %v1103
    %v1189 = vunpack.c.h.b16 %v1103
    %v1190 = vunpack.c.l.b16 %v1104
    %v1191 = vunpack.c.h.b16 %v1104
    %v1192 = vunpack.c.l.b16 %v1105
    %v1193 = vunpack.c.h.b16 %v1105
    %v1194 = vunpack.c.l.b16 %v1106
    %v1195 = vunpack.c.h.b16 %v1106
    %v1196 = vunpack.c.l.b16 %v1107
    %v1197 = vunpack.c.h.b16 %v1107
    %v1198 = vunpack.c.l.b16 %v1108
    %v1199 = vunpack.c.h.b16 %v1108
    %v1200 = vunpack.c.l.b16 %v1109
    %v1201 = vunpack.c.h.b16 %v1109
    %v1202 = vunpack.c.l.b16 %v1110
    %v1203 = vunpack.c.h.b16 %v1110
    %v1204 = vunpack.c.l.b16 %v1111
    %v1205 = vunpack.c.h.b16 %v1111
    %v1206 = vunpack.c.l.b16 %v1112
    %v1207 = vunpack.c.h.b16 %v1112
    %v1208 = vunpack.c.l.b16 %v1113
    %v1209 = vunpack.c.h.b16 %v1113
    %v1210 = vpack.c.b16 %v1150, %v1146
    %v1211 = vpack.c.b16 %v1151, %v1147
    %v1212 = vpack.c.b16 %v1152, %v1148
    %v1213 = vpack.c.b16 %v1153, %v1149
    %v1214 = vpack.c.b16 %v1158, %v1154
    %v1215 = vpack.c.b16 %v1159, %v1155
    %v1216 = vpack.c.b16 %v1160, %v1156
    %v1217 = vpack.c.b16 %v1161, %v1157
    %v1218 = vpack.c.b16 %v1166, %v1162
    %v1219 = vpack.c.b16 %v1167, %v1163
    %v1220 = vpack.c.b16 %v1168, %v1164
    %v1221 = vpack.c.b16 %v1169, %v1165
    %v1222 = vpack.c.b16 %v1174, %v1170
    %v1223 = vpack.c.b16 %v1175, %v1171
    %v1224 = vpack.c.b16 %v1176, %v1172
    %v1225 = vpack.c.b16 %v1177, %v1173
    %v1226 = vpack.c.b16 %v1182, %v1178
    %v1227 = vpack.c.b16 %v1183, %v1179
    %v1228 = vpack.c.b16 %v1184, %v1180
    %v1229 = vpack.c.b16 %v1185, %v1181
    %v1230 = vpack.c.b16 %v1190, %v1186
    %v1231 = vpack.c.b16 %v1191, %v1187
    %v1232 = vpack.c.b16 %v1192, %v1188
    %v1233 = vpack.c.b16 %v1193, %v1189
    %v1234 = vpack.c.b16 %v1198, %v1194
    %v1235 = vpack.c.b16 %v1199, %v1195
    %v1236 = vpack.c.b16 %v1200, %v1196
    %v1237 = vpack.c.b16 %v1201, %v1197
    %v1238 = vpack.c.b16 %v1206, %v1202
    %v1239 = vpack.c.b16 %v1207, %v1203
    %v1240 = vpack.c.b16 %v1208, %v1204
    %v1241 = vpack.c.b16 %v1209, %v1205
    %1274 = vmatprep.subr.bf16.mxu0 %v1211
    %1275 = vmatpush1.bf16.msra.mxu0 %v1210
    %1276 = vmatprep.subr.bf16.mxu0 %v1215
    %1277 = vmatpush1.bf16.msra.mxu0 %v1214
    %1278 = vmatprep.subr.bf16.mxu0 %v1219
    %1279 = vmatpush1.bf16.msra.mxu0 %v1218
    %1280 = vmatprep.subr.bf16.mxu0 %v1223
    %1281 = vmatpush1.bf16.msra.mxu0 %v1222
    %1282 = vmatprep.subr.bf16.mxu0 %v1227
    %1283 = vmatpush1.bf16.msra.mxu0 %v1226
    %1284 = vmatprep.subr.bf16.mxu0 %v1231
    %1285 = vmatpush1.bf16.msra.mxu0 %v1230
    %1286 = vmatprep.subr.bf16.mxu0 %v1235
    %1287 = vmatpush1.bf16.msra.mxu0 %v1234
    %1288 = vmatprep.subr.bf16.mxu0 %v1239
    %1289 = vmatpush1.bf16.msra.mxu0 %v1238
    %1290 = vmatprep.subr.bf16.mxu0 0
    %1291 = vmatpush1.bf16.msra.mxu0 0
    %1292 = vmatprep.subr.bf16.mxu0 0
    %1293 = vmatpush1.bf16.msra.mxu0 0
    %1294 = vmatprep.subr.bf16.mxu0 0
    %1295 = vmatpush1.bf16.msra.mxu0 0
    %1296 = vmatprep.subr.bf16.mxu0 0
    %1297 = vmatpush1.bf16.msra.mxu0 0
    %1298 = vmatprep.subr.bf16.mxu0 0
    %1299 = vmatpush1.bf16.msra.mxu0 0
    %1300 = vmatprep.subr.bf16.mxu0 0
    %1301 = vmatpush1.bf16.msra.mxu0 0
    %1302 = vmatprep.subr.bf16.mxu0 0
    %1303 = vmatpush1.bf16.msra.mxu0 0
    %1304 = vmatprep.subr.bf16.mxu0 0
    %1305 = vmatpush1.bf16.msra.mxu0 0
    %1306 = vmatprep.mubr.bf16.mxu0 0
    %1307 = vmatmul.mubr.bf16.gmra.mrb[0].mxu0 %v740
    %v1308 = vpop.f32.mrb[0].mxu0
    %v1309 = vadd.f32 %v1074, %v1308
    %v1310 = vpop.f32.mrb[0].mxu0
    %v1311 = vadd.f32 %v1075, %v1310
    %v1312 = vpop.f32.mrb[0].mxu0
    %v1313 = vadd.f32 %v1078, %v1312
    %v1314 = vpop.f32.mrb[0].mxu0
    %v1315 = vadd.f32 %v1079, %v1314
    %1316 = vdwg.mxu0
    %1317 = vmatprep.subr.bf16.mxu0 %v1213
    %1318 = vmatpush1.bf16.msra.mxu0 %v1212
    %1319 = vmatprep.subr.bf16.mxu0 %v1217
    %1320 = vmatpush1.bf16.msra.mxu0 %v1216
    %1321 = vmatprep.subr.bf16.mxu0 %v1221
    %1322 = vmatpush1.bf16.msra.mxu0 %v1220
    %1323 = vmatprep.subr.bf16.mxu0 %v1225
    %1324 = vmatpush1.bf16.msra.mxu0 %v1224
    %1325 = vmatprep.subr.bf16.mxu0 %v1229
    %1326 = vmatpush1.bf16.msra.mxu0 %v1228
    %1327 = vmatprep.subr.bf16.mxu0 %v1233
    %1328 = vmatpush1.bf16.msra.mxu0 %v1232
    %1329 = vmatprep.subr.bf16.mxu0 %v1237
    %1330 = vmatpush1.bf16.msra.mxu0 %v1236
    %1331 = vmatprep.subr.bf16.mxu0 %v1241
    %1332 = vmatpush1.bf16.msra.mxu0 %v1240
    %1333 = vmatprep.subr.bf16.mxu0 0
    %1334 = vmatpush1.bf16.msra.mxu0 0
    %1335 = vmatprep.subr.bf16.mxu0 0
    %1336 = vmatpush1.bf16.msra.mxu0 0
    %1337 = vmatprep.subr.bf16.mxu0 0
    %1338 = vmatpush1.bf16.msra.mxu0 0
    %1339 = vmatprep.subr.bf16.mxu0 0
    %1340 = vmatpush1.bf16.msra.mxu0 0
    %1341 = vmatprep.subr.bf16.mxu0 0
    %1342 = vmatpush1.bf16.msra.mxu0 0
    %1343 = vmatprep.subr.bf16.mxu0 0
    %1344 = vmatpush1.bf16.msra.mxu0 0
    %1345 = vmatprep.subr.bf16.mxu0 0
    %1346 = vmatpush1.bf16.msra.mxu0 0
    %1347 = vmatprep.subr.bf16.mxu0 0
    %1348 = vmatpush1.bf16.msra.mxu0 0
    %1349 = vmatprep.mubr.bf16.mxu0 0
    %1350 = vmatmul.mubr.bf16.gmra.mrb[0].mxu0 %v740
    %v1351 = vpop.f32.mrb[0].mxu0
    %v1352 = vadd.f32 %v1076, %v1351
    %v1353 = vpop.f32.mrb[0].mxu0
    %v1354 = vadd.f32 %v1077, %v1353
    %v1355 = vpop.f32.mrb[0].mxu0
    %v1356 = vadd.f32 %v1080, %v1355
    %v1357 = vpop.f32.mrb[0].mxu0
    %v1358 = vadd.f32 %v1081, %v1357
    %1359 = vdwg.mxu0
    %v1360 = vxor.u32 %v1309, 2147483648
    %v1361 = vxor.u32 %v1313, 2147483648
    %v1362 = vmul.f32 %v1360, 1.442695
    %v1363 = vpow.pop %v1362
    %v1364 = vmul.f32 %v1361, 1.442695
    %v1365 = vpow.pop %v1364
    %v1366 = vadd.f32 %v1363, 1.0
    %v1367 = vadd.f32 %v1365, 1.0
    %v1368 = vrcp.pop %v1366
    %v1369 = vmul.f32 1.0, %v1368
    %v1370 = vrcp.pop %v1367
    %v1371 = vmul.f32 1.0, %v1370
    %v1372 = vxor.u32 %v1311, 2147483648
    %v1373 = vxor.u32 %v1315, 2147483648
    %v1374 = vmul.f32 %v1372, 1.442695
    %v1375 = vpow.pop %v1374
    %v1376 = vmul.f32 %v1373, 1.442695
    %v1377 = vpow.pop %v1376
    %v1378 = vadd.f32 %v1375, 1.0
    %v1379 = vadd.f32 %v1377, 1.0
    %v1380 = vrcp.pop %v1378
    %v1381 = vmul.f32 1.0, %v1380
    %v1382 = vrcp.pop %v1379
    %v1383 = vmul.f32 1.0, %v1382
    %v1384 = vtanh.pop %v1352
    %v1385 = vtanh.pop %v1356
    %v1386 = vxor.u32 %v1354, 2147483648
    %v1387 = vxor.u32 %v1358, 2147483648
    %v1388 = vmul.f32 %v1386, 1.442695
    %v1389 = vpow.pop %v1388
    %v1390 = vmul.f32 %v1387, 1.442695
    %v1391 = vpow.pop %v1390
    %v1392 = vadd.f32 %v1389, 1.0
    %v1393 = vadd.f32 %v1391, 1.0
    %v1394 = vrcp.pop %v1392
    %v1395 = vmul.f32 1.0, %v1394
    %v1396 = vrcp.pop %v1393
    %v1397 = vmul.f32 1.0, %v1396
    %v1398 = vmul.f32 %v1381, %v702
    %v1399 = vmul.f32 %v1383, %v703
    %v1400 = vmul.f32 %v1369, %v1384
    %v1401 = vmul.f32 %v1371, %v1385
    %v1402 = vadd.f32 %v1398, %v1400
    %v1403 = vadd.f32 %v1399, %v1401
    %v1404 = vtanh.pop %v1402
    %v1405 = vtanh.pop %v1403
    %v1406 = vmul.f32 %v1395, %v1404
    %v1407 = vmul.f32 %v1397, %v1405
    %v1408 = vpack.c.bf16 %v1407, %v1406
    %v1409 = vld [vmem:[#allocation8 + $0x140] sm:$0xff]
    %v1410 = vld [vmem:[#allocation8 + $0x148] sm:$0xff]
    %v1411 = vld [vmem:[#allocation8 + $0x154] sm:$0xff]
    %v1412 = vld [vmem:[#allocation8 + $0x15c] sm:$0xff]
    %v1413 = vld [vmem:[#allocation8 + $0x168] sm:$0xff]
    %v1414 = vld [vmem:[#allocation8 + $0x170] sm:$0xff]
    %v1415 = vld [vmem:[#allocation8 + $0x17c] sm:$0xff]
    %v1416 = vld [vmem:[#allocation8 + $0x184] sm:$0xff]
    %v1417 = vld [vmem:[#allocation8 + $0x190] sm:$0xff]
    %v1418 = vld [vmem:[#allocation8 + $0x198] sm:$0xff]
    %v1419 = vld [vmem:[#allocation8 + $0x1a4] sm:$0xff]
    %v1420 = vld [vmem:[#allocation8 + $0x1ac] sm:$0xff]
    %v1421 = vld [vmem:[#allocation8 + $0x1b8] sm:$0xff]
    %v1422 = vld [vmem:[#allocation8 + $0x1c0] sm:$0xff]
    %v1423 = vld [vmem:[#allocation8 + $0x1cc] sm:$0xff]
    %v1424 = vld [vmem:[#allocation8 + $0x1d4] sm:$0xff]
    %v1425 = vld [vmem:[#allocation8 + $0x1e0] sm:$0xff]
    %v1426 = vld [vmem:[#allocation8 + $0x1e8] sm:$0xff]
    %v1427 = vld [vmem:[#allocation8 + $0x1f4] sm:$0xff]
    %v1428 = vld [vmem:[#allocation8 + $0x1fc] sm:$0xff]
    %v1429 = vld [vmem:[#allocation8 + $0x208] sm:$0xff]
    %v1430 = vld [vmem:[#allocation8 + $0x210] sm:$0xff]
    %v1431 = vld [vmem:[#allocation8 + $0x21c] sm:$0xff]
    %v1432 = vld [vmem:[#allocation8 + $0x224] sm:$0xff]
    %v1433 = vld [vmem:[#allocation8 + $0x230] sm:$0xff]
    %v1434 = vld [vmem:[#allocation8 + $0x238] sm:$0xff]
    %v1435 = vld [vmem:[#allocation8 + $0x244] sm:$0xff]
    %v1436 = vld [vmem:[#allocation8 + $0x24c] sm:$0xff]
    %v1437 = vld [vmem:[#allocation8 + $0x258] sm:$0xff]
    %v1438 = vld [vmem:[#allocation8 + $0x260] sm:$0xff]
    %v1439 = vld [vmem:[#allocation8 + $0x26c] sm:$0xff]
    %v1440 = vld [vmem:[#allocation8 + $0x274] sm:$0xff]
    %v1441 = vpack.c.bf16 %v1038, %v1037
    %v1474 = vunpack.c.l.b16 %v1409
    %v1475 = vunpack.c.h.b16 %v1409
    %v1476 = vunpack.c.l.b16 %v1410
    %v1477 = vunpack.c.h.b16 %v1410
    %v1478 = vunpack.c.l.b16 %v1411
    %v1479 = vunpack.c.h.b16 %v1411
    %v1480 = vunpack.c.l.b16 %v1412
    %v1481 = vunpack.c.h.b16 %v1412
    %v1482 = vunpack.c.l.b16 %v1413
    %v1483 = vunpack.c.h.b16 %v1413
    %v1484 = vunpack.c.l.b16 %v1414
    %v1485 = vunpack.c.h.b16 %v1414
    %v1486 = vunpack.c.l.b16 %v1415
    %v1487 = vunpack.c.h.b16 %v1415
    %v1488 = vunpack.c.l.b16 %v1416
    %v1489 = vunpack.c.h.b16 %v1416
    %v1490 = vunpack.c.l.b16 %v1417
    %v1491 = vunpack.c.h.b16 %v1417
    %v1492 = vunpack.c.l.b16 %v1418
    %v1493 = vunpack.c.h.b16 %v1418
    %v1494 = vunpack.c.l.b16 %v1419
    %v1495 = vunpack.c.h.b16 %v1419
    %v1496 = vunpack.c.l.b16 %v1420
    %v1497 = vunpack.c.h.b16 %v1420
    %v1498 = vunpack.c.l.b16 %v1421
    %v1499 = vunpack.c.h.b16 %v1421
    %v1500 = vunpack.c.l.b16 %v1422
    %v1501 = vunpack.c.h.b16 %v1422
    %v1502 = vunpack.c.l.b16 %v1423
    %v1503 = vunpack.c.h.b16 %v1423
    %v1504 = vunpack.c.l.b16 %v1424
    %v1505 = vunpack.c.h.b16 %v1424
    %v1506 = vunpack.c.l.b16 %v1425
    %v1507 = vunpack.c.h.b16 %v1425
    %v1508 = vunpack.c.l.b16 %v1426
    %v1509 = vunpack.c.h.b16 %v1426
    %v1510 = vunpack.c.l.b16 %v1427
    %v1511 = vunpack.c.h.b16 %v1427
    %v1512 = vunpack.c.l.b16 %v1428
    %v1513 = vunpack.c.h.b16 %v1428
    %v1514 = vunpack.c.l.b16 %v1429
    %v1515 = vunpack.c.h.b16 %v1429
    %v1516 = vunpack.c.l.b16 %v1430
    %v1517 = vunpack.c.h.b16 %v1430
    %v1518 = vunpack.c.l.b16 %v1431
    %v1519 = vunpack.c.h.b16 %v1431
    %v1520 = vunpack.c.l.b16 %v1432
    %v1521 = vunpack.c.h.b16 %v1432
    %v1522 = vunpack.c.l.b16 %v1433
    %v1523 = vunpack.c.h.b16 %v1433
    %v1524 = vunpack.c.l.b16 %v1434
    %v1525 = vunpack.c.h.b16 %v1434
    %v1526 = vunpack.c.l.b16 %v1435
    %v1527 = vunpack.c.h.b16 %v1435
    %v1528 = vunpack.c.l.b16 %v1436
    %v1529 = vunpack.c.h.b16 %v1436
    %v1530 = vunpack.c.l.b16 %v1437
    %v1531 = vunpack.c.h.b16 %v1437
    %v1532 = vunpack.c.l.b16 %v1438
    %v1533 = vunpack.c.h.b16 %v1438
    %v1534 = vunpack.c.l.b16 %v1439
    %v1535 = vunpack.c.h.b16 %v1439
    %v1536 = vunpack.c.l.b16 %v1440
    %v1537 = vunpack.c.h.b16 %v1440
    %v1538 = vpack.c.b16 %v1478, %v1474
    %v1539 = vpack.c.b16 %v1479, %v1475
    %v1540 = vpack.c.b16 %v1480, %v1476
    %v1541 = vpack.c.b16 %v1481, %v1477
    %v1542 = vpack.c.b16 %v1486, %v1482
    %v1543 = vpack.c.b16 %v1487, %v1483
    %v1544 = vpack.c.b16 %v1488, %v1484
    %v1545 = vpack.c.b16 %v1489, %v1485
    %v1546 = vpack.c.b16 %v1494, %v1490
    %v1547 = vpack.c.b16 %v1495, %v1491
    %v1548 = vpack.c.b16 %v1496, %v1492
    %v1549 = vpack.c.b16 %v1497, %v1493
    %v1550 = vpack.c.b16 %v1502, %v1498
    %v1551 = vpack.c.b16 %v1503, %v1499
    %v1552 = vpack.c.b16 %v1504, %v1500
    %v1553 = vpack.c.b16 %v1505, %v1501
    %v1554 = vpack.c.b16 %v1510, %v1506
    %v1555 = vpack.c.b16 %v1511, %v1507
    %v1556 = vpack.c.b16 %v1512, %v1508
    %v1557 = vpack.c.b16 %v1513, %v1509
    %v1558 = vpack.c.b16 %v1518, %v1514
    %v1559 = vpack.c.b16 %v1519, %v1515
    %v1560 = vpack.c.b16 %v1520, %v1516
    %v1561 = vpack.c.b16 %v1521, %v1517
    %v1562 = vpack.c.b16 %v1526, %v1522
    %v1563 = vpack.c.b16 %v1527, %v1523
    %v1564 = vpack.c.b16 %v1528, %v1524
    %v1565 = vpack.c.b16 %v1529, %v1525
    %v1566 = vpack.c.b16 %v1534, %v1530
    %v1567 = vpack.c.b16 %v1535, %v1531
    %v1568 = vpack.c.b16 %v1536, %v1532
    %v1569 = vpack.c.b16 %v1537, %v1533
    %1602 = vmatprep.subr.bf16.mxu0 %v1539
    %1603 = vmatpush1.bf16.msra.mxu0 %v1538
    %1604 = vmatprep.subr.bf16.mxu0 %v1543
    %1605 = vmatpush1.bf16.msra.mxu0 %v1542
    %1606 = vmatprep.subr.bf16.mxu0 %v1547
    %1607 = vmatpush1.bf16.msra.mxu0 %v1546
    %1608 = vmatprep.subr.bf16.mxu0 %v1551
    %1609 = vmatpush1.bf16.msra.mxu0 %v1550
    %1610 = vmatprep.subr.bf16.mxu0 %v1555
    %1611 = vmatpush1.bf16.msra.mxu0 %v1554
    %1612 = vmatprep.subr.bf16.mxu0 %v1559
    %1613 = vmatpush1.bf16.msra.mxu0 %v1558
    %1614 = vmatprep.subr.bf16.mxu0 %v1563
    %1615 = vmatpush1.bf16.msra.mxu0 %v1562
    %1616 = vmatprep.subr.bf16.mxu0 %v1567
    %1617 = vmatpush1.bf16.msra.mxu0 %v1566
    %1618 = vmatprep.subr.bf16.mxu0 0
    %1619 = vmatpush1.bf16.msra.mxu0 0
    %1620 = vmatprep.subr.bf16.mxu0 0
    %1621 = vmatpush1.bf16.msra.mxu0 0
    %1622 = vmatprep.subr.bf16.mxu0 0
    %1623 = vmatpush1.bf16.msra.mxu0 0
    %1624 = vmatprep.subr.bf16.mxu0 0
    %1625 = vmatpush1.bf16.msra.mxu0 0
    %1626 = vmatprep.subr.bf16.mxu0 0
    %1627 = vmatpush1.bf16.msra.mxu0 0
    %1628 = vmatprep.subr.bf16.mxu0 0
    %1629 = vmatpush1.bf16.msra.mxu0 0
    %1630 = vmatprep.subr.bf16.mxu0 0
    %1631 = vmatpush1.bf16.msra.mxu0 0
    %1632 = vmatprep.subr.bf16.mxu0 0
    %1633 = vmatpush1.bf16.msra.mxu0 0
    %1634 = vmatprep.mubr.bf16.mxu0 0
    %1635 = vmatmul.mubr.bf16.gmra.mrb[0].mxu0 %v1441
    %v1636 = vpop.f32.mrb[0].mxu0
    %v1637 = vadd.f32 0.0, %v1636
    %v1638 = vpop.f32.mrb[0].mxu0
    %v1639 = vadd.f32 0.0, %v1638
    %v1640 = vpop.f32.mrb[0].mxu0
    %v1641 = vadd.f32 0.0, %v1640
    %v1642 = vpop.f32.mrb[0].mxu0
    %v1643 = vadd.f32 0.0, %v1642
    %1644 = vdwg.mxu0
    %1645 = vmatprep.subr.bf16.mxu0 %v1541
    %1646 = vmatpush1.bf16.msra.mxu0 %v1540
    %1647 = vmatprep.subr.bf16.mxu0 %v1545
    %1648 = vmatpush1.bf16.msra.mxu0 %v1544
    %1649 = vmatprep.subr.bf16.mxu0 %v1549
    %1650 = vmatpush1.bf16.msra.mxu0 %v1548
    %1651 = vmatprep.subr.bf16.mxu0 %v1553
    %1652 = vmatpush1.bf16.msra.mxu0 %v1552
    %1653 = vmatprep.subr.bf16.mxu0 %v1557
    %1654 = vmatpush1.bf16.msra.mxu0 %v1556
    %1655 = vmatprep.subr.bf16.mxu0 %v1561
    %1656 = vmatpush1.bf16.msra.mxu0 %v1560
    %1657 = vmatprep.subr.bf16.mxu0 %v1565
    %1658 = vmatpush1.bf16.msra.mxu0 %v1564
    %1659 = vmatprep.subr.bf16.mxu0 %v1569
    %1660 = vmatpush1.bf16.msra.mxu0 %v1568
    %1661 = vmatprep.subr.bf16.mxu0 0
    %1662 = vmatpush1.bf16.msra.mxu0 0
    %1663 = vmatprep.subr.bf16.mxu0 0
    %1664 = vmatpush1.bf16.msra.mxu0 0
    %1665 = vmatprep.subr.bf16.mxu0 0
    %1666 = vmatpush1.bf16.msra.mxu0 0
    %1667 = vmatprep.subr.bf16.mxu0 0
    %1668 = vmatpush1.bf16.msra.mxu0 0
    %1669 = vmatprep.subr.bf16.mxu0 0
    %1670 = vmatpush1.bf16.msra.mxu0 0
    %1671 = vmatprep.subr.bf16.mxu0 0
    %1672 = vmatpush1.bf16.msra.mxu0 0
    %1673 = vmatprep.subr.bf16.mxu0 0
    %1674 = vmatpush1.bf16.msra.mxu0 0
    %1675 = vmatprep.subr.bf16.mxu0 0
    %1676 = vmatpush1.bf16.msra.mxu0 0
    %1677 = vmatprep.mubr.bf16.mxu0 0
    %1678 = vmatmul.mubr.bf16.gmra.mrb[0].mxu0 %v1441
    %v1679 = vpop.f32.mrb[0].mxu0
    %v1680 = vadd.f32 0.0, %v1679
    %v1681 = vpop.f32.mrb[0].mxu0
    %v1682 = vadd.f32 0.0, %v1681
    %v1683 = vpop.f32.mrb[0].mxu0
    %v1684 = vadd.f32 0.0, %v1683
    %v1685 = vpop.f32.mrb[0].mxu0
    %v1686 = vadd.f32 0.0, %v1685
    %1687 = vdwg.mxu0
    %1688 = vmatprep.subr.bf16.mxu0 %v860
    %1689 = vmatpush1.bf16.msra.mxu0 %v859
    %1690 = vmatprep.subr.bf16.mxu0 %v864
    %1691 = vmatpush1.bf16.msra.mxu0 %v863
    %1692 = vmatprep.subr.bf16.mxu0 %v868
    %1693 = vmatpush1.bf16.msra.mxu0 %v867
    %1694 = vmatprep.subr.bf16.mxu0 %v872
    %1695 = vmatpush1.bf16.msra.mxu0 %v871
    %1696 = vmatprep.subr.bf16.mxu0 %v876
    %1697 = vmatpush1.bf16.msra.mxu0 %v875
    %1698 = vmatprep.subr.bf16.mxu0 %v880
    %1699 = vmatpush1.bf16.msra.mxu0 %v879
    %1700 = vmatprep.subr.bf16.mxu0 %v884
    %1701 = vmatpush1.bf16.msra.mxu0 %v883
    %1702 = vmatprep.subr.bf16.mxu0 %v888
    %1703 = vmatpush1.bf16.msra.mxu0 %v887
    %1704 = vmatprep.subr.bf16.mxu0 0
    %1705 = vmatpush1.bf16.msra.mxu0 0
    %1706 = vmatprep.subr.bf16.mxu0 0
    %1707 = vmatpush1.bf16.msra.mxu0 0
    %1708 = vmatprep.subr.bf16.mxu0 0
    %1709 = vmatpush1.bf16.msra.mxu0 0
    %1710 = vmatprep.subr.bf16.mxu0 0
    %1711 = vmatpush1.bf16.msra.mxu0 0
    %1712 = vmatprep.subr.bf16.mxu0 0
    %1713 = vmatpush1.bf16.msra.mxu0 0
    %1714 = vmatprep.subr.bf16.mxu0 0
    %1715 = vmatpush1.bf16.msra.mxu0 0
    %1716 = vmatprep.subr.bf16.mxu0 0
    %1717 = vmatpush1.bf16.msra.mxu0 0
    %1718 = vmatprep.subr.bf16.mxu0 0
    %1719 = vmatpush1.bf16.msra.mxu0 0
    %1720 = vmatprep.mubr.bf16.mxu0 0
    %1721 = vmatmul.mubr.bf16.gmra.mrb[0].mxu0 %v1408
    %v1722 = vpop.f32.mrb[0].mxu0
    %v1723 = vadd.f32 %v1637, %v1722
    %v1724 = vpop.f32.mrb[0].mxu0
    %v1725 = vadd.f32 %v1639, %v1724
    %v1726 = vpop.f32.mrb[0].mxu0
    %v1727 = vadd.f32 %v1641, %v1726
    %v1728 = vpop.f32.mrb[0].mxu0
    %v1729 = vadd.f32 %v1643, %v1728
    %1730 = vdwg.mxu0
    %1731 = vmatprep.subr.bf16.mxu0 %v862
    %1732 = vmatpush1.bf16.msra.mxu0 %v861
    %1733 = vmatprep.subr.bf16.mxu0 %v866
    %1734 = vmatpush1.bf16.msra.mxu0 %v865
    %1735 = vmatprep.subr.bf16.mxu0 %v870
    %1736 = vmatpush1.bf16.msra.mxu0 %v869
    %1737 = vmatprep.subr.bf16.mxu0 %v874
    %1738 = vmatpush1.bf16.msra.mxu0 %v873
    %1739 = vmatprep.subr.bf16.mxu0 %v878
    %1740 = vmatpush1.bf16.msra.mxu0 %v877
    %1741 = vmatprep.subr.bf16.mxu0 %v882
    %1742 = vmatpush1.bf16.msra.mxu0 %v881
    %1743 = vmatprep.subr.bf16.mxu0 %v886
    %1744 = vmatpush1.bf16.msra.mxu0 %v885
    %1745 = vmatprep.subr.bf16.mxu0 %v890
    %1746 = vmatpush1.bf16.msra.mxu0 %v889
    %1747 = vmatprep.subr.bf16.mxu0 0
    %1748 = vmatpush1.bf16.msra.mxu0 0
    %1749 = vmatprep.subr.bf16.mxu0 0
    %1750 = vmatpush1.bf16.msra.mxu0 0
    %1751 = vmatprep.subr.bf16.mxu0 0
    %1752 = vmatpush1.bf16.msra.mxu0 0
    %1753 = vmatprep.subr.bf16.mxu0 0
    %1754 = vmatpush1.bf16.msra.mxu0 0
    %1755 = vmatprep.subr.bf16.mxu0 0
    %1756 = vmatpush1.bf16.msra.mxu0 0
    %1757 = vmatprep.subr.bf16.mxu0 0
    %1758 = vmatpush1.bf16.msra.mxu0 0
    %1759 = vmatprep.subr.bf16.mxu0 0
    %1760 = vmatpush1.bf16.msra.mxu0 0
    %1761 = vmatprep.subr.bf16.mxu0 0
    %1762 = vmatpush1.bf16.msra.mxu0 0
    %1763 = vmatprep.mubr.bf16.mxu0 0
    %1764 = vmatmul.mubr.bf16.gmra.mrb[0].mxu0 %v1408
    %v1765 = vpop.f32.mrb[0].mxu0
    %v1766 = vadd.f32 %v1680, %v1765
    %v1767 = vpop.f32.mrb[0].mxu0
    %v1768 = vadd.f32 %v1682, %v1767
    %v1769 = vpop.f32.mrb[0].mxu0
    %v1770 = vadd.f32 %v1684, %v1769
    %v1771 = vpop.f32.mrb[0].mxu0
    %v1772 = vadd.f32 %v1686, %v1771
    %1773 = vdwg.mxu0
    %v1774 = vadd.f32 %v1723, %v746
    %v1775 = vadd.f32 %v1725, %v750
    %v1776 = vadd.f32 %v1766, %v754
    %v1777 = vadd.f32 %v1768, %v758
    %v1778 = vadd.f32 %v1727, %v746
    %v1779 = vadd.f32 %v1729, %v750
    %v1780 = vadd.f32 %v1770, %v754
    %v1781 = vadd.f32 %v1772, %v758
    %v1782 = vxor.u32 %v1774, 2147483648
    %v1783 = vxor.u32 %v1778, 2147483648
    %v1784 = vmul.f32 %v1782, 1.442695
    %v1785 = vpow.pop %v1784
    %v1786 = vmul.f32 %v1783, 1.442695
    %v1787 = vpow.pop %v1786
    %v1788 = vadd.f32 %v1785, 1.0
    %v1789 = vadd.f32 %v1787, 1.0
    %v1790 = vrcp.pop %v1788
    %v1791 = vmul.f32 1.0, %v1790
    %v1792 = vrcp.pop %v1789
    %v1793 = vmul.f32 1.0, %v1792
    %v1794 = vxor.u32 %v1775, 2147483648
    %v1795 = vxor.u32 %v1779, 2147483648
    %v1796 = vmul.f32 %v1794, 1.442695
    %v1797 = vpow.pop %v1796
    %v1798 = vmul.f32 %v1795, 1.442695
    %v1799 = vpow.pop %v1798
    %v1800 = vadd.f32 %v1797, 1.0
    %v1801 = vadd.f32 %v1799, 1.0
    %v1802 = vrcp.pop %v1800
    %v1803 = vmul.f32 1.0, %v1802
    %v1804 = vrcp.pop %v1801
    %v1805 = vmul.f32 1.0, %v1804
    %v1806 = vtanh.pop %v1776
    %v1807 = vtanh.pop %v1780
    %v1808 = vxor.u32 %v1777, 2147483648
    %v1809 = vxor.u32 %v1781, 2147483648
    %v1810 = vmul.f32 %v1808, 1.442695
    %v1811 = vpow.pop %v1810
    %v1812 = vmul.f32 %v1809, 1.442695
    %v1813 = vpow.pop %v1812
    %v1814 = vadd.f32 %v1811, 1.0
    %v1815 = vadd.f32 %v1813, 1.0
    %v1816 = vrcp.pop %v1814
    %v1817 = vmul.f32 1.0, %v1816
    %v1818 = vrcp.pop %v1815
    %v1819 = vmul.f32 1.0, %v1818
    %v1820 = vmul.f32 %v1803, %v1033
    %v1821 = vmul.f32 %v1805, %v1034
    %v1822 = vmul.f32 %v1791, %v1806
    %v1823 = vmul.f32 %v1793, %v1807
    %v1824 = vadd.f32 %v1820, %v1822
    %v1825 = vadd.f32 %v1821, %v1823
    %v1826 = vtanh.pop %v1824
    %v1827 = vtanh.pop %v1825
    %v1828 = vmul.f32 %v1817, %v1826
    %v1829 = vmul.f32 %v1819, %v1827
    %v1830 = vmax.f32 %v1828, 0.0
    %v1831 = vmax.f32 %v1829, 0.0
    %v1832 = vld [vmem:[#allocation10 + $0xc0] sm:$0xff]
    %v1833 = vld [vmem:[#allocation10 + $0xc8] sm:$0xf]
    %v1834 = vld [vmem:[#allocation10 + $0xcc] sm:$0xff]
    %v1835 = vld [vmem:[#allocation10 + $0xd4] sm:$0xf]
    %v1836 = vld [vmem:[#allocation10 + $0xd8] sm:$0xff]
    %v1837 = vld [vmem:[#allocation10 + $0xe0] sm:$0xf]
    %v1838 = vld [vmem:[#allocation10 + $0xe4] sm:$0xff]
    %v1839 = vld [vmem:[#allocation10 + $0xec] sm:$0xf]
    %v1840 = vld [vmem:[#allocation10 + $0xf0] sm:$0xff]
    %v1841 = vld [vmem:[#allocation10 + $0xf8] sm:$0xf]
    %v1842 = vld [vmem:[#allocation10 + $0xfc] sm:$0xff]
    %v1843 = vld [vmem:[#allocation10 + $0x104] sm:$0xf]
    %v1844 = vld [vmem:[#allocation10 + $0x108] sm:$0xff]
    %v1845 = vld [vmem:[#allocation10 + $0x110] sm:$0xf]
    %v1846 = vld [vmem:[#allocation10 + $0x114] sm:$0xff]
    %v1847 = vld [vmem:[#allocation10 + $0x11c] sm:$0xf]
    %v1848 = vld [vmem:[#allocation10 + $0x120] sm:$0xff]
    %v1849 = vld [vmem:[#allocation10 + $0x128] sm:$0xf]
    %v1850 = vld [vmem:[#allocation10 + $0x12c] sm:$0xff]
    %v1851 = vld [vmem:[#allocation10 + $0x134] sm:$0xf]
    %v1852 = vld [vmem:[#allocation10 + $0x138] sm:$0xff]
    %v1853 = vld [vmem:[#allocation10 + $0x140] sm:$0xf]
    %v1854 = vld [vmem:[#allocation10 + $0x144] sm:$0xff]
    %v1855 = vld [vmem:[#allocation10 + $0x14c] sm:$0xf]
    %v1856 = vld [vmem:[#allocation10 + $0x150] sm:$0xff]
    %v1857 = vld [vmem:[#allocation10 + $0x158] sm:$0xf]
    %v1858 = vld [vmem:[#allocation10 + $0x15c] sm:$0xff]
    %v1859 = vld [vmem:[#allocation10 + $0x164] sm:$0xf]
    %v1860 = vld [vmem:[#allocation10 + $0x168] sm:$0xff]
    %v1861 = vld [vmem:[#allocation10 + $0x170] sm:$0xf]
    %v1862 = vld [vmem:[#allocation10 + $0x174] sm:$0xff]
    %v1863 = vld [vmem:[#allocation10 + $0x17c] sm:$0xf]
    %v1864 = vpack.c.bf16 %v1831, %v1830
    %v1897 = vunpack.c.l.b16 %v1832
    %v1898 = vunpack.c.h.b16 %v1832
    %v1899 = vunpack.c.l.b16 %v1833
    %v1900 = vunpack.c.l.b16 %v1834
    %v1901 = vunpack.c.h.b16 %v1834
    %v1902 = vunpack.c.l.b16 %v1835
    %v1903 = vunpack.c.l.b16 %v1836
    %v1904 = vunpack.c.h.b16 %v1836
    %v1905 = vunpack.c.l.b16 %v1837
    %v1906 = vunpack.c.l.b16 %v1838
    %v1907 = vunpack.c.h.b16 %v1838
    %v1908 = vunpack.c.l.b16 %v1839
    %v1909 = vunpack.c.l.b16 %v1840
    %v1910 = vunpack.c.h.b16 %v1840
    %v1911 = vunpack.c.l.b16 %v1841
    %v1912 = vunpack.c.l.b16 %v1842
    %v1913 = vunpack.c.h.b16 %v1842
    %v1914 = vunpack.c.l.b16 %v1843
    %v1915 = vunpack.c.l.b16 %v1844
    %v1916 = vunpack.c.h.b16 %v1844
    %v1917 = vunpack.c.l.b16 %v1845
    %v1918 = vunpack.c.l.b16 %v1846
    %v1919 = vunpack.c.h.b16 %v1846
    %v1920 = vunpack.c.l.b16 %v1847
    %v1921 = vunpack.c.l.b16 %v1848
    %v1922 = vunpack.c.h.b16 %v1848
    %v1923 = vunpack.c.l.b16 %v1849
    %v1924 = vunpack.c.l.b16 %v1850
    %v1925 = vunpack.c.h.b16 %v1850
    %v1926 = vunpack.c.l.b16 %v1851
    %v1927 = vunpack.c.l.b16 %v1852
    %v1928 = vunpack.c.h.b16 %v1852
    %v1929 = vunpack.c.l.b16 %v1853
    %v1930 = vunpack.c.l.b16 %v1854
    %v1931 = vunpack.c.h.b16 %v1854
    %v1932 = vunpack.c.l.b16 %v1855
    %v1933 = vunpack.c.l.b16 %v1856
    %v1934 = vunpack.c.h.b16 %v1856
    %v1935 = vunpack.c.l.b16 %v1857
    %v1936 = vunpack.c.l.b16 %v1858
    %v1937 = vunpack.c.h.b16 %v1858
    %v1938 = vunpack.c.l.b16 %v1859
    %v1939 = vunpack.c.l.b16 %v1860
    %v1940 = vunpack.c.h.b16 %v1860
    %v1941 = vunpack.c.l.b16 %v1861
    %v1942 = vunpack.c.l.b16 %v1862
    %v1943 = vunpack.c.h.b16 %v1862
    %v1944 = vunpack.c.l.b16 %v1863
    %v1945 = vpack.c.b16 %v1900, %v1897
    %v1946 = vpack.c.b16 %v1901, %v1898
    %v1947 = vpack.c.b16 %v1902, %v1899
    %v1948 = vpack.c.b16 %v1906, %v1903
    %v1949 = vpack.c.b16 %v1907, %v1904
    %v1950 = vpack.c.b16 %v1908, %v1905
    %v1951 = vpack.c.b16 %v1912, %v1909
    %v1952 = vpack.c.b16 %v1913, %v1910
    %v1953 = vpack.c.b16 %v1914, %v1911
    %v1954 = vpack.c.b16 %v1918, %v1915
    %v1955 = vpack.c.b16 %v1919, %v1916
    %v1956 = vpack.c.b16 %v1920, %v1917
    %v1957 = vpack.c.b16 %v1924, %v1921
    %v1958 = vpack.c.b16 %v1925, %v1922
    %v1959 = vpack.c.b16 %v1926, %v1923
    %v1960 = vpack.c.b16 %v1930, %v1927
    %v1961 = vpack.c.b16 %v1931, %v1928
    %v1962 = vpack.c.b16 %v1932, %v1929
    %v1963 = vpack.c.b16 %v1936, %v1933
    %v1964 = vpack.c.b16 %v1937, %v1934
    %v1965 = vpack.c.b16 %v1938, %v1935
    %v1966 = vpack.c.b16 %v1942, %v1939
    %v1967 = vpack.c.b16 %v1943, %v1940
    %v1968 = vpack.c.b16 %v1944, %v1941
    %1993 = vmatprep.subr.bf16.mxu0 %v1946
    %1994 = vmatpush1.bf16.msra.mxu0 %v1945
    %1995 = vmatprep.subr.bf16.mxu0 %v1949
    %1996 = vmatpush1.bf16.msra.mxu0 %v1948
    %1997 = vmatprep.subr.bf16.mxu0 %v1952
    %1998 = vmatpush1.bf16.msra.mxu0 %v1951
    %1999 = vmatprep.subr.bf16.mxu0 %v1955
    %2000 = vmatpush1.bf16.msra.mxu0 %v1954
    %2001 = vmatprep.subr.bf16.mxu0 %v1958
    %2002 = vmatpush1.bf16.msra.mxu0 %v1957
    %2003 = vmatprep.subr.bf16.mxu0 %v1961
    %2004 = vmatpush1.bf16.msra.mxu0 %v1960
    %2005 = vmatprep.subr.bf16.mxu0 %v1964
    %2006 = vmatpush1.bf16.msra.mxu0 %v1963
    %2007 = vmatprep.subr.bf16.mxu0 %v1967
    %2008 = vmatpush1.bf16.msra.mxu0 %v1966
    %2009 = vmatprep.subr.bf16.mxu0 0
    %2010 = vmatpush1.bf16.msra.mxu0 0
    %2011 = vmatprep.subr.bf16.mxu0 0
    %2012 = vmatpush1.bf16.msra.mxu0 0
    %2013 = vmatprep.subr.bf16.mxu0 0
    %2014 = vmatpush1.bf16.msra.mxu0 0
    %2015 = vmatprep.subr.bf16.mxu0 0
    %2016 = vmatpush1.bf16.msra.mxu0 0
    %2017 = vmatprep.subr.bf16.mxu0 0
    %2018 = vmatpush1.bf16.msra.mxu0 0
    %2019 = vmatprep.subr.bf16.mxu0 0
    %2020 = vmatpush1.bf16.msra.mxu0 0
    %2021 = vmatprep.subr.bf16.mxu0 0
    %2022 = vmatpush1.bf16.msra.mxu0 0
    %2023 = vmatprep.subr.bf16.mxu0 0
    %2024 = vmatpush1.bf16.msra.mxu0 0
    %2025 = vmatprep.mubr.bf16.mxu0 0
    %2026 = vmatmul.mubr.bf16.gmra.mrb[0].mxu0 %v1864
    %v2027 = vpop.f32.mrb[0].mxu0
    %v2028 = vadd.f32 0.0, %v2027
    %v2029 = vpop.f32.mrb[0].mxu0
    %v2030 = vadd.f32 0.0, %v2029
    %v2031 = vpop.f32.mrb[0].mxu0
    %v2032 = vadd.f32 0.0, %v2031
    %v2033 = vpop.f32.mrb[0].mxu0
    %v2034 = vadd.f32 0.0, %v2033
    %2035 = vdwg.mxu0
    %2036 = vmatprep.subr.bf16.mxu0 0
    %2037 = vmatpush1.bf16.msra.mxu0 %v1947
    %2038 = vmatprep.subr.bf16.mxu0 0
    %2039 = vmatpush1.bf16.msra.mxu0 %v1950
    %2040 = vmatprep.subr.bf16.mxu0 0
    %2041 = vmatpush1.bf16.msra.mxu0 %v1953
    %2042 = vmatprep.subr.bf16.mxu0 0
    %2043 = vmatpush1.bf16.msra.mxu0 %v1956
    %2044 = vmatprep.subr.bf16.mxu0 0
    %2045 = vmatpush1.bf16.msra.mxu0 %v1959
    %2046 = vmatprep.subr.bf16.mxu0 0
    %2047 = vmatpush1.bf16.msra.mxu0 %v1962
    %2048 = vmatprep.subr.bf16.mxu0 0
    %2049 = vmatpush1.bf16.msra.mxu0 %v1965
    %2050 = vmatprep.subr.bf16.mxu0 0
    %2051 = vmatpush1.bf16.msra.mxu0 %v1968
    %2052 = vmatprep.subr.bf16.mxu0 0
    %2053 = vmatpush1.bf16.msra.mxu0 0
    %2054 = vmatprep.subr.bf16.mxu0 0
    %2055 = vmatpush1.bf16.msra.mxu0 0
    %2056 = vmatprep.subr.bf16.mxu0 0
    %2057 = vmatpush1.bf16.msra.mxu0 0
    %2058 = vmatprep.subr.bf16.mxu0 0
    %2059 = vmatpush1.bf16.msra.mxu0 0
    %2060 = vmatprep.subr.bf16.mxu0 0
    %2061 = vmatpush1.bf16.msra.mxu0 0
    %2062 = vmatprep.subr.bf16.mxu0 0
    %2063 = vmatpush1.bf16.msra.mxu0 0
    %2064 = vmatprep.subr.bf16.mxu0 0
    %2065 = vmatpush1.bf16.msra.mxu0 0
    %2066 = vmatprep.subr.bf16.mxu0 0
    %2067 = vmatpush1.bf16.msra.mxu0 0
    %2068 = vmatprep.mubr.bf16.mxu0 0
    %2069 = vmatmul.mubr.bf16.gmra.mrb[0].mxu0 %v1864
    %v2070 = vpop.f32.mrb[0].mxu0
    %v2071 = vadd.f32 0.0, %v2070
    %v2072 = vpop.f32.mrb[0].mxu0
    %v2073 = vpop.f32.mrb[0].mxu0
    %v2074 = vadd.f32 0.0, %v2073
    %v2075 = vpop.f32.mrb[0].mxu0
    %2076 = vdwg.mxu0
    %v2109 = vunpack.c.l.b16 %v1041
    %v2110 = vunpack.c.h.b16 %v1041
    %v2111 = vunpack.c.l.b16 %v1042
    %v2112 = vunpack.c.l.b16 %v1043
    %v2113 = vunpack.c.h.b16 %v1043
    %v2114 = vunpack.c.l.b16 %v1044
    %v2115 = vunpack.c.l.b16 %v1045
    %v2116 = vunpack.c.h.b16 %v1045
    %v2117 = vunpack.c.l.b16 %v1046
    %v2118 = vunpack.c.l.b16 %v1047
    %v2119 = vunpack.c.h.b16 %v1047
    %v2120 = vunpack.c.l.b16 %v1048
    %v2121 = vunpack.c.l.b16 %v1049
    %v2122 = vunpack.c.h.b16 %v1049
    %v2123 = vunpack.c.l.b16 %v1050
    %v2124 = vunpack.c.l.b16 %v1051
    %v2125 = vunpack.c.h.b16 %v1051
    %v2126 = vunpack.c.l.b16 %v1052
    %v2127 = vunpack.c.l.b16 %v1053
    %v2128 = vunpack.c.h.b16 %v1053
    %v2129 = vunpack.c.l.b16 %v1054
    %v2130 = vunpack.c.l.b16 %v1055
    %v2131 = vunpack.c.h.b16 %v1055
    %v2132 = vunpack.c.l.b16 %v1056
    %v2133 = vunpack.c.l.b16 %v1057
    %v2134 = vunpack.c.h.b16 %v1057
    %v2135 = vunpack.c.l.b16 %v1058
    %v2136 = vunpack.c.l.b16 %v1059
    %v2137 = vunpack.c.h.b16 %v1059
    %v2138 = vunpack.c.l.b16 %v1060
    %v2139 = vunpack.c.l.b16 %v1061
    %v2140 = vunpack.c.h.b16 %v1061
    %v2141 = vunpack.c.l.b16 %v1062
    %v2142 = vunpack.c.l.b16 %v1063
    %v2143 = vunpack.c.h.b16 %v1063
    %v2144 = vunpack.c.l.b16 %v1064
    %v2145 = vunpack.c.l.b16 %v1065
    %v2146 = vunpack.c.h.b16 %v1065
    %v2147 = vunpack.c.l.b16 %v1066
    %v2148 = vunpack.c.l.b16 %v1067
    %v2149 = vunpack.c.h.b16 %v1067
    %v2150 = vunpack.c.l.b16 %v1068
    %v2151 = vunpack.c.l.b16 %v1069
    %v2152 = vunpack.c.h.b16 %v1069
    %v2153 = vunpack.c.l.b16 %v1070
    %v2154 = vunpack.c.l.b16 %v1071
    %v2155 = vunpack.c.h.b16 %v1071
    %v2156 = vunpack.c.l.b16 %v1072
    %v2157 = vpack.c.b16 %v2112, %v2109
    %v2158 = vpack.c.b16 %v2113, %v2110
    %v2159 = vpack.c.b16 %v2114, %v2111
    %v2160 = vpack.c.b16 %v2118, %v2115
    %v2161 = vpack.c.b16 %v2119, %v2116
    %v2162 = vpack.c.b16 %v2120, %v2117
    %v2163 = vpack.c.b16 %v2124, %v2121
    %v2164 = vpack.c.b16 %v2125, %v2122
    %v2165 = vpack.c.b16 %v2126, %v2123
    %v2166 = vpack.c.b16 %v2130, %v2127
    %v2167 = vpack.c.b16 %v2131, %v2128
    %v2168 = vpack.c.b16 %v2132, %v2129
    %v2169 = vpack.c.b16 %v2136, %v2133
    %v2170 = vpack.c.b16 %v2137, %v2134
    %v2171 = vpack.c.b16 %v2138, %v2135
    %v2172 = vpack.c.b16 %v2142, %v2139
    %v2173 = vpack.c.b16 %v2143, %v2140
    %v2174 = vpack.c.b16 %v2144, %v2141
    %v2175 = vpack.c.b16 %v2148, %v2145
    %v2176 = vpack.c.b16 %v2149, %v2146
    %v2177 = vpack.c.b16 %v2150, %v2147
    %v2178 = vpack.c.b16 %v2154, %v2151
    %v2179 = vpack.c.b16 %v2155, %v2152
    %v2180 = vpack.c.b16 %v2156, %v2153
    %2205 = vmatprep.subr.bf16.mxu0 %v2158
    %2206 = vmatpush1.bf16.msra.mxu0 %v2157
    %2207 = vmatprep.subr.bf16.mxu0 %v2161
    %2208 = vmatpush1.bf16.msra.mxu0 %v2160
    %2209 = vmatprep.subr.bf16.mxu0 %v2164
    %2210 = vmatpush1.bf16.msra.mxu0 %v2163
    %2211 = vmatprep.subr.bf16.mxu0 %v2167
    %2212 = vmatpush1.bf16.msra.mxu0 %v2166
    %2213 = vmatprep.subr.bf16.mxu0 %v2170
    %2214 = vmatpush1.bf16.msra.mxu0 %v2169
    %2215 = vmatprep.subr.bf16.mxu0 %v2173
    %2216 = vmatpush1.bf16.msra.mxu0 %v2172
    %2217 = vmatprep.subr.bf16.mxu0 %v2176
    %2218 = vmatpush1.bf16.msra.mxu0 %v2175
    %2219 = vmatprep.subr.bf16.mxu0 %v2179
    %2220 = vmatpush1.bf16.msra.mxu0 %v2178
    %2221 = vmatprep.subr.bf16.mxu0 0
    %2222 = vmatpush1.bf16.msra.mxu0 0
    %2223 = vmatprep.subr.bf16.mxu0 0
    %2224 = vmatpush1.bf16.msra.mxu0 0
    %2225 = vmatprep.subr.bf16.mxu0 0
    %2226 = vmatpush1.bf16.msra.mxu0 0
    %2227 = vmatprep.subr.bf16.mxu0 0
    %2228 = vmatpush1.bf16.msra.mxu0 0
    %2229 = vmatprep.subr.bf16.mxu0 0
    %2230 = vmatpush1.bf16.msra.mxu0 0
    %2231 = vmatprep.subr.bf16.mxu0 0
    %2232 = vmatpush1.bf16.msra.mxu0 0
    %2233 = vmatprep.subr.bf16.mxu0 0
    %2234 = vmatpush1.bf16.msra.mxu0 0
    %2235 = vmatprep.subr.bf16.mxu0 0
    %2236 = vmatpush1.bf16.msra.mxu0 0
    %2237 = vmatprep.mubr.bf16.mxu0 0
    %2238 = vmatmul.mubr.bf16.gmra.mrb[0].mxu0 %v1073
    %v2239 = vpop.f32.mrb[0].mxu0
    %v2240 = vadd.f32 %v2028, %v2239
    %v2241 = vpop.f32.mrb[0].mxu0
    %v2242 = vadd.f32 %v2030, %v2241
    %v2243 = vpop.f32.mrb[0].mxu0
    %v2244 = vadd.f32 %v2032, %v2243
    %v2245 = vpop.f32.mrb[0].mxu0
    %v2246 = vadd.f32 %v2034, %v2245
    %2247 = vdwg.mxu0
    %2248 = vmatprep.subr.bf16.mxu0 0
    %2249 = vmatpush1.bf16.msra.mxu0 %v2159
    %2250 = vmatprep.subr.bf16.mxu0 0
    %2251 = vmatpush1.bf16.msra.mxu0 %v2162
    %2252 = vmatprep.subr.bf16.mxu0 0
    %2253 = vmatpush1.bf16.msra.mxu0 %v2165
    %2254 = vmatprep.subr.bf16.mxu0 0
    %2255 = vmatpush1.bf16.msra.mxu0 %v2168
    %2256 = vmatprep.subr.bf16.mxu0 0
    %2257 = vmatpush1.bf16.msra.mxu0 %v2171
    %2258 = vmatprep.subr.bf16.mxu0 0
    %2259 = vmatpush1.bf16.msra.mxu0 %v2174
    %2260 = vmatprep.subr.bf16.mxu0 0
    %2261 = vmatpush1.bf16.msra.mxu0 %v2177
    %2262 = vmatprep.subr.bf16.mxu0 0
    %2263 = vmatpush1.bf16.msra.mxu0 %v2180
    %2264 = vmatprep.subr.bf16.mxu0 0
    %2265 = vmatpush1.bf16.msra.mxu0 0
    %2266 = vmatprep.subr.bf16.mxu0 0
    %2267 = vmatpush1.bf16.msra.mxu0 0
    %2268 = vmatprep.subr.bf16.mxu0 0
    %2269 = vmatpush1.bf16.msra.mxu0 0
    %2270 = vmatprep.subr.bf16.mxu0 0
    %2271 = vmatpush1.bf16.msra.mxu0 0
    %2272 = vmatprep.subr.bf16.mxu0 0
    %2273 = vmatpush1.bf16.msra.mxu0 0
    %2274 = vmatprep.subr.bf16.mxu0 0
    %2275 = vmatpush1.bf16.msra.mxu0 0
    %2276 = vmatprep.subr.bf16.mxu0 0
    %2277 = vmatpush1.bf16.msra.mxu0 0
    %2278 = vmatprep.subr.bf16.mxu0 0
    %2279 = vmatpush1.bf16.msra.mxu0 0
    %2280 = vmatprep.mubr.bf16.mxu0 0
    %2281 = vmatmul.mubr.bf16.gmra.mrb[0].mxu0 %v1073
    %v2282 = vpop.f32.mrb[0].mxu0
    %v2283 = vadd.f32 %v2071, %v2282
    %v2284 = vpop.f32.mrb[0].mxu0
    %v2285 = vpop.f32.mrb[0].mxu0
    %v2286 = vadd.f32 %v2074, %v2285
    %v2287 = vpop.f32.mrb[0].mxu0
    %2288 = vdwg.mxu0
    %v2289 = vadd.f32 %v597, %v653
    %v2290 = vadd.f32 %v599, %v657
    %v2291 = vadd.f32 %v640, %v661
    %v2292 = vadd.f32 %v642, %v665
    %v2293 = vadd.f32 %v601, %v653
    %v2294 = vadd.f32 %v603, %v657
    %v2295 = vadd.f32 %v644, %v661
    %v2296 = vadd.f32 %v646, %v665
    %2297 = vmatprep.subr.bf16.mxu0 %v1211
    %2298 = vmatpush1.bf16.msra.mxu0 %v1210
    %2299 = vmatprep.subr.bf16.mxu0 %v1215
    %2300 = vmatpush1.bf16.msra.mxu0 %v1214
    %2301 = vmatprep.subr.bf16.mxu0 %v1219
    %2302 = vmatpush1.bf16.msra.mxu0 %v1218
    %2303 = vmatprep.subr.bf16.mxu0 %v1223
    %2304 = vmatpush1.bf16.msra.mxu0 %v1222
    %2305 = vmatprep.subr.bf16.mxu0 %v1227
    %2306 = vmatpush1.bf16.msra.mxu0 %v1226
    %2307 = vmatprep.subr.bf16.mxu0 %v1231
    %2308 = vmatpush1.bf16.msra.mxu0 %v1230
    %2309 = vmatprep.subr.bf16.mxu0 %v1235
    %2310 = vmatpush1.bf16.msra.mxu0 %v1234
    %2311 = vmatprep.subr.bf16.mxu0 %v1239
    %2312 = vmatpush1.bf16.msra.mxu0 %v1238
    %2313 = vmatprep.subr.bf16.mxu0 0
    %2314 = vmatpush1.bf16.msra.mxu0 0
    %2315 = vmatprep.subr.bf16.mxu0 0
    %2316 = vmatpush1.bf16.msra.mxu0 0
    %2317 = vmatprep.subr.bf16.mxu0 0
    %2318 = vmatpush1.bf16.msra.mxu0 0
    %2319 = vmatprep.subr.bf16.mxu0 0
    %2320 = vmatpush1.bf16.msra.mxu0 0
    %2321 = vmatprep.subr.bf16.mxu0 0
    %2322 = vmatpush1.bf16.msra.mxu0 0
    %2323 = vmatprep.subr.bf16.mxu0 0
    %2324 = vmatpush1.bf16.msra.mxu0 0
    %2325 = vmatprep.subr.bf16.mxu0 0
    %2326 = vmatpush1.bf16.msra.mxu0 0
    %2327 = vmatprep.subr.bf16.mxu0 0
    %2328 = vmatpush1.bf16.msra.mxu0 0
    %2329 = vmatprep.mubr.bf16.mxu0 0
    %2330 = vmatmul.mubr.bf16.gmra.mrb[0].mxu0 %v1408
    %v2331 = vpop.f32.mrb[0].mxu0
    %v2332 = vadd.f32 %v2289, %v2331
    %v2333 = vpop.f32.mrb[0].mxu0
    %v2334 = vadd.f32 %v2290, %v2333
    %v2335 = vpop.f32.mrb[0].mxu0
    %v2336 = vadd.f32 %v2293, %v2335
    %v2337 = vpop.f32.mrb[0].mxu0
    %v2338 = vadd.f32 %v2294, %v2337
    %2339 = vdwg.mxu0
    %2340 = vmatprep.subr.bf16.mxu0 %v1213
    %2341 = vmatpush1.bf16.msra.mxu0 %v1212
    %2342 = vmatprep.subr.bf16.mxu0 %v1217
    %2343 = vmatpush1.bf16.msra.mxu0 %v1216
    %2344 = vmatprep.subr.bf16.mxu0 %v1221
    %2345 = vmatpush1.bf16.msra.mxu0 %v1220
    %2346 = vmatprep.subr.bf16.mxu0 %v1225
    %2347 = vmatpush1.bf16.msra.mxu0 %v1224
    %2348 = vmatprep.subr.bf16.mxu0 %v1229
    %2349 = vmatpush1.bf16.msra.mxu0 %v1228
    %2350 = vmatprep.subr.bf16.mxu0 %v1233
    %2351 = vmatpush1.bf16.msra.mxu0 %v1232
    %2352 = vmatprep.subr.bf16.mxu0 %v1237
    %2353 = vmatpush1.bf16.msra.mxu0 %v1236
    %2354 = vmatprep.subr.bf16.mxu0 %v1241
    %2355 = vmatpush1.bf16.msra.mxu0 %v1240
    %2356 = vmatprep.subr.bf16.mxu0 0
    %2357 = vmatpush1.bf16.msra.mxu0 0
    %2358 = vmatprep.subr.bf16.mxu0 0
    %2359 = vmatpush1.bf16.msra.mxu0 0
    %2360 = vmatprep.subr.bf16.mxu0 0
    %2361 = vmatpush1.bf16.msra.mxu0 0
    %2362 = vmatprep.subr.bf16.mxu0 0
    %2363 = vmatpush1.bf16.msra.mxu0 0
    %2364 = vmatprep.subr.bf16.mxu0 0
    %2365 = vmatpush1.bf16.msra.mxu0 0
    %2366 = vmatprep.subr.bf16.mxu0 0
    %2367 = vmatpush1.bf16.msra.mxu0 0
    %2368 = vmatprep.subr.bf16.mxu0 0
    %2369 = vmatpush1.bf16.msra.mxu0 0
    %2370 = vmatprep.subr.bf16.mxu0 0
    %2371 = vmatpush1.bf16.msra.mxu0 0
    %2372 = vmatprep.mubr.bf16.mxu0 0
    %2373 = vmatmul.mubr.bf16.gmra.mrb[0].mxu0 %v1408
    %v2374 = vpop.f32.mrb[0].mxu0
    %v2375 = vadd.f32 %v2291, %v2374
    %v2376 = vpop.f32.mrb[0].mxu0
    %v2377 = vadd.f32 %v2292, %v2376
    %v2378 = vpop.f32.mrb[0].mxu0
    %v2379 = vadd.f32 %v2295, %v2378
    %v2380 = vpop.f32.mrb[0].mxu0
    %v2381 = vadd.f32 %v2296, %v2380
    %2382 = vdwg.mxu0
    %v2383 = vxor.u32 %v2332, 2147483648
    %v2384 = vxor.u32 %v2336, 2147483648
    %v2385 = vmul.f32 %v2383, 1.442695
    %v2386 = vpow.pop %v2385
    %v2387 = vmul.f32 %v2384, 1.442695
    %v2388 = vpow.pop %v2387
    %v2389 = vadd.f32 %v2386, 1.0
    %v2390 = vadd.f32 %v2388, 1.0
    %v2391 = vrcp.pop %v2389
    %v2392 = vmul.f32 1.0, %v2391
    %v2393 = vrcp.pop %v2390
    %v2394 = vmul.f32 1.0, %v2393
    %v2395 = vxor.u32 %v2334, 2147483648
    %v2396 = vxor.u32 %v2338, 2147483648
    %v2397 = vmul.f32 %v2395, 1.442695
    %v2398 = vpow.pop %v2397
    %v2399 = vmul.f32 %v2396, 1.442695
    %v2400 = vpow.pop %v2399
    %v2401 = vadd.f32 %v2398, 1.0
    %v2402 = vadd.f32 %v2400, 1.0
    %v2403 = vrcp.pop %v2401
    %v2404 = vmul.f32 1.0, %v2403
    %v2405 = vrcp.pop %v2402
    %v2406 = vmul.f32 1.0, %v2405
    %v2407 = vtanh.pop %v2375
    %v2408 = vtanh.pop %v2379
    %v2409 = vxor.u32 %v2377, 2147483648
    %v2410 = vxor.u32 %v2381, 2147483648
    %v2411 = vmul.f32 %v2409, 1.442695
    %v2412 = vpow.pop %v2411
    %v2413 = vmul.f32 %v2410, 1.442695
    %v2414 = vpow.pop %v2413
    %v2415 = vadd.f32 %v2412, 1.0
    %v2416 = vadd.f32 %v2414, 1.0
    %v2417 = vrcp.pop %v2415
    %v2418 = vmul.f32 1.0, %v2417
    %v2419 = vrcp.pop %v2416
    %v2420 = vmul.f32 1.0, %v2419
    %v2421 = vmul.f32 %v2404, %v1402
    %v2422 = vmul.f32 %v2406, %v1403
    %v2423 = vmul.f32 %v2392, %v2407
    %v2424 = vmul.f32 %v2394, %v2408
    %v2425 = vadd.f32 %v2421, %v2423
    %v2426 = vadd.f32 %v2422, %v2424
    %v2427 = vtanh.pop %v2425
    %v2428 = vtanh.pop %v2426
    %v2429 = vmul.f32 %v2418, %v2427
    %v2430 = vmul.f32 %v2420, %v2428
    %v2431 = vpack.c.bf16 %v2430, %v2429
    %v2432 = vpack.c.bf16 %v1829, %v1828
    %2433 = vmatprep.subr.bf16.mxu0 %v1539
    %2434 = vmatpush1.bf16.msra.mxu0 %v1538
    %2435 = vmatprep.subr.bf16.mxu0 %v1543
    %2436 = vmatpush1.bf16.msra.mxu0 %v1542
    %2437 = vmatprep.subr.bf16.mxu0 %v1547
    %2438 = vmatpush1.bf16.msra.mxu0 %v1546
    %2439 = vmatprep.subr.bf16.mxu0 %v1551
    %2440 = vmatpush1.bf16.msra.mxu0 %v1550
    %2441 = vmatprep.subr.bf16.mxu0 %v1555
    %2442 = vmatpush1.bf16.msra.mxu0 %v1554
    %2443 = vmatprep.subr.bf16.mxu0 %v1559
    %2444 = vmatpush1.bf16.msra.mxu0 %v1558
    %2445 = vmatprep.subr.bf16.mxu0 %v1563
    %2446 = vmatpush1.bf16.msra.mxu0 %v1562
    %2447 = vmatprep.subr.bf16.mxu0 %v1567
    %2448 = vmatpush1.bf16.msra.mxu0 %v1566
    %2449 = vmatprep.subr.bf16.mxu0 0
    %2450 = vmatpush1.bf16.msra.mxu0 0
    %2451 = vmatprep.subr.bf16.mxu0 0
    %2452 = vmatpush1.bf16.msra.mxu0 0
    %2453 = vmatprep.subr.bf16.mxu0 0
    %2454 = vmatpush1.bf16.msra.mxu0 0
    %2455 = vmatprep.subr.bf16.mxu0 0
    %2456 = vmatpush1.bf16.msra.mxu0 0
    %2457 = vmatprep.subr.bf16.mxu0 0
    %2458 = vmatpush1.bf16.msra.mxu0 0
    %2459 = vmatprep.subr.bf16.mxu0 0
    %2460 = vmatpush1.bf16.msra.mxu0 0
    %2461 = vmatprep.subr.bf16.mxu0 0
    %2462 = vmatpush1.bf16.msra.mxu0 0
    %2463 = vmatprep.subr.bf16.mxu0 0
    %2464 = vmatpush1.bf16.msra.mxu0 0
    %2465 = vmatprep.mubr.bf16.mxu0 0
    %2466 = vmatmul.mubr.bf16.gmra.mrb[0].mxu0 %v2432
    %v2467 = vpop.f32.mrb[0].mxu0
    %v2468 = vadd.f32 0.0, %v2467
    %v2469 = vpop.f32.mrb[0].mxu0
    %v2470 = vadd.f32 0.0, %v2469
    %v2471 = vpop.f32.mrb[0].mxu0
    %v2472 = vadd.f32 0.0, %v2471
    %v2473 = vpop.f32.mrb[0].mxu0
    %v2474 = vadd.f32 0.0, %v2473
    %2475 = vdwg.mxu0
    %2476 = vmatprep.subr.bf16.mxu0 %v1541
    %2477 = vmatpush1.bf16.msra.mxu0 %v1540
    %2478 = vmatprep.subr.bf16.mxu0 %v1545
    %2479 = vmatpush1.bf16.msra.mxu0 %v1544
    %2480 = vmatprep.subr.bf16.mxu0 %v1549
    %2481 = vmatpush1.bf16.msra.mxu0 %v1548
    %2482 = vmatprep.subr.bf16.mxu0 %v1553
    %2483 = vmatpush1.bf16.msra.mxu0 %v1552
    %2484 = vmatprep.subr.bf16.mxu0 %v1557
    %2485 = vmatpush1.bf16.msra.mxu0 %v1556
    %2486 = vmatprep.subr.bf16.mxu0 %v1561
    %2487 = vmatpush1.bf16.msra.mxu0 %v1560
    %2488 = vmatprep.subr.bf16.mxu0 %v1565
    %2489 = vmatpush1.bf16.msra.mxu0 %v1564
    %2490 = vmatprep.subr.bf16.mxu0 %v1569
    %2491 = vmatpush1.bf16.msra.mxu0 %v1568
    %2492 = vmatprep.subr.bf16.mxu0 0
    %2493 = vmatpush1.bf16.msra.mxu0 0
    %2494 = vmatprep.subr.bf16.mxu0 0
    %2495 = vmatpush1.bf16.msra.mxu0 0
    %2496 = vmatprep.subr.bf16.mxu0 0
    %2497 = vmatpush1.bf16.msra.mxu0 0
    %2498 = vmatprep.subr.bf16.mxu0 0
    %2499 = vmatpush1.bf16.msra.mxu0 0
    %2500 = vmatprep.subr.bf16.mxu0 0
    %2501 = vmatpush1.bf16.msra.mxu0 0
    %2502 = vmatprep.subr.bf16.mxu0 0
    %2503 = vmatpush1.bf16.msra.mxu0 0
    %2504 = vmatprep.subr.bf16.mxu0 0
    %2505 = vmatpush1.bf16.msra.mxu0 0
    %2506 = vmatprep.subr.bf16.mxu0 0
    %2507 = vmatpush1.bf16.msra.mxu0 0
    %2508 = vmatprep.mubr.bf16.mxu0 0
    %2509 = vmatmul.mubr.bf16.gmra.mrb[0].mxu0 %v2432
    %v2510 = vpop.f32.mrb[0].mxu0
    %v2511 = vadd.f32 0.0, %v2510
    %v2512 = vpop.f32.mrb[0].mxu0
    %v2513 = vadd.f32 0.0, %v2512
    %v2514 = vpop.f32.mrb[0].mxu0
    %v2515 = vadd.f32 0.0, %v2514
    %v2516 = vpop.f32.mrb[0].mxu0
    %v2517 = vadd.f32 0.0, %v2516
    %2518 = vdwg.mxu0
    %2519 = vmatprep.subr.bf16.mxu0 %v860
    %2520 = vmatpush1.bf16.msra.mxu0 %v859
    %2521 = vmatprep.subr.bf16.mxu0 %v864
    %2522 = vmatpush1.bf16.msra.mxu0 %v863
    %2523 = vmatprep.subr.bf16.mxu0 %v868
    %2524 = vmatpush1.bf16.msra.mxu0 %v867
    %2525 = vmatprep.subr.bf16.mxu0 %v872
    %2526 = vmatpush1.bf16.msra.mxu0 %v871
    %2527 = vmatprep.subr.bf16.mxu0 %v876
    %2528 = vmatpush1.bf16.msra.mxu0 %v875
    %2529 = vmatprep.subr.bf16.mxu0 %v880
    %2530 = vmatpush1.bf16.msra.mxu0 %v879
    %2531 = vmatprep.subr.bf16.mxu0 %v884
    %2532 = vmatpush1.bf16.msra.mxu0 %v883
    %2533 = vmatprep.subr.bf16.mxu0 %v888
    %2534 = vmatpush1.bf16.msra.mxu0 %v887
    %2535 = vmatprep.subr.bf16.mxu0 0
    %2536 = vmatpush1.bf16.msra.mxu0 0
    %2537 = vmatprep.subr.bf16.mxu0 0
    %2538 = vmatpush1.bf16.msra.mxu0 0
    %2539 = vmatprep.subr.bf16.mxu0 0
    %2540 = vmatpush1.bf16.msra.mxu0 0
    %2541 = vmatprep.subr.bf16.mxu0 0
    %2542 = vmatpush1.bf16.msra.mxu0 0
    %2543 = vmatprep.subr.bf16.mxu0 0
    %2544 = vmatpush1.bf16.msra.mxu0 0
    %2545 = vmatprep.subr.bf16.mxu0 0
    %2546 = vmatpush1.bf16.msra.mxu0 0
    %2547 = vmatprep.subr.bf16.mxu0 0
    %2548 = vmatpush1.bf16.msra.mxu0 0
    %2549 = vmatprep.subr.bf16.mxu0 0
    %2550 = vmatpush1.bf16.msra.mxu0 0
    %2551 = vmatprep.mubr.bf16.mxu0 0
    %2552 = vmatmul.mubr.bf16.gmra.mrb[0].mxu0 %v2431
    %v2553 = vpop.f32.mrb[0].mxu0
    %v2554 = vadd.f32 %v2468, %v2553
    %v2555 = vpop.f32.mrb[0].mxu0
    %v2556 = vadd.f32 %v2470, %v2555
    %v2557 = vpop.f32.mrb[0].mxu0
    %v2558 = vadd.f32 %v2472, %v2557
    %v2559 = vpop.f32.mrb[0].mxu0
    %v2560 = vadd.f32 %v2474, %v2559
    %2561 = vdwg.mxu0
    %2562 = vmatprep.subr.bf16.mxu0 %v862
    %2563 = vmatpush1.bf16.msra.mxu0 %v861
    %2564 = vmatprep.subr.bf16.mxu0 %v866
    %2565 = vmatpush1.bf16.msra.mxu0 %v865
    %2566 = vmatprep.subr.bf16.mxu0 %v870
    %2567 = vmatpush1.bf16.msra.mxu0 %v869
    %2568 = vmatprep.subr.bf16.mxu0 %v874
    %2569 = vmatpush1.bf16.msra.mxu0 %v873
    %2570 = vmatprep.subr.bf16.mxu0 %v878
    %2571 = vmatpush1.bf16.msra.mxu0 %v877
    %2572 = vmatprep.subr.bf16.mxu0 %v882
    %2573 = vmatpush1.bf16.msra.mxu0 %v881
    %2574 = vmatprep.subr.bf16.mxu0 %v886
    %2575 = vmatpush1.bf16.msra.mxu0 %v885
    %2576 = vmatprep.subr.bf16.mxu0 %v890
    %2577 = vmatpush1.bf16.msra.mxu0 %v889
    %2578 = vmatprep.subr.bf16.mxu0 0
    %2579 = vmatpush1.bf16.msra.mxu0 0
    %2580 = vmatprep.subr.bf16.mxu0 0
    %2581 = vmatpush1.bf16.msra.mxu0 0
    %2582 = vmatprep.subr.bf16.mxu0 0
    %2583 = vmatpush1.bf16.msra.mxu0 0
    %2584 = vmatprep.subr.bf16.mxu0 0
    %2585 = vmatpush1.bf16.msra.mxu0 0
    %2586 = vmatprep.subr.bf16.mxu0 0
    %2587 = vmatpush1.bf16.msra.mxu0 0
    %2588 = vmatprep.subr.bf16.mxu0 0
    %2589 = vmatpush1.bf16.msra.mxu0 0
    %2590 = vmatprep.subr.bf16.mxu0 0
    %2591 = vmatpush1.bf16.msra.mxu0 0
    %2592 = vmatprep.subr.bf16.mxu0 0
    %2593 = vmatpush1.bf16.msra.mxu0 0
    %2594 = vmatprep.mubr.bf16.mxu0 0
    %2595 = vmatmul.mubr.bf16.gmra.mrb[0].mxu0 %v2431
    %v2596 = vpop.f32.mrb[0].mxu0
    %v2597 = vadd.f32 %v2511, %v2596
    %v2598 = vpop.f32.mrb[0].mxu0
    %v2599 = vadd.f32 %v2513, %v2598
    %v2600 = vpop.f32.mrb[0].mxu0
    %v2601 = vadd.f32 %v2515, %v2600
    %v2602 = vpop.f32.mrb[0].mxu0
    %v2603 = vadd.f32 %v2517, %v2602
    %2604 = vdwg.mxu0
    %v2605 = vadd.f32 %v2554, %v746
    %v2606 = vadd.f32 %v2556, %v750
    %v2607 = vadd.f32 %v2597, %v754
    %v2608 = vadd.f32 %v2599, %v758
    %v2609 = vadd.f32 %v2558, %v746
    %v2610 = vadd.f32 %v2560, %v750
    %v2611 = vadd.f32 %v2601, %v754
    %v2612 = vadd.f32 %v2603, %v758
    %v2613 = vxor.u32 %v2605, 2147483648
    %v2614 = vxor.u32 %v2609, 2147483648
    %v2615 = vmul.f32 %v2613, 1.442695
    %v2616 = vpow.pop %v2615
    %v2617 = vmul.f32 %v2614, 1.442695
    %v2618 = vpow.pop %v2617
    %v2619 = vadd.f32 %v2616, 1.0
    %v2620 = vadd.f32 %v2618, 1.0
    %v2621 = vrcp.pop %v2619
    %v2622 = vmul.f32 1.0, %v2621
    %v2623 = vrcp.pop %v2620
    %v2624 = vmul.f32 1.0, %v2623
    %v2625 = vxor.u32 %v2606, 2147483648
    %v2626 = vxor.u32 %v2610, 2147483648
    %v2627 = vmul.f32 %v2625, 1.442695
    %v2628 = vpow.pop %v2627
    %v2629 = vmul.f32 %v2626, 1.442695
    %v2630 = vpow.pop %v2629
    %v2631 = vadd.f32 %v2628, 1.0
    %v2632 = vadd.f32 %v2630, 1.0
    %v2633 = vrcp.pop %v2631
    %v2634 = vmul.f32 1.0, %v2633
    %v2635 = vrcp.pop %v2632
    %v2636 = vmul.f32 1.0, %v2635
    %v2637 = vtanh.pop %v2607
    %v2638 = vtanh.pop %v2611
    %v2639 = vxor.u32 %v2608, 2147483648
    %v2640 = vxor.u32 %v2612, 2147483648
    %v2641 = vmul.f32 %v2639, 1.442695
    %v2642 = vpow.pop %v2641
    %v2643 = vmul.f32 %v2640, 1.442695
    %v2644 = vpow.pop %v2643
    %v2645 = vadd.f32 %v2642, 1.0
    %v2646 = vadd.f32 %v2644, 1.0
    %v2647 = vrcp.pop %v2645
    %v2648 = vmul.f32 1.0, %v2647
    %v2649 = vrcp.pop %v2646
    %v2650 = vmul.f32 1.0, %v2649
    %v2651 = vmul.f32 %v2634, %v1824
    %v2652 = vmul.f32 %v2636, %v1825
    %v2653 = vmul.f32 %v2622, %v2637
    %v2654 = vmul.f32 %v2624, %v2638
    %v2655 = vadd.f32 %v2651, %v2653
    %v2656 = vadd.f32 %v2652, %v2654
    %v2657 = vtanh.pop %v2655
    %v2658 = vtanh.pop %v2656
    %v2659 = vmul.f32 %v2648, %v2657
    %v2660 = vmul.f32 %v2650, %v2658
    %v2661 = vmax.f32 %v2659, 0.0
    %v2662 = vmax.f32 %v2660, 0.0
    %v2663 = vld [vmem:[#allocation10 + $0x180] sm:$0xff]
    %v2664 = vld [vmem:[#allocation10 + $0x188] sm:$0xf]
    %v2665 = vld [vmem:[#allocation10 + $0x18c] sm:$0xff]
    %v2666 = vld [vmem:[#allocation10 + $0x194] sm:$0xf]
    %v2667 = vld [vmem:[#allocation10 + $0x198] sm:$0xff]
    %v2668 = vld [vmem:[#allocation10 + $0x1a0] sm:$0xf]
    %v2669 = vld [vmem:[#allocation10 + $0x1a4] sm:$0xff]
    %v2670 = vld [vmem:[#allocation10 + $0x1ac] sm:$0xf]
    %v2671 = vld [vmem:[#allocation10 + $0x1b0] sm:$0xff]
    %v2672 = vld [vmem:[#allocation10 + $0x1b8] sm:$0xf]
    %v2673 = vld [vmem:[#allocation10 + $0x1bc] sm:$0xff]
    %v2674 = vld [vmem:[#allocation10 + $0x1c4] sm:$0xf]
    %v2675 = vld [vmem:[#allocation10 + $0x1c8] sm:$0xff]
    %v2676 = vld [vmem:[#allocation10 + $0x1d0] sm:$0xf]
    %v2677 = vld [vmem:[#allocation10 + $0x1d4] sm:$0xff]
    %v2678 = vld [vmem:[#allocation10 + $0x1dc] sm:$0xf]
    %v2679 = vld [vmem:[#allocation10 + $0x1e0] sm:$0xff]
    %v2680 = vld [vmem:[#allocation10 + $0x1e8] sm:$0xf]
    %v2681 = vld [vmem:[#allocation10 + $0x1ec] sm:$0xff]
    %v2682 = vld [vmem:[#allocation10 + $0x1f4] sm:$0xf]
    %v2683 = vld [vmem:[#allocation10 + $0x1f8] sm:$0xff]
    %v2684 = vld [vmem:[#allocation10 + $0x200] sm:$0xf]
    %v2685 = vld [vmem:[#allocation10 + $0x204] sm:$0xff]
    %v2686 = vld [vmem:[#allocation10 + $0x20c] sm:$0xf]
    %v2687 = vld [vmem:[#allocation10 + $0x210] sm:$0xff]
    %v2688 = vld [vmem:[#allocation10 + $0x218] sm:$0xf]
    %v2689 = vld [vmem:[#allocation10 + $0x21c] sm:$0xff]
    %v2690 = vld [vmem:[#allocation10 + $0x224] sm:$0xf]
    %v2691 = vld [vmem:[#allocation10 + $0x228] sm:$0xff]
    %v2692 = vld [vmem:[#allocation10 + $0x230] sm:$0xf]
    %v2693 = vld [vmem:[#allocation10 + $0x234] sm:$0xff]
    %v2694 = vld [vmem:[#allocation10 + $0x23c] sm:$0xf]
    %v2695 = vpack.c.bf16 %v2662, %v2661
    %v2728 = vunpack.c.l.b16 %v2663
    %v2729 = vunpack.c.h.b16 %v2663
    %v2730 = vunpack.c.l.b16 %v2664
    %v2731 = vunpack.c.l.b16 %v2665
    %v2732 = vunpack.c.h.b16 %v2665
    %v2733 = vunpack.c.l.b16 %v2666
    %v2734 = vunpack.c.l.b16 %v2667
    %v2735 = vunpack.c.h.b16 %v2667
    %v2736 = vunpack.c.l.b16 %v2668
    %v2737 = vunpack.c.l.b16 %v2669
    %v2738 = vunpack.c.h.b16 %v2669
    %v2739 = vunpack.c.l.b16 %v2670
    %v2740 = vunpack.c.l.b16 %v2671
    %v2741 = vunpack.c.h.b16 %v2671
    %v2742 = vunpack.c.l.b16 %v2672
    %v2743 = vunpack.c.l.b16 %v2673
    %v2744 = vunpack.c.h.b16 %v2673
    %v2745 = vunpack.c.l.b16 %v2674
    %v2746 = vunpack.c.l.b16 %v2675
    %v2747 = vunpack.c.h.b16 %v2675
    %v2748 = vunpack.c.l.b16 %v2676
    %v2749 = vunpack.c.l.b16 %v2677
    %v2750 = vunpack.c.h.b16 %v2677
    %v2751 = vunpack.c.l.b16 %v2678
    %v2752 = vunpack.c.l.b16 %v2679
    %v2753 = vunpack.c.h.b16 %v2679
    %v2754 = vunpack.c.l.b16 %v2680
    %v2755 = vunpack.c.l.b16 %v2681
    %v2756 = vunpack.c.h.b16 %v2681
    %v2757 = vunpack.c.l.b16 %v2682
    %v2758 = vunpack.c.l.b16 %v2683
    %v2759 = vunpack.c.h.b16 %v2683
    %v2760 = vunpack.c.l.b16 %v2684
    %v2761 = vunpack.c.l.b16 %v2685
    %v2762 = vunpack.c.h.b16 %v2685
    %v2763 = vunpack.c.l.b16 %v2686
    %v2764 = vunpack.c.l.b16 %v2687
    %v2765 = vunpack.c.h.b16 %v2687
    %v2766 = vunpack.c.l.b16 %v2688
    %v2767 = vunpack.c.l.b16 %v2689
    %v2768 = vunpack.c.h.b16 %v2689
    %v2769 = vunpack.c.l.b16 %v2690
    %v2770 = vunpack.c.l.b16 %v2691
    %v2771 = vunpack.c.h.b16 %v2691
    %v2772 = vunpack.c.l.b16 %v2692
    %v2773 = vunpack.c.l.b16 %v2693
    %v2774 = vunpack.c.h.b16 %v2693
    %v2775 = vunpack.c.l.b16 %v2694
    %v2776 = vpack.c.b16 %v2731, %v2728
    %v2777 = vpack.c.b16 %v2732, %v2729
    %v2778 = vpack.c.b16 %v2733, %v2730
    %v2779 = vpack.c.b16 %v2737, %v2734
    %v2780 = vpack.c.b16 %v2738, %v2735
    %v2781 = vpack.c.b16 %v2739, %v2736
    %v2782 = vpack.c.b16 %v2743, %v2740
    %v2783 = vpack.c.b16 %v2744, %v2741
    %v2784 = vpack.c.b16 %v2745, %v2742
    %v2785 = vpack.c.b16 %v2749, %v2746
    %v2786 = vpack.c.b16 %v2750, %v2747
    %v2787 = vpack.c.b16 %v2751, %v2748
    %v2788 = vpack.c.b16 %v2755, %v2752
    %v2789 = vpack.c.b16 %v2756, %v2753
    %v2790 = vpack.c.b16 %v2757, %v2754
    %v2791 = vpack.c.b16 %v2761, %v2758
    %v2792 = vpack.c.b16 %v2762, %v2759
    %v2793 = vpack.c.b16 %v2763, %v2760
    %v2794 = vpack.c.b16 %v2767, %v2764
    %v2795 = vpack.c.b16 %v2768, %v2765
    %v2796 = vpack.c.b16 %v2769, %v2766
    %v2797 = vpack.c.b16 %v2773, %v2770
    %v2798 = vpack.c.b16 %v2774, %v2771
    %v2799 = vpack.c.b16 %v2775, %v2772
    %2824 = vmatprep.subr.bf16.mxu0 %v2777
    %2825 = vmatpush1.bf16.msra.mxu0 %v2776
    %2826 = vmatprep.subr.bf16.mxu0 %v2780
    %2827 = vmatpush1.bf16.msra.mxu0 %v2779
    %2828 = vmatprep.subr.bf16.mxu0 %v2783
    %2829 = vmatpush1.bf16.msra.mxu0 %v2782
    %2830 = vmatprep.subr.bf16.mxu0 %v2786
    %2831 = vmatpush1.bf16.msra.mxu0 %v2785
    %2832 = vmatprep.subr.bf16.mxu0 %v2789
    %2833 = vmatpush1.bf16.msra.mxu0 %v2788
    %2834 = vmatprep.subr.bf16.mxu0 %v2792
    %2835 = vmatpush1.bf16.msra.mxu0 %v2791
    %2836 = vmatprep.subr.bf16.mxu0 %v2795
    %2837 = vmatpush1.bf16.msra.mxu0 %v2794
    %2838 = vmatprep.subr.bf16.mxu0 %v2798
    %2839 = vmatpush1.bf16.msra.mxu0 %v2797
    %2840 = vmatprep.subr.bf16.mxu0 0
    %2841 = vmatpush1.bf16.msra.mxu0 0
    %2842 = vmatprep.subr.bf16.mxu0 0
    %2843 = vmatpush1.bf16.msra.mxu0 0
    %2844 = vmatprep.subr.bf16.mxu0 0
    %2845 = vmatpush1.bf16.msra.mxu0 0
    %2846 = vmatprep.subr.bf16.mxu0 0
    %2847 = vmatpush1.bf16.msra.mxu0 0
    %2848 = vmatprep.subr.bf16.mxu0 0
    %2849 = vmatpush1.bf16.msra.mxu0 0
    %2850 = vmatprep.subr.bf16.mxu0 0
    %2851 = vmatpush1.bf16.msra.mxu0 0
    %2852 = vmatprep.subr.bf16.mxu0 0
    %2853 = vmatpush1.bf16.msra.mxu0 0
    %2854 = vmatprep.subr.bf16.mxu0 0
    %2855 = vmatpush1.bf16.msra.mxu0 0
    %2856 = vmatprep.mubr.bf16.mxu0 0
    %2857 = vmatmul.mubr.bf16.gmra.mrb[0].mxu0 %v2695
    %v2858 = vpop.f32.mrb[0].mxu0
    %v2859 = vadd.f32 0.0, %v2858
    %v2860 = vpop.f32.mrb[0].mxu0
    %v2861 = vadd.f32 0.0, %v2860
    %v2862 = vpop.f32.mrb[0].mxu0
    %v2863 = vadd.f32 0.0, %v2862
    %v2864 = vpop.f32.mrb[0].mxu0
    %v2865 = vadd.f32 0.0, %v2864
    %2866 = vdwg.mxu0
    %2867 = vmatprep.subr.bf16.mxu0 0
    %2868 = vmatpush1.bf16.msra.mxu0 %v2778
    %2869 = vmatprep.subr.bf16.mxu0 0
    %2870 = vmatpush1.bf16.msra.mxu0 %v2781
    %2871 = vmatprep.subr.bf16.mxu0 0
    %2872 = vmatpush1.bf16.msra.mxu0 %v2784
    %2873 = vmatprep.subr.bf16.mxu0 0
    %2874 = vmatpush1.bf16.msra.mxu0 %v2787
    %2875 = vmatprep.subr.bf16.mxu0 0
    %2876 = vmatpush1.bf16.msra.mxu0 %v2790
    %2877 = vmatprep.subr.bf16.mxu0 0
    %2878 = vmatpush1.bf16.msra.mxu0 %v2793
    %2879 = vmatprep.subr.bf16.mxu0 0
    %2880 = vmatpush1.bf16.msra.mxu0 %v2796
    %2881 = vmatprep.subr.bf16.mxu0 0
    %2882 = vmatpush1.bf16.msra.mxu0 %v2799
    %2883 = vmatprep.subr.bf16.mxu0 0
    %2884 = vmatpush1.bf16.msra.mxu0 0
    %2885 = vmatprep.subr.bf16.mxu0 0
    %2886 = vmatpush1.bf16.msra.mxu0 0
    %2887 = vmatprep.subr.bf16.mxu0 0
    %2888 = vmatpush1.bf16.msra.mxu0 0
    %2889 = vmatprep.subr.bf16.mxu0 0
    %2890 = vmatpush1.bf16.msra.mxu0 0
    %2891 = vmatprep.subr.bf16.mxu0 0
    %2892 = vmatpush1.bf16.msra.mxu0 0
    %2893 = vmatprep.subr.bf16.mxu0 0
    %2894 = vmatpush1.bf16.msra.mxu0 0
    %2895 = vmatprep.subr.bf16.mxu0 0
    %2896 = vmatpush1.bf16.msra.mxu0 0
    %2897 = vmatprep.subr.bf16.mxu0 0
    %2898 = vmatpush1.bf16.msra.mxu0 0
    %2899 = vmatprep.mubr.bf16.mxu0 0
    %2900 = vmatmul.mubr.bf16.gmra.mrb[0].mxu0 %v2695
    %v2901 = vpop.f32.mrb[0].mxu0
    %v2902 = vadd.f32 0.0, %v2901
    %v2903 = vpop.f32.mrb[0].mxu0
    %v2904 = vpop.f32.mrb[0].mxu0
    %v2905 = vadd.f32 0.0, %v2904
    %v2906 = vpop.f32.mrb[0].mxu0
    %2907 = vdwg.mxu0
    %v2908 = vadd.f32 %v2240, %v2859
    %v2909 = vadd.f32 %v2242, %v2861
    %v2910 = vadd.f32 %v2283, %v2902
    %v2911 = vadd.f32 %v2244, %v2863
    %v2912 = vadd.f32 %v2246, %v2865
    %v2913 = vadd.f32 %v2286, %v2905
    %v2914 = vld [vmem:[%s5 + $0x8] sm:$0x7]
    %v2916 = vlaneseq
    %v2917 = vshrl.u32 %v2916, 7
    %v2918 = vsub.s32 0, %v2917
    %v2919 = vrot.slane %v2914, %v2918
    %v2920 = vlaneseq
    %v2921 = vshrl.u32 %v2920, 7
    %v2922 = vsub.s32 1, %v2921
    %v2923 = vrot.slane %v2914, %v2922
    %v2924 = vlaneseq
    %v2925 = vshrl.u32 %v2924, 7
    %v2926 = vsub.s32 2, %v2925
    %v2927 = vrot.slane %v2914, %v2926
    %v2931 = vadd.f32 %v2908, %v2919
    %v2932 = vadd.f32 %v2909, %v2923
    %v2933 = vadd.f32 %v2910, %v2927
    %v2934 = vadd.f32 %v2911, %v2919
    %v2935 = vadd.f32 %v2912, %v2923
    %v2936 = vadd.f32 %v2913, %v2927
    %v2937 = vmax.f32 %v2931, 0.0
    %v2938 = vmax.f32 %v2934, 0.0
    %v2939 = vmax.f32 %v2932, 0.0
    %v2940 = vmax.f32 %v2933, 0.0
    %v2941 = vmax.f32 %v2935, 0.0
    %v2942 = vmax.f32 %v2936, 0.0
    %v2943 = vld [vmem:[#allocation8 + $0x10] sm:$0xf]
    %v2944 = vld [vmem:[#allocation8 + $0x24] sm:$0xf]
    %v2945 = vld [vmem:[#allocation8 + $0x38] sm:$0xf]
    %v2946 = vld [vmem:[#allocation8 + $0x4c] sm:$0xf]
    %v2947 = vld [vmem:[#allocation8 + $0x60] sm:$0xf]
    %v2948 = vld [vmem:[#allocation8 + $0x74] sm:$0xf]
    %v2949 = vld [vmem:[#allocation8 + $0x88] sm:$0xf]
    %v2950 = vld [vmem:[#allocation8 + $0x9c] sm:$0xf]
    %v2951 = vld [vmem:[#allocation8 + $0xb0] sm:$0xf]
    %v2952 = vld [vmem:[#allocation8 + $0xc4] sm:$0xf]
    %v2953 = vld [vmem:[#allocation8 + $0xd8] sm:$0xf]
    %v2954 = vld [vmem:[#allocation8 + $0xec] sm:$0xf]
    %v2955 = vld [vmem:[#allocation8 + $0x100] sm:$0xf]
    %v2956 = vld [vmem:[#allocation8 + $0x114] sm:$0xf]
    %v2957 = vld [vmem:[#allocation8 + $0x128] sm:$0xf]
    %v2958 = vld [vmem:[#allocation8 + $0x13c] sm:$0xf]
    %v2959 = vld [vmem:[#allocation8 + $0x150] sm:$0xf]
    %v2960 = vld [vmem:[#allocation8 + $0x164] sm:$0xf]
    %v2961 = vld [vmem:[#allocation8 + $0x178] sm:$0xf]
    %v2962 = vld [vmem:[#allocation8 + $0x18c] sm:$0xf]
    %v2963 = vld [vmem:[#allocation8 + $0x1a0] sm:$0xf]
    %v2964 = vld [vmem:[#allocation8 + $0x1b4] sm:$0xf]
    %v2965 = vld [vmem:[#allocation8 + $0x1c8] sm:$0xf]
    %v2966 = vld [vmem:[#allocation8 + $0x1dc] sm:$0xf]
    %v2967 = vld [vmem:[#allocation8 + $0x1f0] sm:$0xf]
    %v2968 = vld [vmem:[#allocation8 + $0x204] sm:$0xf]
    %v2969 = vld [vmem:[#allocation8 + $0x218] sm:$0xf]
    %v2970 = vld [vmem:[#allocation8 + $0x22c] sm:$0xf]
    %v2971 = vld [vmem:[#allocation8 + $0x240] sm:$0xf]
    %v2972 = vld [vmem:[#allocation8 + $0x254] sm:$0xf]
    %v2973 = vld [vmem:[#allocation8 + $0x268] sm:$0xf]
    %v2974 = vld [vmem:[#allocation8 + $0x27c] sm:$0xf]
    %v2975 = vpack.c.bf16 %v2941, %v2939
    %v2976 = vpack.c.bf16 %v2942, %v2940
    %v2977 = vld [vmem:[%s5 + $0xb] sm:$0x1]
    %v2979 = vlaneseq
    %v2980 = vshrl.u32 %v2979, 7
    %v2981 = vsub.s32 0, %v2980
    %v2982 = vrot.slane %v2977, %v2981
    %v3016 = vunpack.c.l.b16 %v2943
    %v3017 = vunpack.c.l.b16 %v2944
    %v3018 = vunpack.c.l.b16 %v2945
    %v3019 = vunpack.c.l.b16 %v2946
    %v3020 = vunpack.c.l.b16 %v2947
    %v3021 = vunpack.c.l.b16 %v2948
    %v3022 = vunpack.c.l.b16 %v2949
    %v3023 = vunpack.c.l.b16 %v2950
    %v3024 = vunpack.c.l.b16 %v2951
    %v3025 = vunpack.c.l.b16 %v2952
    %v3026 = vunpack.c.l.b16 %v2953
    %v3027 = vunpack.c.l.b16 %v2954
    %v3028 = vunpack.c.l.b16 %v2955
    %v3029 = vunpack.c.l.b16 %v2956
    %v3030 = vunpack.c.l.b16 %v2957
    %v3031 = vunpack.c.l.b16 %v2958
    %v3032 = vunpack.c.l.b16 %v2959
    %v3033 = vunpack.c.l.b16 %v2960
    %v3034 = vunpack.c.l.b16 %v2961
    %v3035 = vunpack.c.l.b16 %v2962
    %v3036 = vunpack.c.l.b16 %v2963
    %v3037 = vunpack.c.l.b16 %v2964
    %v3038 = vunpack.c.l.b16 %v2965
    %v3039 = vunpack.c.l.b16 %v2966
    %v3040 = vunpack.c.l.b16 %v2967
    %v3041 = vunpack.c.l.b16 %v2968
    %v3042 = vunpack.c.l.b16 %v2969
    %v3043 = vunpack.c.l.b16 %v2970
    %v3044 = vunpack.c.l.b16 %v2971
    %v3045 = vunpack.c.l.b16 %v2972
    %v3046 = vunpack.c.l.b16 %v2973
    %v3047 = vunpack.c.l.b16 %v2974
    %v3048 = vpack.c.b16 %v3017, %v3016
    %v3049 = vpack.c.b16 %v3019, %v3018
    %v3050 = vpack.c.b16 %v3021, %v3020
    %v3051 = vpack.c.b16 %v3023, %v3022
    %v3052 = vpack.c.b16 %v3025, %v3024
    %v3053 = vpack.c.b16 %v3027, %v3026
    %v3054 = vpack.c.b16 %v3029, %v3028
    %v3055 = vpack.c.b16 %v3031, %v3030
    %v3056 = vpack.c.b16 %v3033, %v3032
    %v3057 = vpack.c.b16 %v3035, %v3034
    %v3058 = vpack.c.b16 %v3037, %v3036
    %v3059 = vpack.c.b16 %v3039, %v3038
    %v3060 = vpack.c.b16 %v3041, %v3040
    %v3061 = vpack.c.b16 %v3043, %v3042
    %v3062 = vpack.c.b16 %v3045, %v3044
    %v3063 = vpack.c.b16 %v3047, %v3046
    %3080 = vmatprep.subr.bf16.mxu0 0
    %3081 = vmatpush1.bf16.msra.mxu0 %v3048
    %3082 = vmatprep.subr.bf16.mxu0 0
    %3083 = vmatpush1.bf16.msra.mxu0 %v3049
    %3084 = vmatprep.subr.bf16.mxu0 0
    %3085 = vmatpush1.bf16.msra.mxu0 %v3050
    %3086 = vmatprep.subr.bf16.mxu0 0
    %3087 = vmatpush1.bf16.msra.mxu0 %v3051
    %3088 = vmatprep.subr.bf16.mxu0 0
    %3089 = vmatpush1.bf16.msra.mxu0 %v3052
    %3090 = vmatprep.subr.bf16.mxu0 0
    %3091 = vmatpush1.bf16.msra.mxu0 %v3053
    %3092 = vmatprep.subr.bf16.mxu0 0
    %3093 = vmatpush1.bf16.msra.mxu0 %v3054
    %3094 = vmatprep.subr.bf16.mxu0 0
    %3095 = vmatpush1.bf16.msra.mxu0 %v3055
    %3096 = vmatprep.subr.bf16.mxu0 0
    %3097 = vmatpush1.bf16.msra.mxu0 %v3056
    %3098 = vmatprep.subr.bf16.mxu0 0
    %3099 = vmatpush1.bf16.msra.mxu0 %v3057
    %3100 = vmatprep.subr.bf16.mxu0 0
    %3101 = vmatpush1.bf16.msra.mxu0 %v3058
    %3102 = vmatprep.subr.bf16.mxu0 0
    %3103 = vmatpush1.bf16.msra.mxu0 %v3059
    %3104 = vmatprep.subr.bf16.mxu0 0
    %3105 = vmatpush1.bf16.msra.mxu0 %v3060
    %3106 = vmatprep.subr.bf16.mxu0 0
    %3107 = vmatpush1.bf16.msra.mxu0 %v3061
    %3108 = vmatprep.subr.bf16.mxu0 0
    %3109 = vmatpush1.bf16.msra.mxu0 %v3062
    %3110 = vmatprep.subr.bf16.mxu0 0
    %3111 = vmatpush1.bf16.msra.mxu0 %v3063
    %3112 = vmatprep.mubr.bf16.mxu0 %v2976
    %3113 = vmatmul.mubr.bf16.gmra.mrb[0].mxu0 %v2975
    %v3114 = vpop.f32.mrb[0].mxu0
    %v3115 = vadd.f32 %v2982, %v3114
    %v3116 = vpop.f32.mrb[0].mxu0
    %v3117 = vpop.f32.mrb[0].mxu0
    %v3118 = vadd.f32 %v2982, %v3117
    %v3119 = vpop.f32.mrb[0].mxu0
    %3120 = vdwg.mxu0
    %v3121 = vmax.f32 %v3115, 0.0
    %v3122 = vmax.f32 %v3118, 0.0
    %v3123 = vld [vmem:[#allocation7 + $0x10] sm:$0xf]
    %v3124 = vld [vmem:[#allocation7 + $0x28] sm:$0xf]
    %v3125 = vld [vmem:[#allocation7 + $0x40] sm:$0xf]
    %v3126 = vld [vmem:[#allocation7 + $0x58] sm:$0xf]
    %v3127 = vld [vmem:[#allocation7 + $0x70] sm:$0xf]
    %v3128 = vld [vmem:[#allocation7 + $0x88] sm:$0xf]
    %v3129 = vld [vmem:[#allocation7 + $0xa0] sm:$0xf]
    %v3130 = vld [vmem:[#allocation7 + $0xb8] sm:$0xf]
    %v3131 = vld [vmem:[#allocation7 + $0xd0] sm:$0xf]
    %v3132 = vld [vmem:[#allocation7 + $0xe8] sm:$0xf]
    %v3133 = vld [vmem:[#allocation7 + $0x100] sm:$0xf]
    %v3134 = vld [vmem:[#allocation7 + $0x118] sm:$0xf]
    %v3135 = vld [vmem:[#allocation7 + $0x130] sm:$0xf]
    %v3136 = vld [vmem:[#allocation7 + $0x148] sm:$0xf]
    %v3137 = vld [vmem:[#allocation7 + $0x160] sm:$0xf]
    %v3138 = vld [vmem:[#allocation7 + $0x178] sm:$0xf]
    %v3139 = vpack.c.bf16 %v2938, %v2937
    %v3140 = vld [vmem:[#allocation7 + $0x14] sm:$0xf]
    %v3141 = vld [vmem:[#allocation7 + $0x2c] sm:$0xf]
    %v3142 = vld [vmem:[#allocation7 + $0x44] sm:$0xf]
    %v3143 = vld [vmem:[#allocation7 + $0x5c] sm:$0xf]
    %v3144 = vld [vmem:[#allocation7 + $0x74] sm:$0xf]
    %v3145 = vld [vmem:[#allocation7 + $0x8c] sm:$0xf]
    %v3146 = vld [vmem:[#allocation7 + $0xa4] sm:$0xf]
    %v3147 = vld [vmem:[#allocation7 + $0xbc] sm:$0xf]
    %v3148 = vld [vmem:[#allocation7 + $0xd4] sm:$0xf]
    %v3149 = vld [vmem:[#allocation7 + $0xec] sm:$0xf]
    %v3150 = vld [vmem:[#allocation7 + $0x104] sm:$0xf]
    %v3151 = vld [vmem:[#allocation7 + $0x11c] sm:$0xf]
    %v3152 = vld [vmem:[#allocation7 + $0x134] sm:$0xf]
    %v3153 = vld [vmem:[#allocation7 + $0x14c] sm:$0xf]
    %v3154 = vld [vmem:[#allocation7 + $0x164] sm:$0xf]
    %v3155 = vld [vmem:[#allocation7 + $0x17c] sm:$0xf]
    %v3156 = vpack.c.bf16 %v3122, %v3121
    %v3173 = vunpack.c.l.b16 %v3140
    %v3174 = vunpack.c.l.b16 %v3141
    %v3175 = vunpack.c.l.b16 %v3142
    %v3176 = vunpack.c.l.b16 %v3143
    %v3177 = vunpack.c.l.b16 %v3144
    %v3178 = vunpack.c.l.b16 %v3145
    %v3179 = vunpack.c.l.b16 %v3146
    %v3180 = vunpack.c.l.b16 %v3147
    %v3181 = vunpack.c.l.b16 %v3148
    %v3182 = vunpack.c.l.b16 %v3149
    %v3183 = vunpack.c.l.b16 %v3150
    %v3184 = vunpack.c.l.b16 %v3151
    %v3185 = vunpack.c.l.b16 %v3152
    %v3186 = vunpack.c.l.b16 %v3153
    %v3187 = vunpack.c.l.b16 %v3154
    %v3188 = vunpack.c.l.b16 %v3155
    %v3189 = vpack.c.b16 %v3174, %v3173
    %v3190 = vpack.c.b16 %v3176, %v3175
    %v3191 = vpack.c.b16 %v3178, %v3177
    %v3192 = vpack.c.b16 %v3180, %v3179
    %v3193 = vpack.c.b16 %v3182, %v3181
    %v3194 = vpack.c.b16 %v3184, %v3183
    %v3195 = vpack.c.b16 %v3186, %v3185
    %v3196 = vpack.c.b16 %v3188, %v3187
    %3205 = vmatprep.subr.bf16.mxu0 0
    %3206 = vmatpush1.bf16.msra.mxu0 %v3189
    %3207 = vmatprep.subr.bf16.mxu0 0
    %3208 = vmatpush1.bf16.msra.mxu0 %v3190
    %3209 = vmatprep.subr.bf16.mxu0 0
    %3210 = vmatpush1.bf16.msra.mxu0 %v3191
    %3211 = vmatprep.subr.bf16.mxu0 0
    %3212 = vmatpush1.bf16.msra.mxu0 %v3192
    %3213 = vmatprep.subr.bf16.mxu0 0
    %3214 = vmatpush1.bf16.msra.mxu0 %v3193
    %3215 = vmatprep.subr.bf16.mxu0 0
    %3216 = vmatpush1.bf16.msra.mxu0 %v3194
    %3217 = vmatprep.subr.bf16.mxu0 0
    %3218 = vmatpush1.bf16.msra.mxu0 %v3195
    %3219 = vmatprep.subr.bf16.mxu0 0
    %3220 = vmatpush1.bf16.msra.mxu0 %v3196
    %3221 = vmatprep.subr.bf16.mxu0 0
    %3222 = vmatpush1.bf16.msra.mxu0 0
    %3223 = vmatprep.subr.bf16.mxu0 0
    %3224 = vmatpush1.bf16.msra.mxu0 0
    %3225 = vmatprep.subr.bf16.mxu0 0
    %3226 = vmatpush1.bf16.msra.mxu0 0
    %3227 = vmatprep.subr.bf16.mxu0 0
    %3228 = vmatpush1.bf16.msra.mxu0 0
    %3229 = vmatprep.subr.bf16.mxu0 0
    %3230 = vmatpush1.bf16.msra.mxu0 0
    %3231 = vmatprep.subr.bf16.mxu0 0
    %3232 = vmatpush1.bf16.msra.mxu0 0
    %3233 = vmatprep.subr.bf16.mxu0 0
    %3234 = vmatpush1.bf16.msra.mxu0 0
    %3235 = vmatprep.subr.bf16.mxu0 0
    %3236 = vmatpush1.bf16.msra.mxu0 0
    %3237 = vmatprep.mubr.bf16.mxu0 0
    %3238 = vmatmul.mubr.bf16.gmra.mrb[0].mxu0 %v3156
    %v3239 = vpop.f32.mrb[0].mxu0
    %v3240 = vadd.f32 0.0, %v3239
    %v3241 = vpop.f32.mrb[0].mxu0
    %v3242 = vpop.f32.mrb[0].mxu0
    %v3243 = vadd.f32 0.0, %v3242
    %v3244 = vpop.f32.mrb[0].mxu0
    %3245 = vdwg.mxu0
    %v3262 = vunpack.c.l.b16 %v3123
    %v3263 = vunpack.c.l.b16 %v3124
    %v3264 = vunpack.c.l.b16 %v3125
    %v3265 = vunpack.c.l.b16 %v3126
    %v3266 = vunpack.c.l.b16 %v3127
    %v3267 = vunpack.c.l.b16 %v3128
    %v3268 = vunpack.c.l.b16 %v3129
    %v3269 = vunpack.c.l.b16 %v3130
    %v3270 = vunpack.c.l.b16 %v3131
    %v3271 = vunpack.c.l.b16 %v3132
    %v3272 = vunpack.c.l.b16 %v3133
    %v3273 = vunpack.c.l.b16 %v3134
    %v3274 = vunpack.c.l.b16 %v3135
    %v3275 = vunpack.c.l.b16 %v3136
    %v3276 = vunpack.c.l.b16 %v3137
    %v3277 = vunpack.c.l.b16 %v3138
    %v3278 = vpack.c.b16 %v3263, %v3262
    %v3279 = vpack.c.b16 %v3265, %v3264
    %v3280 = vpack.c.b16 %v3267, %v3266
    %v3281 = vpack.c.b16 %v3269, %v3268
    %v3282 = vpack.c.b16 %v3271, %v3270
    %v3283 = vpack.c.b16 %v3273, %v3272
    %v3284 = vpack.c.b16 %v3275, %v3274
    %v3285 = vpack.c.b16 %v3277, %v3276
    %3294 = vmatprep.subr.bf16.mxu0 0
    %3295 = vmatpush1.bf16.msra.mxu0 %v3278
    %3296 = vmatprep.subr.bf16.mxu0 0
    %3297 = vmatpush1.bf16.msra.mxu0 %v3279
    %3298 = vmatprep.subr.bf16.mxu0 0
    %3299 = vmatpush1.bf16.msra.mxu0 %v3280
    %3300 = vmatprep.subr.bf16.mxu0 0
    %3301 = vmatpush1.bf16.msra.mxu0 %v3281
    %3302 = vmatprep.subr.bf16.mxu0 0
    %3303 = vmatpush1.bf16.msra.mxu0 %v3282
    %3304 = vmatprep.subr.bf16.mxu0 0
    %3305 = vmatpush1.bf16.msra.mxu0 %v3283
    %3306 = vmatprep.subr.bf16.mxu0 0
    %3307 = vmatpush1.bf16.msra.mxu0 %v3284
    %3308 = vmatprep.subr.bf16.mxu0 0
    %3309 = vmatpush1.bf16.msra.mxu0 %v3285
    %3310 = vmatprep.subr.bf16.mxu0 0
    %3311 = vmatpush1.bf16.msra.mxu0 0
    %3312 = vmatprep.subr.bf16.mxu0 0
    %3313 = vmatpush1.bf16.msra.mxu0 0
    %3314 = vmatprep.subr.bf16.mxu0 0
    %3315 = vmatpush1.bf16.msra.mxu0 0
    %3316 = vmatprep.subr.bf16.mxu0 0
    %3317 = vmatpush1.bf16.msra.mxu0 0
    %3318 = vmatprep.subr.bf16.mxu0 0
    %3319 = vmatpush1.bf16.msra.mxu0 0
    %3320 = vmatprep.subr.bf16.mxu0 0
    %3321 = vmatpush1.bf16.msra.mxu0 0
    %3322 = vmatprep.subr.bf16.mxu0 0
    %3323 = vmatpush1.bf16.msra.mxu0 0
    %3324 = vmatprep.subr.bf16.mxu0 0
    %3325 = vmatpush1.bf16.msra.mxu0 0
    %3326 = vmatprep.mubr.bf16.mxu0 0
    %3327 = vmatmul.mubr.bf16.gmra.mrb[0].mxu0 %v3139
    %v3328 = vpop.f32.mrb[0].mxu0
    %v3329 = vadd.f32 %v3240, %v3328
    %v3330 = vpop.f32.mrb[0].mxu0
    %v3331 = vpop.f32.mrb[0].mxu0
    %v3332 = vadd.f32 %v3243, %v3331
    %v3333 = vpop.f32.mrb[0].mxu0
    %3334 = vdwg.mxu0
    %v3335 = vld [vmem:[%s5 + $0xc] sm:$0x1]
    %v3337 = vlaneseq
    %v3338 = vshrl.u32 %v3337, 7
    %v3339 = vsub.s32 0, %v3338
    %v3340 = vrot.slane %v3335, %v3339
    %v3342 = vadd.f32 %v3329, %v3340
    %v3343 = vadd.f32 %v3332, %v3340
    %v3344 = vlaneseq
    %v3345 = vand.u32 %v3344, 127
    %vm3346 = vcmp.lt.s32.totalorder %v3345, 3
    %v3347 = vsel %vm3346, %v3342, -1e+30
    %v3348 = vsel %vm3346, %v3343, -1e+30
    %3349 = vmax.xlane.f32.xlu0 %v3347
    %v3350 = vpop.xlane.xlu0 %3349
    %3351 = vmax.xlane.f32.xlu0 %v3348
    %v3352 = vpop.xlane.xlu0 %3351
    %v3353 = vsub.f32 %v3347, %v3350
    %v3354 = vsub.f32 %v3348, %v3352
    %v3355 = vmul.f32 %v3353, 1.442695
    %v3356 = vpow.pop %v3355
    %v3357 = vmul.f32 %v3354, 1.442695
    %v3358 = vpow.pop %v3357
    %3359 = vadd.xlane.f32.xlu0 %v3356
    %v3360 = vpop.xlane.xlu0 %3359
    %3361 = vadd.xlane.f32.xlu0 %v3358
    %v3362 = vpop.xlane.xlu0 %3361
    %v3363 = vrcp.pop %v3360
    %v3364 = vmul.f32 %v3356, %v3363
    %v3365 = vrcp.pop %v3362
    %v3366 = vmul.f32 %v3358, %v3365
    %v3367 = vxor.u32 %v3342, 2147483648
    %v3368 = vxor.u32 %v3343, 2147483648
    %v3369 = vmul.f32 %v3367, 1.442695
    %v3370 = vpow.pop %v3369
    %v3371 = vmul.f32 %v3368, 1.442695
    %v3372 = vpow.pop %v3371
    %v3373 = vadd.f32 %v3370, 1.0
    %v3374 = vadd.f32 %v3372, 1.0
    %v3375 = vrcp.pop %v3373
    %v3376 = vmul.f32 1.0, %v3375
    %v3377 = vrcp.pop %v3374
    %v3378 = vmul.f32 1.0, %v3377
    %vm3379 = vcmp.eq.s32.totalorder %v3345, 3
    %v3380 = vsel %vm3379, %v3376, 0.0
    %v3381 = vsel %vm3379, %v3378, 0.0
    %v3382 = vsel %vm3346, %v3364, %v3380
    %v3383 = vsel %vm3346, %v3366, %v3381
    %3384 = vst [vmem:[#allocation11] sm:$0xff] %v3382
    %3385 = vst [vmem:[#allocation11 + $0x8] sm:$0xff] %v3383
    %v3387 = vunpack.c.l.b16 %v2431
    %v3388 = vunpack.c.h.b16 %v2431
    %v3389 = vpack.c.b16 %v3387, %v3387
    %v3390 = vpack.c.b16 %v3388, %v3388
    %3393 = vst [vmem:[#allocation12] sm:$0xf] %v3389
    %3394 = vst [vmem:[#allocation12 + $0x4] sm:$0xf] %v3390
    %v3395 = vpack.c.bf16 %v2660, %v2659
    %v3397 = vunpack.c.l.b16 %v3395
    %v3398 = vunpack.c.h.b16 %v3395
    %v3399 = vpack.c.b16 %v3397, %v3397
    %v3400 = vpack.c.b16 %v3398, %v3398
    %s3403 = scalar_lea.vmem [#allocation12], 8
    %3404 = vst [vmem:[%s3403] sm:$0xf] %v3399
    %3405 = vst [vmem:[%s3403 + $0x4] sm:$0xf] %v3400
    %v3406 = vpack.c.bf16 %v2426, %v2425
    %v3408 = vunpack.c.l.b16 %v3406
    %v3409 = vunpack.c.h.b16 %v3406
    %v3410 = vpack.c.b16 %v3408, %v3408
    %v3411 = vpack.c.b16 %v3409, %v3409
    %3414 = vst [vmem:[#allocation14] sm:$0xf] %v3410
    %3415 = vst [vmem:[#allocation14 + $0x4] sm:$0xf] %v3411
    %v3416 = vpack.c.bf16 %v2656, %v2655
    %v3418 = vunpack.c.l.b16 %v3416
    %v3419 = vunpack.c.h.b16 %v3416
    %v3420 = vpack.c.b16 %v3418, %v3418
    %v3421 = vpack.c.b16 %v3419, %v3419
    %s3424 = scalar_lea.vmem [#allocation14], 8
    %3425 = vst [vmem:[%s3424] sm:$0xf] %v3420
    %3426 = vst [vmem:[%s3424 + $0x4] sm:$0xf] %v3421
    // Predicated region
    $region46: #{tpu_custom_call.1} parent=1 // pred_check
      _
    $region47: #{tpu_custom_call.1} parent=1 // pred_check_branch
      %3428 = sbr.rel (0) target = $region49
    $region48: #{tpu_custom_call.1} parent=1 // pred_region
      %s3430 = ssub.s32 256, 256
      %3431 = vsyncadd [#allocation4], %s3430
      %s3432 = sshll.u32 [#allocation11], 4
      %s3433 = int_to_ptr.vmem [resolvable:$true] %s3432
      %3438 = dma.vmem_to_hbm [thread:$0]  %s3433, 256, %s6, [#allocation4], 128, 128, 8
    $region49: #{tpu_custom_call.1} parent=1 // pred_fallthru
      _
    // Predicated region
    $region50: #{tpu_custom_call.1} parent=1 // pred_check
      _
    $region51: #{tpu_custom_call.1} parent=1 // pred_check_branch
      %3440 = sbr.rel (0) target = $region53
    $region52: #{tpu_custom_call.1} parent=1 // pred_region
      %s3442 = ssub.s32 256, 256
      %3443 = vsyncadd [#allocation13], %s3442
      %s3444 = sshll.u32 [#allocation12], 4
      %s3445 = int_to_ptr.vmem [resolvable:$true] %s3444
      %3450 = dma.vmem_to_hbm [thread:$0]  %s3445, 256, %s7, [#allocation13], 64, 64, 4
    $region53: #{tpu_custom_call.1} parent=1 // pred_fallthru
      _
    // Predicated region
    $region54: #{tpu_custom_call.1} parent=1 // pred_check
      _
    $region55: #{tpu_custom_call.1} parent=1 // pred_check_branch
      %3452 = sbr.rel (0) target = $region57
    $region56: #{tpu_custom_call.1} parent=1 // pred_region
      %s3454 = ssub.s32 256, 256
      %3455 = vsyncadd [#allocation13], %s3454
      %s3456 = sshll.u32 [#allocation14], 4
      %s3457 = int_to_ptr.vmem [resolvable:$true] %s3456
      %3462 = dma.vmem_to_hbm [thread:$0]  %s3457, 256, %s8, [#allocation13], 64, 64, 4
    $region57: #{tpu_custom_call.1} parent=1 // pred_fallthru
      _
    // Predicated region
    $region58: #{tpu_custom_call.1} parent=1 // pred_check
      _
    $region59: #{tpu_custom_call.1} parent=1 // pred_check_branch
      %3464 = sbr.rel (0) target = $region61
    $region60: #{tpu_custom_call.1} parent=1 // pred_region
      %3465 = dma.done [#allocation4], 256
    $region61: #{tpu_custom_call.1} parent=1 // pred_fallthru
      _
    // Predicated region
    $region62: #{tpu_custom_call.1} parent=1 // pred_check
      _
    $region63: #{tpu_custom_call.1} parent=1 // pred_check_branch
      %3467 = sbr.rel (0) target = $region65
    $region64: #{tpu_custom_call.1} parent=1 // pred_region
      %3468 = dma.done [#allocation13], 256
    $region65: #{tpu_custom_call.1} parent=1 // pred_fallthru
      _
    // Predicated region
    $region66: #{tpu_custom_call.1} parent=1 // pred_check
      _
    $region67: #{tpu_custom_call.1} parent=1 // pred_check_branch
      %3470 = sbr.rel (0) target = $region69
    $region68: #{tpu_custom_call.1} parent=1 // pred_region
      %3471 = dma.done [#allocation13], 256
    $region69: #{tpu_custom_call.1} parent=1 // pred_fallthru
      _
    %3472 = vsyncpa [#allocation3], 1
    %3473 = vsyncpa [#allocation6], 1
    %3474 = vsyncpa [#allocation9], 1
    %3475 = vsyncpa [#allocation4], 1
    %3476 = vsyncpa [#allocation13], 1

</llo_original>
